<compile_context>
chip_gen: v6e
topology: v6e:2x2x1
jax: 0.10.0
libtpu: 0.0.40
codegen_flags: <defaults>
</compile_context>

<pallas_src>
import math

import jax
import jax.numpy as jnp
import numpy as np
from jax.experimental import pallas as pl
from jax.experimental.pallas import tpu as pltpu

LANE = 128
F_REAL = 96                    # in_features (hard-coded to 96 by the module)
FP = LANE                      # 96 zero-padded to one full 128-lane vreg
EPS_AGG = 1e-6                 # reduce_func epsilon
EPS_BN = 1e-5                  # BatchNorm1d eps (PyTorch default)
MAX_ROW_TILE = 128             # row tile target; raise for large graphs
VMEM_LIMIT = 32 * 1024 * 1024  # explicit scoped-VMEM limit (fits all gens)


# ---------------------------------------------------------------------------
# Kernels
# ---------------------------------------------------------------------------
def node_ab_kernel(h_ref, w_ref, b_ref, o_ref):
    """[Ah | Bh] = h0 @ [A.T | B.T] + [A_b | B_b] -> lane-dense (T, 256)."""
    o_ref[...] = (
        jnp.dot(h_ref[...], w_ref[...], preferred_element_type=jnp.float32)
        + b_ref[...])


def edge_msg_kernel(e_ref, bhsrc_ref, w_ref, b_ref, ce_ref, msgsig_ref):
    """Ce = e0 @ C.T + C_b ; sigma = sigmoid(Ce) ; msg = sigma * Bh[src].

    msg and sigma are packed side by side into one (T, 256) slab so the
    destination scatter-add downstream touches a single lane-dense array.
    """
    ce = (jnp.dot(e_ref[...], w_ref[...], preferred_element_type=jnp.float32)
          + b_ref[...])
    sig = jax.nn.sigmoid(ce)
    ce_ref[...] = ce
    msgsig_ref[:, :FP] = sig * bhsrc_ref[...]
    msgsig_ref[:, FP:] = sig


def node_combine_kernel(ab_ref, agg_ref, h_ref, sum_ref, sumsq_ref):
    """h = Ah + num / (den + eps); accumulate BN-h sum / sumsq (BN pass 1)."""
    ah = ab_ref[:, :FP]
    num = agg_ref[:, :FP]
    den = agg_ref[:, FP:]
    h = ah + num / (den + EPS_AGG)
    h_ref[...] = h

    @pl.when(pl.program_id(0) == 0)
    def _():
        sum_ref[...] = jnp.zeros_like(sum_ref)
        sumsq_ref[...] = jnp.zeros_like(sumsq_ref)

    sum_ref[...] += jnp.sum(h, axis=0, keepdims=True)
    sumsq_ref[...] += jnp.sum(h * h, axis=0, keepdims=True)


def edge_gru_kernel(ce_ref, hsrc_ref, hdst_ref, ws_ref, wi_ref, b_ref,
                    e1_ref, sum_ref, sumsq_ref):
    """GRU_minimal on edges + BN-e statistics (BN pass 1).

    X = [state=Ce, input=|h_src - h_dst|]; gates = X @ W.T + b.  W.T is split
    into a state half and an input half (two 128-contraction matmuls) to avoid
    an in-kernel concatenation.
    """
    ce = ce_ref[...]
    gin = jnp.abs(hsrc_ref[...] - hdst_ref[...])
    gates = (jnp.dot(ce, ws_ref[...], preferred_element_type=jnp.float32)
             + jnp.dot(gin, wi_ref[...], preferred_element_type=jnp.float32)
             + b_ref[...])
    z = jax.nn.sigmoid(gates[:, :FP])
    cand = jnp.tanh(gates[:, FP:])
    e1 = ce * z + cand * (1.0 - z)
    e1_ref[...] = e1

    @pl.when(pl.program_id(0) == 0)
    def _():
        sum_ref[...] = jnp.zeros_like(sum_ref)
        sumsq_ref[...] = jnp.zeros_like(sumsq_ref)

    sum_ref[...] += jnp.sum(e1, axis=0, keepdims=True)
    sumsq_ref[...] += jnp.sum(e1 * e1, axis=0, keepdims=True)


def bn_relu_residual_kernel(x_ref, xin_ref, scale_ref, shift_ref, o_ref):
    """BN pass 2: x_in + relu(x * scale + shift) with pre-folded scale/shift."""
    o_ref[...] = xin_ref[...] + jnp.maximum(
        x_ref[...] * scale_ref[...] + shift_ref[...], 0.0)


# ---------------------------------------------------------------------------
# Spec / packing helpers (wrapper glue)
# ---------------------------------------------------------------------------
def _pick_tile(rows, target):
    """Largest row tile <= target that divides rows and is sublane-aligned."""
    if rows <= target:
        return rows
    for t in range(min(target, rows), 7, -1):
        if rows % t == 0 and t % 8 == 0:
            return t
    return rows


def _row_spec(tile, width):
    return pl.BlockSpec((tile, width), lambda i: (i, 0))


def _const_spec(shape):
    return pl.BlockSpec(shape, lambda i: (0, 0))


def _cparams(semantics):
    return pltpu.CompilerParams(dimension_semantics=(semantics,),
                                vmem_limit_bytes=VMEM_LIMIT)


def _pad_cols(x, width):
    return jnp.pad(x.astype(jnp.float32), ((0, 0), (0, width - x.shape[1])))


def _pack_two(w_left, w_right, width):
    """Place two (f, f) matrices side by side in a zero-padded (width, 2*width)."""
    out = jnp.zeros((width, 2 * width), jnp.float32)
    out = out.at[:w_left.shape[0], :w_left.shape[1]].set(w_left)
    out = out.at[:w_right.shape[0], width:width + w_right.shape[1]].set(w_right)
    return out


def _pack_bias_two(b_left, b_right, width):
    out = jnp.zeros((1, 2 * width), jnp.float32)
    out = out.at[0, :b_left.shape[0]].set(b_left)
    out = out.at[0, width:width + b_right.shape[0]].set(b_right)
    return out


# ---------------------------------------------------------------------------
# Forward pass
# ---------------------------------------------------------------------------
def node_update_forward(node_feat, edge_feat, src, dst, params):
    n, f = node_feat.shape
    e_cnt, f_e = edge_feat.shape
    assert f == F_REAL and f_e == F_REAL, "module hard-codes in_features = 96"

    tile_n = _pick_tile(n, MAX_ROW_TILE)
    tile_e = _pick_tile(e_cnt, MAX_ROW_TILE)

    h0 = _pad_cols(node_feat, FP)                                   # (N, 128)
    e0 = _pad_cols(edge_feat, FP)                                   # (E, 128)

    # ---- fold + zero-pad parameters once (glue) ----
    ab_w = _pack_two(params['A_w'].T, params['B_w'].T, FP)          # (128, 256)
    ab_b = _pack_bias_two(params['A_b'], params['B_b'], FP)         # (1, 256)
    c_w = jnp.zeros((FP, FP), jnp.float32).at[:f, :f].set(params['C_w'].T)
    c_b = jnp.zeros((1, FP), jnp.float32).at[0, :f].set(params['C_b'])
    wt = params['gru_w'].T                                          # (192, 192)
    gru_ws = _pack_two(wt[:f, :f], wt[:f, f:], FP)                  # state half
    gru_wi = _pack_two(wt[f:, :f], wt[f:, f:], FP)                  # input half
    gru_b = _pack_bias_two(params['gru_b'][:f], params['gru_b'][f:], FP)

    # ---- K1: fused node linears [Ah | Bh] ----
    ab = pl.pallas_call(
        node_ab_kernel,
        out_shape=jax.ShapeDtypeStruct((n, 2 * FP), jnp.float32),
        grid=(n // tile_n,),
        in_specs=[_row_spec(tile_n, FP),
                  _const_spec((FP, 2 * FP)),
                  _const_spec((1, 2 * FP))],
        out_specs=_row_spec(tile_n, 2 * FP),
        compiler_params=_cparams("parallel"),
    )(h0, ab_w, ab_b)

    # glue: per-edge gather of Bh[src] (data-dependent -> XLA gather)
    bh_src = jnp.take(ab[:, FP:], src, axis=0)                      # (E, 128)

    # ---- K2: edge linear + sigmoid gate + message ----
    ce, msgsig = pl.pallas_call(
        edge_msg_kernel,
        out_shape=(jax.ShapeDtypeStruct((e_cnt, FP), jnp.float32),
                   jax.ShapeDtypeStruct((e_cnt, 2 * FP), jnp.float32)),
        grid=(e_cnt // tile_e,),
        in_specs=[_row_spec(tile_e, FP), _row_spec(tile_e, FP),
                  _const_spec((FP, FP)), _const_spec((1, FP))],
        out_specs=(_row_spec(tile_e, FP), _row_spec(tile_e, 2 * FP)),
        compiler_params=_cparams("parallel"),
    )(e0, bh_src, c_w, c_b)

    # glue: scatter-add over destination nodes (num | den packed together)
    agg = jax.ops.segment_sum(msgsig, dst, num_segments=n)          # (N, 256)

    # ---- K3: node combine + BN-h statistics (pass 1, arbitrary axis) ----
    h_pre, h_sum, h_sumsq = pl.pallas_call(
        node_combine_kernel,
        out_shape=(jax.ShapeDtypeStruct((n, FP), jnp.float32),
                   jax.ShapeDtypeStruct((1, FP), jnp.float32),
                   jax.ShapeDtypeStruct((1, FP), jnp.float32)),
        grid=(n // tile_n,),
        in_specs=[_row_spec(tile_n, 2 * FP), _row_spec(tile_n, 2 * FP)],
        out_specs=(_row_spec(tile_n, FP),
                   _const_spec((1, FP)), _const_spec((1, FP))),
        compiler_params=_cparams("arbitrary"),
    )(ab, agg)

    # glue: per-edge gathers of the updated h (apply_edges)
    h_src = jnp.take(h_pre, src, axis=0)
    h_dst = jnp.take(h_pre, dst, axis=0)

    # ---- K4: edge GRU + BN-e statistics (pass 1, arbitrary axis) ----
    e1, e_sum, e_sumsq = pl.pallas_call(
        edge_gru_kernel,
        out_shape=(jax.ShapeDtypeStruct((e_cnt, FP), jnp.float32),
                   jax.ShapeDtypeStruct((1, FP), jnp.float32),
                   jax.ShapeDtypeStruct((1, FP), jnp.float32)),
        grid=(e_cnt // tile_e,),
        in_specs=[_row_spec(tile_e, FP), _row_spec(tile_e, FP),
                  _row_spec(tile_e, FP), _const_spec((FP, 2 * FP)),
                  _const_spec((FP, 2 * FP)), _const_spec((1, 2 * FP))],
        out_specs=(_row_spec(tile_e, FP),
                   _const_spec((1, FP)), _const_spec((1, FP))),
        compiler_params=_cparams("arbitrary"),
    )(ce, h_src, h_dst, gru_ws, gru_wi, gru_b)

    # glue: fold batch stats + affine into per-channel scale/shift (tiny)
    def fold_bn(s, ss, rows, gamma, beta):
        gamma_p = jnp.zeros((1, FP), jnp.float32).at[0, :f].set(gamma)
        beta_p = jnp.zeros((1, FP), jnp.float32).at[0, :f].set(beta)
        mean = s / rows
        var = jnp.maximum(ss / rows - mean * mean, 0.0)    # biased variance
        scale = gamma_p * jax.lax.rsqrt(var + EPS_BN)
        shift = beta_p - mean * scale
        return scale, shift

    h_scale, h_shift = fold_bn(h_sum, h_sumsq, float(n),
                               params['bn_h_gamma'], params['bn_h_beta'])
    e_scale, e_shift = fold_bn(e_sum, e_sumsq, float(e_cnt),
                               params['bn_e_gamma'], params['bn_e_beta'])

    # ---- K5: BN apply + ReLU + residual (pass 2, parallel axis) ----
    def bn_pass(x, x_in, scale, shift, tile):
        rows = x.shape[0]
        return pl.pallas_call(
            bn_relu_residual_kernel,
            out_shape=jax.ShapeDtypeStruct((rows, FP), jnp.float32),
            grid=(rows // tile,),
            in_specs=[_row_spec(tile, FP), _row_spec(tile, FP),
                      _const_spec((1, FP)), _const_spec((1, FP))],
            out_specs=_row_spec(tile, FP),
            compiler_params=_cparams("parallel"),
        )(x, x_in, scale, shift)

    h_out = bn_pass(h_pre, h0, h_scale, h_shift, tile_n)
    e_out = bn_pass(e1, e0, e_scale, e_shift, tile_e)

    return h_out[:, :f], e_out[:, :f]


# ---------------------------------------------------------------------------
# Pure-JAX reference (mirrors the PyTorch module, L == 1 branch)
# ---------------------------------------------------------------------------
def node_update_reference(node_feat, edge_feat, src, dst, p):
    f = node_feat.shape[1]
    ah = node_feat @ p['A_w'].T + p['A_b']
    bh = node_feat @ p['B_w'].T + p['B_b']
    ce = edge_feat @ p['C_w'].T + p['C_b']
    sig = jax.nn.sigmoid(ce)
    msg = sig * bh[src]
    num = jax.ops.segment_sum(msg, dst, num_segments=node_feat.shape[0])
    den = jax.ops.segment_sum(sig, dst, num_segments=node_feat.shape[0])
    h = ah + num / (den + EPS_AGG)
    gin = jnp.abs(h[src] - h[dst])
    x = jnp.concatenate([ce, gin], axis=1)
    gates = x @ p['gru_w'].T + p['gru_b']
    z = jax.nn.sigmoid(gates[:, :f])
    cand = jnp.tanh(gates[:, f:])
    e1 = ce * z + cand * (1.0 - z)

    def bn(v, gamma, beta):
        mean = v.mean(axis=0)
        var = ((v - mean) ** 2).mean(axis=0)
        return (v - mean) * jax.lax.rsqrt(var + EPS_BN) * gamma + beta

    h_out = node_feat + jnp.maximum(bn(h, p['bn_h_gamma'], p['bn_h_beta']), 0.0)
    e_out = edge_feat + jnp.maximum(bn(e1, p['bn_e_gamma'], p['bn_e_beta']), 0.0)
    return h_out, e_out


# ---------------------------------------------------------------------------
if __name__ == "__main__":
    n_nodes, n_edges, feat = 256, 512, F_REAL

    key = jax.random.PRNGKey(0)
    ks = jax.random.split(key, 16)

    def linear_init(kw, kb, out_f, in_f):
        bound = 1.0 / math.sqrt(in_f)
        w = jax.random.uniform(kw, (out_f, in_f), jnp.float32, -bound, bound)
        b = jax.random.uniform(kb, (out_f,), jnp.float32, -bound, bound)
        return w, b

    a_w, a_b = linear_init(ks[0], ks[1], feat, feat)
    b_w, b_b = linear_init(ks[2], ks[3], feat, feat)
    c_w, c_b = linear_init(ks[4], ks[5], feat, feat)
    stdv = 1.0 / math.sqrt(feat)
    gru_w = jax.random.uniform(ks[6], (2 * feat, 2 * feat), jnp.float32, -stdv, stdv)
    gru_b = jax.random.uniform(ks[7], (2 * feat,), jnp.float32, -stdv, stdv)

    params = dict(
        A_w=a_w, A_b=a_b, B_w=b_w, B_b=b_b, C_w=c_w, C_b=c_b,
        gru_w=gru_w, gru_b=gru_b,
        bn_h_gamma=1.0 + 0.1 * jax.random.normal(ks[8], (feat,), jnp.float32),
        bn_h_beta=0.1 * jax.random.normal(ks[9], (feat,), jnp.float32),
        bn_e_gamma=1.0 + 0.1 * jax.random.normal(ks[10], (feat,), jnp.float32),
        bn_e_beta=0.1 * jax.random.normal(ks[11], (feat,), jnp.float32),
    )

    node_feat = jax.random.normal(ks[12], (n_nodes, feat), jnp.float32)
    edge_feat = jax.random.normal(ks[13], (n_edges, feat), jnp.float32)

    # Ring (every node gets in-degree >= 1, matching DGL's reduce semantics
    # on this graph) plus random extra edges.
    ring_src = (jnp.arange(n_nodes, dtype=jnp.int32) + 1) % n_nodes
    ring_dst = jnp.arange(n_nodes, dtype=jnp.int32)
    extra = n_edges - n_nodes
    rand_src = jax.random.randint(ks[14], (extra,), 0, n_nodes, jnp.int32)
    rand_dst = jax.random.randint(ks[15], (extra,), 0, n_nodes, jnp.int32)
    src = jnp.concatenate([ring_src, rand_src])
    dst = jnp.concatenate([ring_dst, rand_dst])

    fwd = jax.jit(node_update_forward)
    h_out, e_out = jax.block_until_ready(
        fwd(node_feat, edge_feat, src, dst, params))

    h_ref, e_ref = jax.block_until_ready(
        node_update_reference(node_feat, edge_feat, src, dst, params))

    assert h_out.shape == (n_nodes, feat), h_out.shape
    assert e_out.shape == (n_edges, feat), e_out.shape
    np.testing.assert_allclose(np.asarray(h_out), np.asarray(h_ref),
                               rtol=1e-3, atol=1e-3)
    np.testing.assert_allclose(np.asarray(e_out), np.asarray(e_ref),
                               rtol=1e-3, atol=1e-3)
    print("KERNEL_OK")
</pallas_src>

<mosaic_0001>
module attributes {stable_mosaic.version = 11 : i64} {
  func.func @node_ab_kernel(%arg0: i32, %arg1: memref<128x128xf32, #tpu.memory_space<vmem>>, %arg2: memref<128x256xf32, #tpu.memory_space<vmem>>, %arg3: memref<1x256xf32, #tpu.memory_space<vmem>>, %arg4: memref<128x256xf32, #tpu.memory_space<vmem>>) attributes {dimension_semantics = [#tpu.dimension_semantics<parallel>], iteration_bounds = array<i64: 2>, scalar_prefetch = 0 : i64, scratch_operands = 0 : i64, tpu.core_type = #tpu.core_type<tc>, window_params = [{transform_indices = @transform_0, window_bounds = array<i64: 128, 128>}, {pipeline_mode = #tpu.pipeline_mode<synchronous>, transform_indices = @transform_1, window_bounds = array<i64: 128, 256>}, {pipeline_mode = #tpu.pipeline_mode<synchronous>, transform_indices = @transform_2, window_bounds = array<i64: 1, 256>}, {transform_indices = @transform_3, window_bounds = array<i64: 128, 256>}]} {
    %c0 = arith.constant 0 : index
    %c0_0 = arith.constant 0 : index
    %0 = vector.load %arg1[%c0, %c0_0] : memref<128x128xf32, #tpu.memory_space<vmem>>, vector<128x128xf32>
    %c0_1 = arith.constant 0 : index
    %c0_2 = arith.constant 0 : index
    %1 = vector.load %arg2[%c0_1, %c0_2] : memref<128x256xf32, #tpu.memory_space<vmem>>, vector<128x256xf32>
    %cst = arith.constant dense<0.000000e+00> : vector<128x256xf32>
    %2 = tpu.matmul %0, %1, %cst {dimension_numbers = #tpu.dot_dimension_numbers<[1], [0], [0], [1], [0, 0, 1, 1], [], []>} : vector<128x128xf32>, vector<128x256xf32>, vector<128x256xf32> -> vector<128x256xf32>
    %c0_3 = arith.constant 0 : index
    %c0_4 = arith.constant 0 : index
    %3 = vector.load %arg3[%c0_3, %c0_4] : memref<1x256xf32, #tpu.memory_space<vmem>>, vector<1x256xf32>
    %4 = vector.broadcast %3 : vector<1x256xf32> to vector<128x256xf32>
    %5 = arith.addf %2, %4 : vector<128x256xf32>
    %c0_5 = arith.constant 0 : index
    %c0_6 = arith.constant 0 : index
    %6 = vector.load %arg4[%c0_5, %c0_6] : memref<128x256xf32, #tpu.memory_space<vmem>>, vector<128x256xf32>
    tpu.vector_store %arg4[%c0_5, %c0_6], %5 {strides = array<i32>} : memref<128x256xf32, #tpu.memory_space<vmem>>, vector<128x256xf32>,
    return
  }
  func.func @transform_0(%arg0: i32) -> (i32, i32) {
    %c0_i32 = arith.constant 0 : i32
    %c0_i32_0 = arith.constant 0 : i32
    return %arg0, %c0_i32 : i32, i32
  }
  func.func @transform_1(%arg0: i32) -> (i32, i32) {
    %c0_i32 = arith.constant 0 : i32
    %c0_i32_0 = arith.constant 0 : i32
    %c0_i32_1 = arith.constant 0 : i32
    return %c0_i32, %c0_i32_0 : i32, i32
  }
  func.func @transform_2(%arg0: i32) -> (i32, i32) {
    %c0_i32 = arith.constant 0 : i32
    %c0_i32_0 = arith.constant 0 : i32
    %c0_i32_1 = arith.constant 0 : i32
    return %c0_i32, %c0_i32_0 : i32, i32
  }
  func.func @transform_3(%arg0: i32) -> (i32, i32) {
    %c0_i32 = arith.constant 0 : i32
    %c0_i32_0 = arith.constant 0 : i32
    return %arg0, %c0_i32 : i32, i32
  }
}

module attributes {stable_mosaic.version = 11 : i64} {
  func.func @edge_msg_kernel(%arg0: i32, %arg1: memref<128x128xf32, #tpu.memory_space<vmem>>, %arg2: memref<128x128xf32, #tpu.memory_space<vmem>>, %arg3: memref<128x128xf32, #tpu.memory_space<vmem>>, %arg4: memref<1x128xf32, #tpu.memory_space<vmem>>, %arg5: memref<128x128xf32, #tpu.memory_space<vmem>>, %arg6: memref<128x256xf32, #tpu.memory_space<vmem>>) attributes {dimension_semantics = [#tpu.dimension_semantics<parallel>], iteration_bounds = array<i64: 4>, scalar_prefetch = 0 : i64, scratch_operands = 0 : i64, tpu.core_type = #tpu.core_type<tc>, window_params = [{transform_indices = @transform_0, window_bounds = array<i64: 128, 128>}, {transform_indices = @transform_1, window_bounds = array<i64: 128, 128>}, {pipeline_mode = #tpu.pipeline_mode<synchronous>, transform_indices = @transform_2, window_bounds = array<i64: 128, 128>}, {pipeline_mode = #tpu.pipeline_mode<synchronous>, transform_indices = @transform_3, window_bounds = array<i64: 1, 128>}, {transform_indices = @transform_4, window_bounds = array<i64: 128, 128>}, {transform_indices = @transform_5, window_bounds = array<i64: 128, 256>}]} {
    %c0 = arith.constant 0 : index
    %c0_0 = arith.constant 0 : index
    %0 = vector.load %arg1[%c0, %c0_0] : memref<128x128xf32, #tpu.memory_space<vmem>>, vector<128x128xf32>
    %c0_1 = arith.constant 0 : index
    %c0_2 = arith.constant 0 : index
    %1 = vector.load %arg3[%c0_1, %c0_2] : memref<128x128xf32, #tpu.memory_space<vmem>>, vector<128x128xf32>
    %cst = arith.constant dense<0.000000e+00> : vector<128x128xf32>
    %2 = tpu.matmul %0, %1, %cst {dimension_numbers = #tpu.dot_dimension_numbers<[1], [0], [0], [1], [0, 0, 1, 1], [], []>} : vector<128x128xf32>, vector<128x128xf32>, vector<128x128xf32> -> vector<128x128xf32>
    %c0_3 = arith.constant 0 : index
    %c0_4 = arith.constant 0 : index
    %3 = vector.load %arg4[%c0_3, %c0_4] : memref<1x128xf32, #tpu.memory_space<vmem>>, vector<1x128xf32>
    %4 = vector.broadcast %3 : vector<1x128xf32> to vector<128x128xf32>
    %5 = arith.addf %2, %4 : vector<128x128xf32>
    %6 = arith.negf %5 : vector<128x128xf32>
    %7 = math.exp %6 : vector<128x128xf32>
    %cst_5 = arith.constant 1.000000e+00 : f32
    %8 = vector.broadcast %cst_5 : f32 to vector<128x128xf32>
    %9 = arith.addf %8, %7 : vector<128x128xf32>
    %10 = arith.divf %8, %9 : vector<128x128xf32>
    %c0_6 = arith.constant 0 : index
    %c0_7 = arith.constant 0 : index
    %11 = vector.load %arg5[%c0_6, %c0_7] : memref<128x128xf32, #tpu.memory_space<vmem>>, vector<128x128xf32>
    tpu.vector_store %arg5[%c0_6, %c0_7], %5 {strides = array<i32>} : memref<128x128xf32, #tpu.memory_space<vmem>>, vector<128x128xf32>,
    %c0_8 = arith.constant 0 : index
    %c0_9 = arith.constant 0 : index
    %12 = vector.load %arg2[%c0_8, %c0_9] : memref<128x128xf32, #tpu.memory_space<vmem>>, vector<128x128xf32>
    %13 = arith.mulf %10, %12 : vector<128x128xf32>
    %c0_10 = arith.constant 0 : index
    %c0_11 = arith.constant 0 : index
    %14 = vector.load %arg6[%c0_10, %c0_11] : memref<128x256xf32, #tpu.memory_space<vmem>>, vector<128x128xf32>
    tpu.vector_store %arg6[%c0_10, %c0_11], %13 {strides = array<i32>} : memref<128x256xf32, #tpu.memory_space<vmem>>, vector<128x128xf32>,
    %c0_12 = arith.constant 0 : index
    %c128 = arith.constant 128 : index
    %15 = vector.load %arg6[%c0_12, %c128] : memref<128x256xf32, #tpu.memory_space<vmem>>, vector<128x128xf32>
    tpu.vector_store %arg6[%c0_12, %c128], %10 {strides = array<i32>} : memref<128x256xf32, #tpu.memory_space<vmem>>, vector<128x128xf32>,
    return
  }
  func.func @transform_0(%arg0: i32) -> (i32, i32) {
    %c0_i32 = arith.constant 0 : i32
    %c0_i32_0 = arith.constant 0 : i32
    return %arg0, %c0_i32 : i32, i32
  }
  func.func @transform_1(%arg0: i32) -> (i32, i32) {
    %c0_i32 = arith.constant 0 : i32
    %c0_i32_0 = arith.constant 0 : i32
    return %arg0, %c0_i32 : i32, i32
  }
  func.func @transform_2(%arg0: i32) -> (i32, i32) {
    %c0_i32 = arith.constant 0 : i32
    %c0_i32_0 = arith.constant 0 : i32
    %c0_i32_1 = arith.constant 0 : i32
    return %c0_i32, %c0_i32_0 : i32, i32
  }
  func.func @transform_3(%arg0: i32) -> (i32, i32) {
    %c0_i32 = arith.constant 0 : i32
    %c0_i32_0 = arith.constant 0 : i32
    %c0_i32_1 = arith.constant 0 : i32
    return %c0_i32, %c0_i32_0 : i32, i32
  }
  func.func @transform_4(%arg0: i32) -> (i32, i32) {
    %c0_i32 = arith.constant 0 : i32
    %c0_i32_0 = arith.constant 0 : i32
    return %arg0, %c0_i32 : i32, i32
  }
  func.func @transform_5(%arg0: i32) -> (i32, i32) {
    %c0_i32 = arith.constant 0 : i32
    %c0_i32_0 = arith.constant 0 : i32
    return %arg0, %c0_i32 : i32, i32
  }
}

module attributes {stable_mosaic.version = 11 : i64} {
  func.func @node_combine_kernel(%arg0: i32, %arg1: memref<128x256xf32, #tpu.memory_space<vmem>>, %arg2: memref<128x256xf32, #tpu.memory_space<vmem>>, %arg3: memref<128x128xf32, #tpu.memory_space<vmem>>, %arg4: memref<1x128xf32, #tpu.memory_space<vmem>>, %arg5: memref<1x128xf32, #tpu.memory_space<vmem>>) attributes {dimension_semantics = [#tpu.dimension_semantics<arbitrary>], iteration_bounds = array<i64: 2>, scalar_prefetch = 0 : i64, scratch_operands = 0 : i64, tpu.core_type = #tpu.core_type<tc>, window_params = [{transform_indices = @transform_0, window_bounds = array<i64: 128, 256>}, {transform_indices = @transform_1, window_bounds = array<i64: 128, 256>}, {transform_indices = @transform_2, window_bounds = array<i64: 128, 128>}, {pipeline_mode = #tpu.pipeline_mode<synchronous>, transform_indices = @transform_3, window_bounds = array<i64: 1, 128>}, {pipeline_mode = #tpu.pipeline_mode<synchronous>, transform_indices = @transform_4, window_bounds = array<i64: 1, 128>}]} {
    %c0 = arith.constant 0 : index
    %c0_0 = arith.constant 0 : index
    %0 = vector.load %arg1[%c0, %c0_0] : memref<128x256xf32, #tpu.memory_space<vmem>>, vector<128x128xf32>
    %c0_1 = arith.constant 0 : index
    %c0_2 = arith.constant 0 : index
    %1 = vector.load %arg2[%c0_1, %c0_2] : memref<128x256xf32, #tpu.memory_space<vmem>>, vector<128x128xf32>
    %c0_3 = arith.constant 0 : index
    %c128 = arith.constant 128 : index
    %2 = vector.load %arg2[%c0_3, %c128] : memref<128x256xf32, #tpu.memory_space<vmem>>, vector<128x128xf32>
    %cst = arith.constant 9.99999997E-7 : f32
    %3 = vector.broadcast %cst : f32 to vector<128x128xf32>
    %4 = arith.addf %2, %3 : vector<128x128xf32>
    %5 = arith.divf %1, %4 : vector<128x128xf32>
    %6 = arith.addf %0, %5 : vector<128x128xf32>
    %c0_4 = arith.constant 0 : index
    %c0_5 = arith.constant 0 : index
    %7 = vector.load %arg3[%c0_4, %c0_5] : memref<128x128xf32, #tpu.memory_space<vmem>>, vector<128x128xf32>
    tpu.vector_store %arg3[%c0_4, %c0_5], %6 {strides = array<i32>} : memref<128x128xf32, #tpu.memory_space<vmem>>, vector<128x128xf32>,
    %c0_i32 = arith.constant 0 : i32
    %8 = arith.cmpi eq, %arg0, %c0_i32 : i32
    %9 = arith.extui %8 : i1 to i32
    %c0_i32_6 = arith.constant 0 : i32
    %10 = arith.cmpi ne, %9, %c0_i32_6 : i32
    scf.if %10 {
      %cst_17 = arith.constant 0.000000e+00 : f32
      %22 = vector.broadcast %cst_17 : f32 to vector<1x128xf32>
      %c0_18 = arith.constant 0 : index
      %c0_19 = arith.constant 0 : index
      %23 = vector.load %arg4[%c0_18, %c0_19] : memref<1x128xf32, #tpu.memory_space<vmem>>, vector<1x128xf32>
      tpu.vector_store %arg4[%c0_18, %c0_19], %22 {strides = array<i32>} : memref<1x128xf32, #tpu.memory_space<vmem>>, vector<1x128xf32>,
      %cst_20 = arith.constant 0.000000e+00 : f32
      %24 = vector.broadcast %cst_20 : f32 to vector<1x128xf32>
      %c0_21 = arith.constant 0 : index
      %c0_22 = arith.constant 0 : index
      %25 = vector.load %arg5[%c0_21, %c0_22] : memref<1x128xf32, #tpu.memory_space<vmem>>, vector<1x128xf32>
      tpu.vector_store %arg5[%c0_21, %c0_22], %24 {strides = array<i32>} : memref<1x128xf32, #tpu.memory_space<vmem>>, vector<1x128xf32>,
    } else {
    }
    %c0_7 = arith.constant 0 : index
    %c0_8 = arith.constant 0 : index
    %11 = vector.load %arg4[%c0_7, %c0_8] : memref<1x128xf32, #tpu.memory_space<vmem>>, vector<1x128xf32>
    %cst_9 = arith.constant dense<0.000000e+00> : vector<128xf32>
    %12 = vector.multi_reduction <add>, %6, %cst_9 [0] : vector<128x128xf32> to vector<128xf32>
    %13 = vector.shape_cast %12 : vector<128xf32> to vector<1x128xf32>
    %14 = arith.addf %11, %13 : vector<1x128xf32>
    %c0_10 = arith.constant 0 : index
    %c0_11 = arith.constant 0 : index
    %15 = vector.load %arg4[%c0_10, %c0_11] : memref<1x128xf32, #tpu.memory_space<vmem>>, vector<1x128xf32>
    tpu.vector_store %arg4[%c0_10, %c0_11], %14 {strides = array<i32>} : memref<1x128xf32, #tpu.memory_space<vmem>>, vector<1x128xf32>,
    %c0_12 = arith.constant 0 : index
    %c0_13 = arith.constant 0 : index
    %16 = vector.load %arg5[%c0_12, %c0_13] : memref<1x128xf32, #tpu.memory_space<vmem>>, vector<1x128xf32>
    %17 = arith.mulf %6, %6 : vector<128x128xf32>
    %cst_14 = arith.constant dense<0.000000e+00> : vector<128xf32>
    %18 = vector.multi_reduction <add>, %17, %cst_14 [0] : vector<128x128xf32> to vector<128xf32>
    %19 = vector.shape_cast %18 : vector<128xf32> to vector<1x128xf32>
    %20 = arith.addf %16, %19 : vector<1x128xf32>
    %c0_15 = arith.constant 0 : index
    %c0_16 = arith.constant 0 : index
    %21 = vector.load %arg5[%c0_15, %c0_16] : memref<1x128xf32, #tpu.memory_space<vmem>>, vector<1x128xf32>
    tpu.vector_store %arg5[%c0_15, %c0_16], %20 {strides = array<i32>} : memref<1x128xf32, #tpu.memory_space<vmem>>, vector<1x128xf32>,
    return
  }
  func.func @transform_0(%arg0: i32) -> (i32, i32) {
    %c0_i32 = arith.constant 0 : i32
    %c0_i32_0 = arith.constant 0 : i32
    return %arg0, %c0_i32 : i32, i32
  }
  func.func @transform_1(%arg0: i32) -> (i32, i32) {
    %c0_i32 = arith.constant 0 : i32
    %c0_i32_0 = arith.constant 0 : i32
    return %arg0, %c0_i32 : i32, i32
  }
  func.func @transform_2(%arg0: i32) -> (i32, i32) {
    %c0_i32 = arith.constant 0 : i32
    %c0_i32_0 = arith.constant 0 : i32
    return %arg0, %c0_i32 : i32, i32
  }
  func.func @transform_3(%arg0: i32) -> (i32, i32) {
    %c0_i32 = arith.constant 0 : i32
    %c0_i32_0 = arith.constant 0 : i32
    %c0_i32_1 = arith.constant 0 : i32
    return %c0_i32, %c0_i32_0 : i32, i32
  }
  func.func @transform_4(%arg0: i32) -> (i32, i32) {
    %c0_i32 = arith.constant 0 : i32
    %c0_i32_0 = arith.constant 0 : i32
    %c0_i32_1 = arith.constant 0 : i32
    return %c0_i32, %c0_i32_0 : i32, i32
  }
}

module attributes {stable_mosaic.version = 11 : i64} {
  func.func @edge_gru_kernel(%arg0: i32, %arg1: memref<128x128xf32, #tpu.memory_space<vmem>>, %arg2: memref<128x128xf32, #tpu.memory_space<vmem>>, %arg3: memref<128x128xf32, #tpu.memory_space<vmem>>, %arg4: memref<128x256xf32, #tpu.memory_space<vmem>>, %arg5: memref<128x256xf32, #tpu.memory_space<vmem>>, %arg6: memref<1x256xf32, #tpu.memory_space<vmem>>, %arg7: memref<128x128xf32, #tpu.memory_space<vmem>>, %arg8: memref<1x128xf32, #tpu.memory_space<vmem>>, %arg9: memref<1x128xf32, #tpu.memory_space<vmem>>) attributes {dimension_semantics = [#tpu.dimension_semantics<arbitrary>], iteration_bounds = array<i64: 4>, scalar_prefetch = 0 : i64, scratch_operands = 0 : i64, tpu.core_type = #tpu.core_type<tc>, window_params = [{transform_indices = @transform_0, window_bounds = array<i64: 128, 128>}, {transform_indices = @transform_1, window_bounds = array<i64: 128, 128>}, {transform_indices = @transform_2, window_bounds = array<i64: 128, 128>}, {pipeline_mode = #tpu.pipeline_mode<synchronous>, transform_indices = @transform_3, window_bounds = array<i64: 128, 256>}, {pipeline_mode = #tpu.pipeline_mode<synchronous>, transform_indices = @transform_4, window_bounds = array<i64: 128, 256>}, {pipeline_mode = #tpu.pipeline_mode<synchronous>, transform_indices = @transform_5, window_bounds = array<i64: 1, 256>}, {transform_indices = @transform_6, window_bounds = array<i64: 128, 128>}, {pipeline_mode = #tpu.pipeline_mode<synchronous>, transform_indices = @transform_7, window_bounds = array<i64: 1, 128>}, {pipeline_mode = #tpu.pipeline_mode<synchronous>, transform_indices = @transform_8, window_bounds = array<i64: 1, 128>}]} {
    %c0 = arith.constant 0 : index
    %c0_0 = arith.constant 0 : index
    %0 = vector.load %arg1[%c0, %c0_0] : memref<128x128xf32, #tpu.memory_space<vmem>>, vector<128x128xf32>
    %c0_1 = arith.constant 0 : index
    %c0_2 = arith.constant 0 : index
    %1 = vector.load %arg2[%c0_1, %c0_2] : memref<128x128xf32, #tpu.memory_space<vmem>>, vector<128x128xf32>
    %c0_3 = arith.constant 0 : index
    %c0_4 = arith.constant 0 : index
    %2 = vector.load %arg3[%c0_3, %c0_4] : memref<128x128xf32, #tpu.memory_space<vmem>>, vector<128x128xf32>
    %3 = arith.subf %1, %2 : vector<128x128xf32>
    %4 = math.absf %3 : vector<128x128xf32>
    %c0_5 = arith.constant 0 : index
    %c0_6 = arith.constant 0 : index
    %5 = vector.load %arg4[%c0_5, %c0_6] : memref<128x256xf32, #tpu.memory_space<vmem>>, vector<128x256xf32>
    %cst = arith.constant dense<0.000000e+00> : vector<128x256xf32>
    %6 = tpu.matmul %0, %5, %cst {dimension_numbers = #tpu.dot_dimension_numbers<[1], [0], [0], [1], [0, 0, 1, 1], [], []>} : vector<128x128xf32>, vector<128x256xf32>, vector<128x256xf32> -> vector<128x256xf32>
    %c0_7 = arith.constant 0 : index
    %c0_8 = arith.constant 0 : index
    %7 = vector.load %arg5[%c0_7, %c0_8] : memref<128x256xf32, #tpu.memory_space<vmem>>, vector<128x256xf32>
    %cst_9 = arith.constant dense<0.000000e+00> : vector<128x256xf32>
    %8 = tpu.matmul %4, %7, %cst_9 {dimension_numbers = #tpu.dot_dimension_numbers<[1], [0], [0], [1], [0, 0, 1, 1], [], []>} : vector<128x128xf32>, vector<128x256xf32>, vector<128x256xf32> -> vector<128x256xf32>
    %9 = arith.addf %6, %8 : vector<128x256xf32>
    %c0_10 = arith.constant 0 : index
    %c0_11 = arith.constant 0 : index
    %10 = vector.load %arg6[%c0_10, %c0_11] : memref<1x256xf32, #tpu.memory_space<vmem>>, vector<1x256xf32>
    %11 = vector.broadcast %10 : vector<1x256xf32> to vector<128x256xf32>
    %12 = arith.addf %9, %11 : vector<128x256xf32>
    %13 = vector.extract_strided_slice %12 {offsets = [0, 0], sizes = [128, 128], strides = [1, 1]} : vector<128x256xf32> to vector<128x128xf32>
    %14 = arith.negf %13 : vector<128x128xf32>
    %15 = math.exp %14 : vector<128x128xf32>
    %cst_12 = arith.constant 1.000000e+00 : f32
    %16 = vector.broadcast %cst_12 : f32 to vector<128x128xf32>
    %17 = arith.addf %16, %15 : vector<128x128xf32>
    %18 = arith.divf %16, %17 : vector<128x128xf32>
    %19 = vector.extract_strided_slice %12 {offsets = [0, 128], sizes = [128, 128], strides = [1, 1]} : vector<128x256xf32> to vector<128x128xf32>
    %20 = math.tanh %19 : vector<128x128xf32>
    %21 = arith.mulf %0, %18 : vector<128x128xf32>
    %cst_13 = arith.constant 1.000000e+00 : f32
    %22 = vector.broadcast %cst_13 : f32 to vector<128x128xf32>
    %23 = arith.subf %22, %18 : vector<128x128xf32>
    %24 = arith.mulf %20, %23 : vector<128x128xf32>
    %25 = arith.addf %21, %24 : vector<128x128xf32>
    %c0_14 = arith.constant 0 : index
    %c0_15 = arith.constant 0 : index
    %26 = vector.load %arg7[%c0_14, %c0_15] : memref<128x128xf32, #tpu.memory_space<vmem>>, vector<128x128xf32>
    tpu.vector_store %arg7[%c0_14, %c0_15], %25 {strides = array<i32>} : memref<128x128xf32, #tpu.memory_space<vmem>>, vector<128x128xf32>,
    %c0_i32 = arith.constant 0 : i32
    %27 = arith.cmpi eq, %arg0, %c0_i32 : i32
    %28 = arith.extui %27 : i1 to i32
    %c0_i32_16 = arith.constant 0 : i32
    %29 = arith.cmpi ne, %28, %c0_i32_16 : i32
    scf.if %29 {
      %cst_27 = arith.constant 0.000000e+00 : f32
      %41 = vector.broadcast %cst_27 : f32 to vector<1x128xf32>
      %c0_28 = arith.constant 0 : index
      %c0_29 = arith.constant 0 : index
      %42 = vector.load %arg8[%c0_28, %c0_29] : memref<1x128xf32, #tpu.memory_space<vmem>>, vector<1x128xf32>
      tpu.vector_store %arg8[%c0_28, %c0_29], %41 {strides = array<i32>} : memref<1x128xf32, #tpu.memory_space<vmem>>, vector<1x128xf32>,
      %cst_30 = arith.constant 0.000000e+00 : f32
      %43 = vector.broadcast %cst_30 : f32 to vector<1x128xf32>
      %c0_31 = arith.constant 0 : index
      %c0_32 = arith.constant 0 : index
      %44 = vector.load %arg9[%c0_31, %c0_32] : memref<1x128xf32, #tpu.memory_space<vmem>>, vector<1x128xf32>
      tpu.vector_store %arg9[%c0_31, %c0_32], %43 {strides = array<i32>} : memref<1x128xf32, #tpu.memory_space<vmem>>, vector<1x128xf32>,
    } else {
    }
    %c0_17 = arith.constant 0 : index
    %c0_18 = arith.constant 0 : index
    %30 = vector.load %arg8[%c0_17, %c0_18] : memref<1x128xf32, #tpu.memory_space<vmem>>, vector<1x128xf32>
    %cst_19 = arith.constant dense<0.000000e+00> : vector<128xf32>
    %31 = vector.multi_reduction <add>, %25, %cst_19 [0] : vector<128x128xf32> to vector<128xf32>
    %32 = vector.shape_cast %31 : vector<128xf32> to vector<1x128xf32>
    %33 = arith.addf %30, %32 : vector<1x128xf32>
    %c0_20 = arith.constant 0 : index
    %c0_21 = arith.constant 0 : index
    %34 = vector.load %arg8[%c0_20, %c0_21] : memref<1x128xf32, #tpu.memory_space<vmem>>, vector<1x128xf32>
    tpu.vector_store %arg8[%c0_20, %c0_21], %33 {strides = array<i32>} : memref<1x128xf32, #tpu.memory_space<vmem>>, vector<1x128xf32>,
    %c0_22 = arith.constant 0 : index
    %c0_23 = arith.constant 0 : index
    %35 = vector.load %arg9[%c0_22, %c0_23] : memref<1x128xf32, #tpu.memory_space<vmem>>, vector<1x128xf32>
    %36 = arith.mulf %25, %25 : vector<128x128xf32>
    %cst_24 = arith.constant dense<0.000000e+00> : vector<128xf32>
    %37 = vector.multi_reduction <add>, %36, %cst_24 [0] : vector<128x128xf32> to vector<128xf32>
    %38 = vector.shape_cast %37 : vector<128xf32> to vector<1x128xf32>
    %39 = arith.addf %35, %38 : vector<1x128xf32>
    %c0_25 = arith.constant 0 : index
    %c0_26 = arith.constant 0 : index
    %40 = vector.load %arg9[%c0_25, %c0_26] : memref<1x128xf32, #tpu.memory_space<vmem>>, vector<1x128xf32>
    tpu.vector_store %arg9[%c0_25, %c0_26], %39 {strides = array<i32>} : memref<1x128xf32, #tpu.memory_space<vmem>>, vector<1x128xf32>,
    return
  }
  func.func @transform_0(%arg0: i32) -> (i32, i32) {
    %c0_i32 = arith.constant 0 : i32
    %c0_i32_0 = arith.constant 0 : i32
    return %arg0, %c0_i32 : i32, i32
  }
  func.func @transform_1(%arg0: i32) -> (i32, i32) {
    %c0_i32 = arith.constant 0 : i32
    %c0_i32_0 = arith.constant 0 : i32
    return %arg0, %c0_i32 : i32, i32
  }
  func.func @transform_2(%arg0: i32) -> (i32, i32) {
    %c0_i32 = arith.constant 0 : i32
    %c0_i32_0 = arith.constant 0 : i32
    return %arg0, %c0_i32 : i32, i32
  }
  func.func @transform_3(%arg0: i32) -> (i32, i32) {
    %c0_i32 = arith.constant 0 : i32
    %c0_i32_0 = arith.constant 0 : i32
    %c0_i32_1 = arith.constant 0 : i32
    return %c0_i32, %c0_i32_0 : i32, i32
  }
  func.func @transform_4(%arg0: i32) -> (i32, i32) {
    %c0_i32 = arith.constant 0 : i32
    %c0_i32_0 = arith.constant 0 : i32
    %c0_i32_1 = arith.constant 0 : i32
    return %c0_i32, %c0_i32_0 : i32, i32
  }
  func.func @transform_5(%arg0: i32) -> (i32, i32) {
    %c0_i32 = arith.constant 0 : i32
    %c0_i32_0 = arith.constant 0 : i32
    %c0_i32_1 = arith.constant 0 : i32
    return %c0_i32, %c0_i32_0 : i32, i32
  }
  func.func @transform_6(%arg0: i32) -> (i32, i32) {
    %c0_i32 = arith.constant 0 : i32
    %c0_i32_0 = arith.constant 0 : i32
    return %arg0, %c0_i32 : i32, i32
  }
  func.func @transform_7(%arg0: i32) -> (i32, i32) {
    %c0_i32 = arith.constant 0 : i32
    %c0_i32_0 = arith.constant 0 : i32
    %c0_i32_1 = arith.constant 0 : i32
    return %c0_i32, %c0_i32_0 : i32, i32
  }
  func.func @transform_8(%arg0: i32) -> (i32, i32) {
    %c0_i32 = arith.constant 0 : i32
    %c0_i32_0 = arith.constant 0 : i32
    %c0_i32_1 = arith.constant 0 : i32
    return %c0_i32, %c0_i32_0 : i32, i32
  }
}

module attributes {stable_mosaic.version = 11 : i64} {
  func.func @bn_relu_residual_kernel(%arg0: i32, %arg1: memref<128x128xf32, #tpu.memory_space<vmem>>, %arg2: memref<128x128xf32, #tpu.memory_space<vmem>>, %arg3: memref<1x128xf32, #tpu.memory_space<vmem>>, %arg4: memref<1x128xf32, #tpu.memory_space<vmem>>, %arg5: memref<128x128xf32, #tpu.memory_space<vmem>>) attributes {dimension_semantics = [#tpu.dimension_semantics<parallel>], iteration_bounds = array<i64: 4>, scalar_prefetch = 0 : i64, scratch_operands = 0 : i64, tpu.core_type = #tpu.core_type<tc>, window_params = [{transform_indices = @transform_0, window_bounds = array<i64: 128, 128>}, {transform_indices = @transform_1, window_bounds = array<i64: 128, 128>}, {pipeline_mode = #tpu.pipeline_mode<synchronous>, transform_indices = @transform_2, window_bounds = array<i64: 1, 128>}, {pipeline_mode = #tpu.pipeline_mode<synchronous>, transform_indices = @transform_3, window_bounds = array<i64: 1, 128>}, {transform_indices = @transform_4, window_bounds = array<i64: 128, 128>}]} {
    %c0 = arith.constant 0 : index
    %c0_0 = arith.constant 0 : index
    %0 = vector.load %arg2[%c0, %c0_0] : memref<128x128xf32, #tpu.memory_space<vmem>>, vector<128x128xf32>
    %c0_1 = arith.constant 0 : index
    %c0_2 = arith.constant 0 : index
    %1 = vector.load %arg1[%c0_1, %c0_2] : memref<128x128xf32, #tpu.memory_space<vmem>>, vector<128x128xf32>
    %c0_3 = arith.constant 0 : index
    %c0_4 = arith.constant 0 : index
    %2 = vector.load %arg3[%c0_3, %c0_4] : memref<1x128xf32, #tpu.memory_space<vmem>>, vector<1x128xf32>
    %3 = vector.broadcast %2 : vector<1x128xf32> to vector<128x128xf32>
    %4 = arith.mulf %1, %3 : vector<128x128xf32>
    %c0_5 = arith.constant 0 : index
    %c0_6 = arith.constant 0 : index
    %5 = vector.load %arg4[%c0_5, %c0_6] : memref<1x128xf32, #tpu.memory_space<vmem>>, vector<1x128xf32>
    %6 = vector.broadcast %5 : vector<1x128xf32> to vector<128x128xf32>
    %7 = arith.addf %4, %6 : vector<128x128xf32>
    %cst = arith.constant 0.000000e+00 : f32
    %8 = vector.broadcast %cst : f32 to vector<128x128xf32>
    %9 = arith.maximumf %7, %8 : vector<128x128xf32>
    %10 = arith.addf %0, %9 : vector<128x128xf32>
    %c0_7 = arith.constant 0 : index
    %c0_8 = arith.constant 0 : index
    %11 = vector.load %arg5[%c0_7, %c0_8] : memref<128x128xf32, #tpu.memory_space<vmem>>, vector<128x128xf32>
    tpu.vector_store %arg5[%c0_7, %c0_8], %10 {strides = array<i32>} : memref<128x128xf32, #tpu.memory_space<vmem>>, vector<128x128xf32>,
    return
  }
  func.func @transform_0(%arg0: i32) -> (i32, i32) {
    %c0_i32 = arith.constant 0 : i32
    %c0_i32_0 = arith.constant 0 : i32
    return %arg0, %c0_i32 : i32, i32
  }
  func.func @transform_1(%arg0: i32) -> (i32, i32) {
    %c0_i32 = arith.constant 0 : i32
    %c0_i32_0 = arith.constant 0 : i32
    return %arg0, %c0_i32 : i32, i32
  }
  func.func @transform_2(%arg0: i32) -> (i32, i32) {
    %c0_i32 = arith.constant 0 : i32
    %c0_i32_0 = arith.constant 0 : i32
    %c0_i32_1 = arith.constant 0 : i32
    return %c0_i32, %c0_i32_0 : i32, i32
  }
  func.func @transform_3(%arg0: i32) -> (i32, i32) {
    %c0_i32 = arith.constant 0 : i32
    %c0_i32_0 = arith.constant 0 : i32
    %c0_i32_1 = arith.constant 0 : i32
    return %c0_i32, %c0_i32_0 : i32, i32
  }
  func.func @transform_4(%arg0: i32) -> (i32, i32) {
    %c0_i32 = arith.constant 0 : i32
    %c0_i32_0 = arith.constant 0 : i32
    return %arg0, %c0_i32 : i32, i32
  }
}

module attributes {stable_mosaic.version = 11 : i64} {
  func.func @bn_relu_residual_kernel(%arg0: i32, %arg1: memref<128x128xf32, #tpu.memory_space<vmem>>, %arg2: memref<128x128xf32, #tpu.memory_space<vmem>>, %arg3: memref<1x128xf32, #tpu.memory_space<vmem>>, %arg4: memref<1x128xf32, #tpu.memory_space<vmem>>, %arg5: memref<128x128xf32, #tpu.memory_space<vmem>>) attributes {dimension_semantics = [#tpu.dimension_semantics<parallel>], iteration_bounds = array<i64: 2>, scalar_prefetch = 0 : i64, scratch_operands = 0 : i64, tpu.core_type = #tpu.core_type<tc>, window_params = [{transform_indices = @transform_0, window_bounds = array<i64: 128, 128>}, {transform_indices = @transform_1, window_bounds = array<i64: 128, 128>}, {pipeline_mode = #tpu.pipeline_mode<synchronous>, transform_indices = @transform_2, window_bounds = array<i64: 1, 128>}, {pipeline_mode = #tpu.pipeline_mode<synchronous>, transform_indices = @transform_3, window_bounds = array<i64: 1, 128>}, {transform_indices = @transform_4, window_bounds = array<i64: 128, 128>}]} {
    %c0 = arith.constant 0 : index
    %c0_0 = arith.constant 0 : index
    %0 = vector.load %arg2[%c0, %c0_0] : memref<128x128xf32, #tpu.memory_space<vmem>>, vector<128x128xf32>
    %c0_1 = arith.constant 0 : index
    %c0_2 = arith.constant 0 : index
    %1 = vector.load %arg1[%c0_1, %c0_2] : memref<128x128xf32, #tpu.memory_space<vmem>>, vector<128x128xf32>
    %c0_3 = arith.constant 0 : index
    %c0_4 = arith.constant 0 : index
    %2 = vector.load %arg3[%c0_3, %c0_4] : memref<1x128xf32, #tpu.memory_space<vmem>>, vector<1x128xf32>
    %3 = vector.broadcast %2 : vector<1x128xf32> to vector<128x128xf32>
    %4 = arith.mulf %1, %3 : vector<128x128xf32>
    %c0_5 = arith.constant 0 : index
    %c0_6 = arith.constant 0 : index
    %5 = vector.load %arg4[%c0_5, %c0_6] : memref<1x128xf32, #tpu.memory_space<vmem>>, vector<1x128xf32>
    %6 = vector.broadcast %5 : vector<1x128xf32> to vector<128x128xf32>
    %7 = arith.addf %4, %6 : vector<128x128xf32>
    %cst = arith.constant 0.000000e+00 : f32
    %8 = vector.broadcast %cst : f32 to vector<128x128xf32>
    %9 = arith.maximumf %7, %8 : vector<128x128xf32>
    %10 = arith.addf %0, %9 : vector<128x128xf32>
    %c0_7 = arith.constant 0 : index
    %c0_8 = arith.constant 0 : index
    %11 = vector.load %arg5[%c0_7, %c0_8] : memref<128x128xf32, #tpu.memory_space<vmem>>, vector<128x128xf32>
    tpu.vector_store %arg5[%c0_7, %c0_8], %10 {strides = array<i32>} : memref<128x128xf32, #tpu.memory_space<vmem>>, vector<128x128xf32>,
    return
  }
  func.func @transform_0(%arg0: i32) -> (i32, i32) {
    %c0_i32 = arith.constant 0 : i32
    %c0_i32_0 = arith.constant 0 : i32
    return %arg0, %c0_i32 : i32, i32
  }
  func.func @transform_1(%arg0: i32) -> (i32, i32) {
    %c0_i32 = arith.constant 0 : i32
    %c0_i32_0 = arith.constant 0 : i32
    return %arg0, %c0_i32 : i32, i32
  }
  func.func @transform_2(%arg0: i32) -> (i32, i32) {
    %c0_i32 = arith.constant 0 : i32
    %c0_i32_0 = arith.constant 0 : i32
    %c0_i32_1 = arith.constant 0 : i32
    return %c0_i32, %c0_i32_0 : i32, i32
  }
  func.func @transform_3(%arg0: i32) -> (i32, i32) {
    %c0_i32 = arith.constant 0 : i32
    %c0_i32_0 = arith.constant 0 : i32
    %c0_i32_1 = arith.constant 0 : i32
    return %c0_i32, %c0_i32_0 : i32, i32
  }
  func.func @transform_4(%arg0: i32) -> (i32, i32) {
    %c0_i32 = arith.constant 0 : i32
    %c0_i32_0 = arith.constant 0 : i32
    return %arg0, %c0_i32 : i32, i32
  }
}

</mosaic_0001>

<llo_original>
// kernel: node_update_forward.6
$region0: #{node_update_forward.6}
  #allocation0 [shape = 'u32[]', space=smem, size = 0x4, offset = 0x4, fixed_abs, tag = 'smem constant byte address 0x4 - core index']
  #allocation1 [shape = 'u32[144,128]{1,0:T(1,128)}', space=vmem, size = 0x12000, scoped, tag = 'internal scratch']
  %s0 = inlined_call_operand.vmem [shape: f32[256,128], index: 0, kind: input, shape index: {}]
  %s1 = inlined_call_operand.vmem [shape: f32[128,256], index: 1, kind: input, shape index: {}]
  %s2 = inlined_call_operand.vmem [shape: f32[1,256], index: 2, kind: input, shape index: {}]
  %s3 = inlined_call_operand.vmem [shape: f32[256,256], index: 3, kind: output, shape index: {}]
  %s4 = sld [smem:[#allocation0]]
  $region45: #{node_update_forward.6} parent=0
    _
  %s6 = ssub.s32 1, %s4
  %s7 = scalar_select 0, %s6, %s4
  loop: start=0, step=1, limit=4
  $region2: #{node_update_forward.6} parent=0 // loop_pre_header
    _
  $region3: #{node_update_forward.6} parent=0 // loop_header
    %s9 = sphi 0, %s13
    %p10 = scmp.ge.s32.totalorder %s9, 4
    %s19 = sphi 0, %s21
    %s22 = sphi 0, %s19
    %s23 = sphi 0, %s22
    %s39 = sphi 0, %s23
    %s43 = sphi 0, %s43
    %s45 = sphi 0, %s43
    %s46 = sphi 0, %s45
    %s60 = sphi 0, %s46
    %s64 = sphi 0, %s64
    %s66 = sphi 0, %s64
    %s67 = sphi 0, %s66
    %s81 = sphi 0, %s67
    %s87 = sphi 0, %s89
    %s90 = sphi 0, %s87
    %s91 = sphi 0, %s90
    %s107 = sphi 0, %s91
  $region4: #{node_update_forward.6} parent=0 // loop_header_branch
    %12 = sbr.rel (%p10) target = $region8
  $region5: #{node_update_forward.6} parent=0 // loop_body
    %s14 = ssub.s32 %s9, 1
    %s15 = ssub.s32 %s9, 2
    %s16 = sadd.s32 %s9, 1
    %s17 = ssub.s32 %s9, %s16
    %p18 = scmp.eq.s32.totalorder %s17, 0
    %s20 = sadd.s32 %s19, 1
    %s21 = scalar_select %p18, %s19, %s20
    %p24 = pneg %p18
    %p25 = scmp.eq.s32.totalorder %s9, 1
    %p26 = por %p24, %p25
    %p27 = scmp.ne.s32.totalorder %s19, %s22
    %p28 = scmp.eq.s32.totalorder %s9, 0
    %p29 = por %p27, %p28
    %p30 = scmp.ne.s32.totalorder %s19, %s22
    %p31 = scmp.eq.s32.totalorder %s14, 1
    %p32 = por %p30, %p31
    %p33 = scmp.ne.s32.totalorder %s22, %s23
    %p34 = scmp.eq.s32.totalorder %s14, 0
    %p35 = por %p33, %p34
    %p36 = scmp.ne.s32.totalorder %s22, %s23
    %p37 = scmp.eq.s32.totalorder %s15, 1
    %p38 = por %p36, %p37
    %p40 = scmp.ne.s32.totalorder %s23, %s39
    %p41 = scmp.eq.s32.totalorder %s15, 0
    %p42 = por %p40, %p41
    %s44 = sadd.s32 %s43, 1
    %p47 = scmp.eq.s32.totalorder %s9, 1
    %p48 = scmp.ne.s32.totalorder %s43, %s45
    %p49 = scmp.eq.s32.totalorder %s9, 0
    %p50 = por %p48, %p49
    %p51 = scmp.ne.s32.totalorder %s43, %s45
    %p52 = scmp.eq.s32.totalorder %s14, 1
    %p53 = por %p51, %p52
    %p54 = scmp.ne.s32.totalorder %s45, %s46
    %p55 = scmp.eq.s32.totalorder %s14, 0
    %p56 = por %p54, %p55
    %p57 = scmp.ne.s32.totalorder %s45, %s46
    %p58 = scmp.eq.s32.totalorder %s15, 1
    %p59 = por %p57, %p58
    %p61 = scmp.ne.s32.totalorder %s46, %s60
    %p62 = scmp.eq.s32.totalorder %s15, 0
    %p63 = por %p61, %p62
    %s65 = sadd.s32 %s64, 1
    %p68 = scmp.eq.s32.totalorder %s9, 1
    %p69 = scmp.ne.s32.totalorder %s64, %s66
    %p70 = scmp.eq.s32.totalorder %s9, 0
    %p71 = por %p69, %p70
    %p72 = scmp.ne.s32.totalorder %s64, %s66
    %p73 = scmp.eq.s32.totalorder %s14, 1
    %p74 = por %p72, %p73
    %p75 = scmp.ne.s32.totalorder %s66, %s67
    %p76 = scmp.eq.s32.totalorder %s14, 0
    %p77 = por %p75, %p76
    %p78 = scmp.ne.s32.totalorder %s66, %s67
    %p79 = scmp.eq.s32.totalorder %s15, 1
    %p80 = por %p78, %p79
    %p82 = scmp.ne.s32.totalorder %s67, %s81
    %p83 = scmp.eq.s32.totalorder %s15, 0
    %p84 = por %p82, %p83
    %s85 = ssub.s32 %s9, %s16
    %p86 = scmp.eq.s32.totalorder %s85, 0
    %s88 = sadd.s32 %s87, 1
    %s89 = scalar_select %p86, %s87, %s88
    %p92 = pneg %p86
    %p93 = scmp.eq.s32.totalorder %s9, 1
    %p94 = por %p92, %p93
    %p95 = scmp.ne.s32.totalorder %s87, %s90
    %p96 = scmp.eq.s32.totalorder %s9, 0
    %p97 = por %p95, %p96
    %p98 = scmp.ne.s32.totalorder %s87, %s90
    %p99 = scmp.eq.s32.totalorder %s14, 1
    %p100 = por %p98, %p99
    %p101 = scmp.ne.s32.totalorder %s90, %s91
    %p102 = scmp.eq.s32.totalorder %s14, 0
    %p103 = por %p101, %p102
    %p104 = scmp.ne.s32.totalorder %s90, %s91
    %p105 = scmp.eq.s32.totalorder %s15, 1
    %p106 = por %p104, %p105
    %p108 = scmp.ne.s32.totalorder %s91, %s107
    %p109 = scmp.eq.s32.totalorder %s15, 0
    %p110 = por %p108, %p109
    %p111 = scmp.le.s32.totalorder 1, %s9
    %p112 = scmp.lt.s32.totalorder %s9, 3
    %p113 = pnand %p111, %p112
    %p114 = pneg %p113
    // Predicated region
    $region9: #{node_update_forward.6} parent=5 // pred_check
      _
    $region10: #{node_update_forward.6} parent=5 // pred_check_branch
      %116 = sbr.rel (%p113) target = $region12
    $region11: #{node_update_forward.6} parent=5 // pred_region
      %s117 = ssub.s32 %s9, 1
      // Predicated region
      $region13: #{node_update_forward.6} parent=11 // pred_check
        %p118 = pneg %p56
      $region14: #{node_update_forward.6} parent=11 // pred_check_branch
        %120 = sbr.rel (%p118) target = $region16
      $region15: #{node_update_forward.6} parent=11 // pred_region
        _
      $region16: #{node_update_forward.6} parent=11 // pred_fallthru
        _
      // Predicated region
      $region17: #{node_update_forward.6} parent=11 // pred_check
        %p121 = pneg %p77
      $region18: #{node_update_forward.6} parent=11 // pred_check_branch
        %123 = sbr.rel (%p121) target = $region20
      $region19: #{node_update_forward.6} parent=11 // pred_region
        _
      $region20: #{node_update_forward.6} parent=11 // pred_fallthru
        _
    $region12: #{node_update_forward.6} parent=5 // pred_fallthru
      _
    %p124 = scmp.lt.s32.totalorder %s9, 2
    // Predicated region
    $region21: #{node_update_forward.6} parent=5 // pred_check
      %p125 = pneg %p124
    $region22: #{node_update_forward.6} parent=5 // pred_check_branch
      %127 = sbr.rel (%p125) target = $region24
    $region23: #{node_update_forward.6} parent=5 // pred_region
      // Predicated region
      $region25: #{node_update_forward.6} parent=23 // pred_check
        %p128 = pneg %p29
      $region26: #{node_update_forward.6} parent=23 // pred_check_branch
        %130 = sbr.rel (%p128) target = $region28
      $region27: #{node_update_forward.6} parent=23 // pred_region
        %s131 = smul.u32 16, %s9
        %p132 = scmp.lt.s32.totalorder %s131, 31
        %s133 = scalar_select %p132, %s131, 31
        %s134 = smul.addr %s133, 8
        %s135 = scalar_lea.vmem %s0, %s134
        %s136 = smul.u32 16, %s9
      $region28: #{node_update_forward.6} parent=23 // pred_fallthru
        _
    $region24: #{node_update_forward.6} parent=5 // pred_fallthru
      _
    %p137 = scmp.le.s32.totalorder 1, %s9
    %p138 = scmp.lt.s32.totalorder %s9, 3
    %p139 = pnand %p137, %p138
    %p140 = pneg %p139
    // Predicated region
    $region29: #{node_update_forward.6} parent=5 // pred_check
      _
    $region30: #{node_update_forward.6} parent=5 // pred_check_branch
      %142 = sbr.rel (%p139) target = $region32
    $region31: #{node_update_forward.6} parent=5 // pred_region
      %s143 = ssub.s32 %s9, 1
      %s144 = smul.u32 16, %s14
      %p145 = scmp.lt.s32.totalorder %s144, 31
      %s146 = scalar_select %p145, %s144, 31
      %s147 = smul.addr %s146, 8
      %s148 = scalar_lea.vmem %s0, %s147
      %p149 = pneg %p35
      %p150 = pneg %p32
      %p151 = pneg %p56
      %p152 = pneg %p53
      %p153 = pneg %p77
      %p154 = pneg %p74
      %p155 = pneg %p103
      %p156 = pneg %p100
      %s157 = smul.u32 16, %s14
      %p158 = scmp.lt.s32.totalorder %s157, 31
      %s159 = scalar_select %p158, %s157, 31
      %s160 = smul.addr %s159, 2
      %s161 = smul.addr %s160, 8
      %s162 = scalar_lea.vmem %s3, %s161
      %s163 = smul.u32 16, %s14
      %p164 = scmp.lt.s32.totalorder %s163, 31
      %s165 = scalar_select %p164, %s163, 31
      %s166 = smul.addr %s165, 8
      %s167 = scalar_lea.vmem %s0, %s166
      %s168 = smul.u32 16, %s14
      %s169 = smul.u32 16, %s14
      %p170 = scmp.lt.s32.totalorder %s169, 31
      %s171 = scalar_select %p170, %s169, 31
      %s172 = smul.addr %s171, 2
      %s173 = smul.addr %s172, 8
      %s174 = scalar_lea.vmem %s3, %s173
      %s175 = smul.u32 16, %s14
      %v176 = vld [vmem:[%s167] sm:$0xff]
      %v177 = vld [vmem:[%s167 + $0x8] sm:$0xff]
      %v178 = vld [vmem:[%s167 + $0x10] sm:$0xff]
      %v179 = vld [vmem:[%s167 + $0x18] sm:$0xff]
      %v180 = vld [vmem:[%s167 + $0x20] sm:$0xff]
      %v181 = vld [vmem:[%s167 + $0x28] sm:$0xff]
      %v182 = vld [vmem:[%s167 + $0x30] sm:$0xff]
      %v183 = vld [vmem:[%s167 + $0x38] sm:$0xff]
      %v184 = vld [vmem:[%s167 + $0x40] sm:$0xff]
      %v185 = vld [vmem:[%s167 + $0x48] sm:$0xff]
      %v186 = vld [vmem:[%s167 + $0x50] sm:$0xff]
      %v187 = vld [vmem:[%s167 + $0x58] sm:$0xff]
      %v188 = vld [vmem:[%s167 + $0x60] sm:$0xff]
      %v189 = vld [vmem:[%s167 + $0x68] sm:$0xff]
      %v190 = vld [vmem:[%s167 + $0x70] sm:$0xff]
      %v191 = vld [vmem:[%s167 + $0x78] sm:$0xff]
      %v192 = vld [vmem:[%s1] sm:$0xff]
      %v193 = vld [vmem:[%s1 + $0x8] sm:$0xff]
      %v194 = vld [vmem:[%s1 + $0x10] sm:$0xff]
      %v195 = vld [vmem:[%s1 + $0x18] sm:$0xff]
      %v196 = vld [vmem:[%s1 + $0x20] sm:$0xff]
      %v197 = vld [vmem:[%s1 + $0x28] sm:$0xff]
      %v198 = vld [vmem:[%s1 + $0x30] sm:$0xff]
      %v199 = vld [vmem:[%s1 + $0x38] sm:$0xff]
      %v200 = vld [vmem:[%s1 + $0x40] sm:$0xff]
      %v201 = vld [vmem:[%s1 + $0x48] sm:$0xff]
      %v202 = vld [vmem:[%s1 + $0x50] sm:$0xff]
      %v203 = vld [vmem:[%s1 + $0x58] sm:$0xff]
      %v204 = vld [vmem:[%s1 + $0x60] sm:$0xff]
      %v205 = vld [vmem:[%s1 + $0x68] sm:$0xff]
      %v206 = vld [vmem:[%s1 + $0x70] sm:$0xff]
      %v207 = vld [vmem:[%s1 + $0x78] sm:$0xff]
      %v208 = vld [vmem:[%s1 + $0x80] sm:$0xff]
      %v209 = vld [vmem:[%s1 + $0x88] sm:$0xff]
      %v210 = vld [vmem:[%s1 + $0x90] sm:$0xff]
      %v211 = vld [vmem:[%s1 + $0x98] sm:$0xff]
      %v212 = vld [vmem:[%s1 + $0xa0] sm:$0xff]
      %v213 = vld [vmem:[%s1 + $0xa8] sm:$0xff]
      %v214 = vld [vmem:[%s1 + $0xb0] sm:$0xff]
      %v215 = vld [vmem:[%s1 + $0xb8] sm:$0xff]
      %v216 = vld [vmem:[%s1 + $0xc0] sm:$0xff]
      %v217 = vld [vmem:[%s1 + $0xc8] sm:$0xff]
      %v218 = vld [vmem:[%s1 + $0xd0] sm:$0xff]
      %v219 = vld [vmem:[%s1 + $0xd8] sm:$0xff]
      %v220 = vld [vmem:[%s1 + $0xe0] sm:$0xff]
      %v221 = vld [vmem:[%s1 + $0xe8] sm:$0xff]
      %v222 = vld [vmem:[%s1 + $0xf0] sm:$0xff]
      %v223 = vld [vmem:[%s1 + $0xf8] sm:$0xff]
      %v224 = vld [vmem:[%s2] sm:$0x3]
      %v226 = vlaneseq
      %v227 = vshrl.u32 %v226, 7
      %v228 = vsub.s32 0, %v227
      %v229 = vrot.slane %v224, %v228
      %v230 = vlaneseq
      %v231 = vshrl.u32 %v230, 7
      %v232 = vsub.s32 1, %v231
      %v233 = vrot.slane %v224, %v232
      %236 = vmatprep.subr.mxu0 %v223
      %237 = vmatpush1.msra.mxu0 %v222
      %238 = vmatprep.subr.mxu0 %v221
      %239 = vmatpush1.msra.mxu0 %v220
      %240 = vmatprep.subr.mxu0 %v219
      %241 = vmatpush1.msra.mxu0 %v218
      %242 = vmatprep.subr.mxu0 %v217
      %243 = vmatpush1.msra.mxu0 %v216
      %244 = vmatprep.subr.mxu0 %v215
      %245 = vmatpush1.msra.mxu0 %v214
      %246 = vmatprep.subr.mxu0 %v213
      %247 = vmatpush1.msra.mxu0 %v212
      %248 = vmatprep.subr.mxu0 %v211
      %249 = vmatpush1.msra.mxu0 %v210
      %250 = vmatprep.subr.mxu0 %v209
      %251 = vmatpush1.msra.mxu0 %v208
      %252 = vmatprep.subr.mxu0 %v207
      %253 = vmatpush1.msra.mxu0 %v206
      %254 = vmatprep.subr.mxu0 %v205
      %255 = vmatpush1.msra.mxu0 %v204
      %256 = vmatprep.subr.mxu0 %v203
      %257 = vmatpush1.msra.mxu0 %v202
      %258 = vmatprep.subr.mxu0 %v201
      %259 = vmatpush1.msra.mxu0 %v200
      %260 = vmatprep.subr.mxu0 %v199
      %261 = vmatpush1.msra.mxu0 %v198
      %262 = vmatprep.subr.mxu0 %v197
      %263 = vmatpush1.msra.mxu0 %v196
      %264 = vmatprep.subr.mxu0 %v195
      %265 = vmatpush1.msra.mxu0 %v194
      %266 = vmatprep.subr.mxu0 %v193
      %267 = vmatpush1.msra.mxu0 %v192
      %268 = vmatprep.subr.mxu0 0.0
      %269 = vmatpush2.msra.mxu0 0.0
      %270 = vmatprep.subr.mxu0 0.0
      %271 = vmatpush2.msra.mxu0 0.0
      %272 = vmatprep.subr.mxu0 0.0
      %273 = vmatpush2.msra.mxu0 0.0
      %274 = vmatprep.subr.mxu0 0.0
      %275 = vmatpush2.msra.mxu0 0.0
      %276 = vmatprep.subr.mxu0 0.0
      %277 = vmatpush2.msra.mxu0 0.0
      %278 = vmatprep.subr.mxu0 0.0
      %279 = vmatpush2.msra.mxu0 0.0
      %280 = vmatprep.subr.mxu0 0.0
      %281 = vmatpush2.msra.mxu0 0.0
      %282 = vmatprep.subr.mxu0 0.0
      %283 = vmatpush2.msra.mxu0 0.0
      %284 = vmatprep.subr.mxu0 0.0
      %285 = vmatpush2.msra.mxu0 0.0
      %286 = vmatprep.subr.mxu0 0.0
      %287 = vmatpush2.msra.mxu0 0.0
      %288 = vmatprep.subr.mxu0 0.0
      %289 = vmatpush2.msra.mxu0 0.0
      %290 = vmatprep.subr.mxu0 0.0
      %291 = vmatpush2.msra.mxu0 0.0
      %292 = vmatprep.subr.mxu0 0.0
      %293 = vmatpush2.msra.mxu0 0.0
      %294 = vmatprep.subr.mxu0 0.0
      %295 = vmatpush2.msra.mxu0 0.0
      %296 = vmatprep.subr.mxu0 0.0
      %297 = vmatpush2.msra.mxu0 0.0
      %298 = vmatprep.subr.mxu0 0.0
      %299 = vmatpush2.msra.mxu0 0.0
      %300 = vmatprep.mubr.f32.mxu0 0.0
      %301 = vmatmul.mubr.f32.gmra.mxu0 %v176
      %v302 = vpop.f32.mrf.mxu0
      %v303 = vadd.f32 %v229, %v302
      %v304 = vpop.f32.mrf.mxu0
      %v305 = vadd.f32 %v233, %v304
      %306 = vmatprep.mubr.f32.mxu0 0.0
      %307 = vmatmul.mubr.f32.gmra.mxu0 %v177
      %v308 = vpop.f32.mrf.mxu0
      %v309 = vadd.f32 %v229, %v308
      %v310 = vpop.f32.mrf.mxu0
      %v311 = vadd.f32 %v233, %v310
      %312 = vmatprep.mubr.f32.mxu0 0.0
      %313 = vmatmul.mubr.f32.gmra.mxu0 %v178
      %v314 = vpop.f32.mrf.mxu0
      %v315 = vadd.f32 %v229, %v314
      %v316 = vpop.f32.mrf.mxu0
      %v317 = vadd.f32 %v233, %v316
      %318 = vmatprep.mubr.f32.mxu0 0.0
      %319 = vmatmul.mubr.f32.gmra.mxu0 %v179
      %v320 = vpop.f32.mrf.mxu0
      %v321 = vadd.f32 %v229, %v320
      %v322 = vpop.f32.mrf.mxu0
      %v323 = vadd.f32 %v233, %v322
      %324 = vmatprep.mubr.f32.mxu0 0.0
      %325 = vmatmul.mubr.f32.gmra.mxu0 %v180
      %v326 = vpop.f32.mrf.mxu0
      %v327 = vadd.f32 %v229, %v326
      %v328 = vpop.f32.mrf.mxu0
      %v329 = vadd.f32 %v233, %v328
      %330 = vmatprep.mubr.f32.mxu0 0.0
      %331 = vmatmul.mubr.f32.gmra.mxu0 %v181
      %v332 = vpop.f32.mrf.mxu0
      %v333 = vadd.f32 %v229, %v332
      %v334 = vpop.f32.mrf.mxu0
      %v335 = vadd.f32 %v233, %v334
      %336 = vmatprep.mubr.f32.mxu0 0.0
      %337 = vmatmul.mubr.f32.gmra.mxu0 %v182
      %v338 = vpop.f32.mrf.mxu0
      %v339 = vadd.f32 %v229, %v338
      %v340 = vpop.f32.mrf.mxu0
      %v341 = vadd.f32 %v233, %v340
      %342 = vmatprep.mubr.f32.mxu0 0.0
      %343 = vmatmul.mubr.f32.gmra.mxu0 %v183
      %v344 = vpop.f32.mrf.mxu0
      %v345 = vadd.f32 %v229, %v344
      %v346 = vpop.f32.mrf.mxu0
      %v347 = vadd.f32 %v233, %v346
      %348 = vmatprep.mubr.f32.mxu0 0.0
      %349 = vmatmul.mubr.f32.gmra.mxu0 %v184
      %v350 = vpop.f32.mrf.mxu0
      %v351 = vadd.f32 %v229, %v350
      %v352 = vpop.f32.mrf.mxu0
      %v353 = vadd.f32 %v233, %v352
      %354 = vmatprep.mubr.f32.mxu0 0.0
      %355 = vmatmul.mubr.f32.gmra.mxu0 %v185
      %v356 = vpop.f32.mrf.mxu0
      %v357 = vadd.f32 %v229, %v356
      %v358 = vpop.f32.mrf.mxu0
      %v359 = vadd.f32 %v233, %v358
      %360 = vmatprep.mubr.f32.mxu0 0.0
      %361 = vmatmul.mubr.f32.gmra.mxu0 %v186
      %v362 = vpop.f32.mrf.mxu0
      %v363 = vadd.f32 %v229, %v362
      %v364 = vpop.f32.mrf.mxu0
      %v365 = vadd.f32 %v233, %v364
      %366 = vmatprep.mubr.f32.mxu0 0.0
      %367 = vmatmul.mubr.f32.gmra.mxu0 %v187
      %v368 = vpop.f32.mrf.mxu0
      %v369 = vadd.f32 %v229, %v368
      %v370 = vpop.f32.mrf.mxu0
      %v371 = vadd.f32 %v233, %v370
      %372 = vmatprep.mubr.f32.mxu0 0.0
      %373 = vmatmul.mubr.f32.gmra.mxu0 %v188
      %v374 = vpop.f32.mrf.mxu0
      %v375 = vadd.f32 %v229, %v374
      %v376 = vpop.f32.mrf.mxu0
      %v377 = vadd.f32 %v233, %v376
      %378 = vmatprep.mubr.f32.mxu0 0.0
      %379 = vmatmul.mubr.f32.gmra.mxu0 %v189
      %v380 = vpop.f32.mrf.mxu0
      %v381 = vadd.f32 %v229, %v380
      %v382 = vpop.f32.mrf.mxu0
      %v383 = vadd.f32 %v233, %v382
      %384 = vmatprep.mubr.f32.mxu0 0.0
      %385 = vmatmul.mubr.f32.gmra.mxu0 %v190
      %v386 = vpop.f32.mrf.mxu0
      %v387 = vadd.f32 %v229, %v386
      %v388 = vpop.f32.mrf.mxu0
      %v389 = vadd.f32 %v233, %v388
      %390 = vmatprep.mubr.f32.mxu0 0.0
      %391 = vmatmul.mubr.f32.gmra.mxu0 %v191
      %v392 = vpop.f32.mrf.mxu0
      %v393 = vadd.f32 %v229, %v392
      %v394 = vpop.f32.mrf.mxu0
      %v395 = vadd.f32 %v233, %v394
      %396 = vdwg.mxu0
      %397 = vst [vmem:[%s174] sm:$0xff] %v303
      %398 = vst [vmem:[%s174 + $0x8] sm:$0xff] %v305
      %399 = vst [vmem:[%s174 + $0x10] sm:$0xff] %v309
      %400 = vst [vmem:[%s174 + $0x18] sm:$0xff] %v311
      %401 = vst [vmem:[%s174 + $0x20] sm:$0xff] %v315
      %402 = vst [vmem:[%s174 + $0x28] sm:$0xff] %v317
      %403 = vst [vmem:[%s174 + $0x30] sm:$0xff] %v321
      %404 = vst [vmem:[%s174 + $0x38] sm:$0xff] %v323
      %405 = vst [vmem:[%s174 + $0x40] sm:$0xff] %v327
      %406 = vst [vmem:[%s174 + $0x48] sm:$0xff] %v329
      %407 = vst [vmem:[%s174 + $0x50] sm:$0xff] %v333
      %408 = vst [vmem:[%s174 + $0x58] sm:$0xff] %v335
      %409 = vst [vmem:[%s174 + $0x60] sm:$0xff] %v339
      %410 = vst [vmem:[%s174 + $0x68] sm:$0xff] %v341
      %411 = vst [vmem:[%s174 + $0x70] sm:$0xff] %v345
      %412 = vst [vmem:[%s174 + $0x78] sm:$0xff] %v347
      %413 = vst [vmem:[%s174 + $0x80] sm:$0xff] %v351
      %414 = vst [vmem:[%s174 + $0x88] sm:$0xff] %v353
      %415 = vst [vmem:[%s174 + $0x90] sm:$0xff] %v357
      %416 = vst [vmem:[%s174 + $0x98] sm:$0xff] %v359
      %417 = vst [vmem:[%s174 + $0xa0] sm:$0xff] %v363
      %418 = vst [vmem:[%s174 + $0xa8] sm:$0xff] %v365
      %419 = vst [vmem:[%s174 + $0xb0] sm:$0xff] %v369
      %420 = vst [vmem:[%s174 + $0xb8] sm:$0xff] %v371
      %421 = vst [vmem:[%s174 + $0xc0] sm:$0xff] %v375
      %422 = vst [vmem:[%s174 + $0xc8] sm:$0xff] %v377
      %423 = vst [vmem:[%s174 + $0xd0] sm:$0xff] %v381
      %424 = vst [vmem:[%s174 + $0xd8] sm:$0xff] %v383
      %425 = vst [vmem:[%s174 + $0xe0] sm:$0xff] %v387
      %426 = vst [vmem:[%s174 + $0xe8] sm:$0xff] %v389
      %427 = vst [vmem:[%s174 + $0xf0] sm:$0xff] %v393
      %428 = vst [vmem:[%s174 + $0xf8] sm:$0xff] %v395
      %s429 = smul.u32 16, %s14
      %p430 = scmp.lt.s32.totalorder %s429, 31
      %s431 = scalar_select %p430, %s429, 31
      %s432 = smul.addr %s431, 2
      %s433 = smul.addr %s432, 8
      %s434 = scalar_lea.vmem %s3, %s433
      // Predicated region
      $region33: #{node_update_forward.6} parent=31 // pred_check
        %p435 = pneg %p100
      $region34: #{node_update_forward.6} parent=31 // pred_check_branch
        %437 = sbr.rel (%p435) target = $region36
      $region35: #{node_update_forward.6} parent=31 // pred_region
        %s438 = smul.u32 16, %s14
      $region36: #{node_update_forward.6} parent=31 // pred_fallthru
        _
    $region32: #{node_update_forward.6} parent=5 // pred_fallthru
      _
    %p439 = scmp.le.s32.totalorder 2, %s9
    // Predicated region
    $region37: #{node_update_forward.6} parent=5 // pred_check
      %p440 = pneg %p439
    $region38: #{node_update_forward.6} parent=5 // pred_check_branch
      %442 = sbr.rel (%p440) target = $region40
    $region39: #{node_update_forward.6} parent=5 // pred_region
      %s443 = ssub.s32 %s9, 2
      // Predicated region
      $region41: #{node_update_forward.6} parent=39 // pred_check
        %p444 = pneg %p106
      $region42: #{node_update_forward.6} parent=39 // pred_check_branch
        %446 = sbr.rel (%p444) target = $region44
      $region43: #{node_update_forward.6} parent=39 // pred_region
        %s447 = smul.u32 16, %s15
        %p448 = scmp.lt.s32.totalorder %s447, 31
        %s449 = scalar_select %p448, %s447, 31
        %s450 = smul.addr %s449, 2
        %s451 = smul.addr %s450, 8
        %s452 = scalar_lea.vmem %s3, %s451
      $region44: #{node_update_forward.6} parent=39 // pred_fallthru
        _
    $region40: #{node_update_forward.6} parent=5 // pred_fallthru
      _
  $region6: #{node_update_forward.6} parent=0 // loop_footer
    %s13 = sadd.s32 1, %s9
  $region7: #{node_update_forward.6} parent=0 // loop_footer_branch
    %8 = sbr.rel target = $region3
  $region8: #{node_update_forward.6} parent=0 // loop_exit
    _

// kernel: node_update_forward.7
$region0: #{node_update_forward.7}
  #allocation0 [shape = 'u32[]', space=smem, size = 0x4, offset = 0x4, fixed_abs, tag = 'smem constant byte address 0x4 - core index']
  #allocation1 [shape = 'u32[144,128]{1,0:T(1,128)}', space=vmem, size = 0x12000, scoped, tag = 'internal scratch']
  %s0 = inlined_call_operand.vmem [shape: f32[512,128], index: 0, kind: input, shape index: {}]
  %s1 = inlined_call_operand.vmem [shape: f32[512,128], index: 1, kind: input, shape index: {}]
  %s2 = inlined_call_operand.vmem [shape: f32[128,128], index: 2, kind: input, shape index: {}]
  %s3 = inlined_call_operand.vmem [shape: f32[1,128], index: 3, kind: input, shape index: {}]
  %s4 = inlined_call_operand.vmem [shape: f32[512,128], index: 4, kind: output, shape index: {0}]
  %s5 = inlined_call_operand.vmem [shape: f32[512,256], index: 5, kind: output, shape index: {1}]
  %6 = xla_tuple %s4, %s5
  %s7 = sld [smem:[#allocation0]]
  $region57: #{node_update_forward.7} parent=0
    _
  %s9 = ssub.s32 1, %s7
  %s10 = scalar_select 0, %s9, %s7
  loop: start=0, step=1, limit=6
  $region2: #{node_update_forward.7} parent=0 // loop_pre_header
    _
  $region3: #{node_update_forward.7} parent=0 // loop_header
    %s12 = sphi 0, %s16
    %p13 = scmp.ge.s32.totalorder %s12, 6
    %s22 = sphi 0, %s24
    %s25 = sphi 0, %s22
    %s26 = sphi 0, %s25
    %s42 = sphi 0, %s26
    %s48 = sphi 0, %s50
    %s51 = sphi 0, %s48
    %s52 = sphi 0, %s51
    %s68 = sphi 0, %s52
    %s72 = sphi 0, %s72
    %s74 = sphi 0, %s72
    %s75 = sphi 0, %s74
    %s89 = sphi 0, %s75
    %s93 = sphi 0, %s93
    %s95 = sphi 0, %s93
    %s96 = sphi 0, %s95
    %s110 = sphi 0, %s96
    %s116 = sphi 0, %s118
    %s119 = sphi 0, %s116
    %s120 = sphi 0, %s119
    %s136 = sphi 0, %s120
    %s142 = sphi 0, %s144
    %s145 = sphi 0, %s142
    %s146 = sphi 0, %s145
    %s162 = sphi 0, %s146
  $region4: #{node_update_forward.7} parent=0 // loop_header_branch
    %15 = sbr.rel (%p13) target = $region8
  $region5: #{node_update_forward.7} parent=0 // loop_body
    %s17 = ssub.s32 %s12, 1
    %s18 = ssub.s32 %s12, 2
    %s19 = sadd.s32 %s12, 1
    %s20 = ssub.s32 %s12, %s19
    %p21 = scmp.eq.s32.totalorder %s20, 0
    %s23 = sadd.s32 %s22, 1
    %s24 = scalar_select %p21, %s22, %s23
    %p27 = pneg %p21
    %p28 = scmp.eq.s32.totalorder %s12, 3
    %p29 = por %p27, %p28
    %p30 = scmp.ne.s32.totalorder %s22, %s25
    %p31 = scmp.eq.s32.totalorder %s12, 0
    %p32 = por %p30, %p31
    %p33 = scmp.ne.s32.totalorder %s22, %s25
    %p34 = scmp.eq.s32.totalorder %s17, 3
    %p35 = por %p33, %p34
    %p36 = scmp.ne.s32.totalorder %s25, %s26
    %p37 = scmp.eq.s32.totalorder %s17, 0
    %p38 = por %p36, %p37
    %p39 = scmp.ne.s32.totalorder %s25, %s26
    %p40 = scmp.eq.s32.totalorder %s18, 3
    %p41 = por %p39, %p40
    %p43 = scmp.ne.s32.totalorder %s26, %s42
    %p44 = scmp.eq.s32.totalorder %s18, 0
    %p45 = por %p43, %p44
    %s46 = ssub.s32 %s12, %s19
    %p47 = scmp.eq.s32.totalorder %s46, 0
    %s49 = sadd.s32 %s48, 1
    %s50 = scalar_select %p47, %s48, %s49
    %p53 = pneg %p47
    %p54 = scmp.eq.s32.totalorder %s12, 3
    %p55 = por %p53, %p54
    %p56 = scmp.ne.s32.totalorder %s48, %s51
    %p57 = scmp.eq.s32.totalorder %s12, 0
    %p58 = por %p56, %p57
    %p59 = scmp.ne.s32.totalorder %s48, %s51
    %p60 = scmp.eq.s32.totalorder %s17, 3
    %p61 = por %p59, %p60
    %p62 = scmp.ne.s32.totalorder %s51, %s52
    %p63 = scmp.eq.s32.totalorder %s17, 0
    %p64 = por %p62, %p63
    %p65 = scmp.ne.s32.totalorder %s51, %s52
    %p66 = scmp.eq.s32.totalorder %s18, 3
    %p67 = por %p65, %p66
    %p69 = scmp.ne.s32.totalorder %s52, %s68
    %p70 = scmp.eq.s32.totalorder %s18, 0
    %p71 = por %p69, %p70
    %s73 = sadd.s32 %s72, 1
    %p76 = scmp.eq.s32.totalorder %s12, 3
    %p77 = scmp.ne.s32.totalorder %s72, %s74
    %p78 = scmp.eq.s32.totalorder %s12, 0
    %p79 = por %p77, %p78
    %p80 = scmp.ne.s32.totalorder %s72, %s74
    %p81 = scmp.eq.s32.totalorder %s17, 3
    %p82 = por %p80, %p81
    %p83 = scmp.ne.s32.totalorder %s74, %s75
    %p84 = scmp.eq.s32.totalorder %s17, 0
    %p85 = por %p83, %p84
    %p86 = scmp.ne.s32.totalorder %s74, %s75
    %p87 = scmp.eq.s32.totalorder %s18, 3
    %p88 = por %p86, %p87
    %p90 = scmp.ne.s32.totalorder %s75, %s89
    %p91 = scmp.eq.s32.totalorder %s18, 0
    %p92 = por %p90, %p91
    %s94 = sadd.s32 %s93, 1
    %p97 = scmp.eq.s32.totalorder %s12, 3
    %p98 = scmp.ne.s32.totalorder %s93, %s95
    %p99 = scmp.eq.s32.totalorder %s12, 0
    %p100 = por %p98, %p99
    %p101 = scmp.ne.s32.totalorder %s93, %s95
    %p102 = scmp.eq.s32.totalorder %s17, 3
    %p103 = por %p101, %p102
    %p104 = scmp.ne.s32.totalorder %s95, %s96
    %p105 = scmp.eq.s32.totalorder %s17, 0
    %p106 = por %p104, %p105
    %p107 = scmp.ne.s32.totalorder %s95, %s96
    %p108 = scmp.eq.s32.totalorder %s18, 3
    %p109 = por %p107, %p108
    %p111 = scmp.ne.s32.totalorder %s96, %s110
    %p112 = scmp.eq.s32.totalorder %s18, 0
    %p113 = por %p111, %p112
    %s114 = ssub.s32 %s12, %s19
    %p115 = scmp.eq.s32.totalorder %s114, 0
    %s117 = sadd.s32 %s116, 1
    %s118 = scalar_select %p115, %s116, %s117
    %p121 = pneg %p115
    %p122 = scmp.eq.s32.totalorder %s12, 3
    %p123 = por %p121, %p122
    %p124 = scmp.ne.s32.totalorder %s116, %s119
    %p125 = scmp.eq.s32.totalorder %s12, 0
    %p126 = por %p124, %p125
    %p127 = scmp.ne.s32.totalorder %s116, %s119
    %p128 = scmp.eq.s32.totalorder %s17, 3
    %p129 = por %p127, %p128
    %p130 = scmp.ne.s32.totalorder %s119, %s120
    %p131 = scmp.eq.s32.totalorder %s17, 0
    %p132 = por %p130, %p131
    %p133 = scmp.ne.s32.totalorder %s119, %s120
    %p134 = scmp.eq.s32.totalorder %s18, 3
    %p135 = por %p133, %p134
    %p137 = scmp.ne.s32.totalorder %s120, %s136
    %p138 = scmp.eq.s32.totalorder %s18, 0
    %p139 = por %p137, %p138
    %s140 = ssub.s32 %s12, %s19
    %p141 = scmp.eq.s32.totalorder %s140, 0
    %s143 = sadd.s32 %s142, 1
    %s144 = scalar_select %p141, %s142, %s143
    %p147 = pneg %p141
    %p148 = scmp.eq.s32.totalorder %s12, 3
    %p149 = por %p147, %p148
    %p150 = scmp.ne.s32.totalorder %s142, %s145
    %p151 = scmp.eq.s32.totalorder %s12, 0
    %p152 = por %p150, %p151
    %p153 = scmp.ne.s32.totalorder %s142, %s145
    %p154 = scmp.eq.s32.totalorder %s17, 3
    %p155 = por %p153, %p154
    %p156 = scmp.ne.s32.totalorder %s145, %s146
    %p157 = scmp.eq.s32.totalorder %s17, 0
    %p158 = por %p156, %p157
    %p159 = scmp.ne.s32.totalorder %s145, %s146
    %p160 = scmp.eq.s32.totalorder %s18, 3
    %p161 = por %p159, %p160
    %p163 = scmp.ne.s32.totalorder %s146, %s162
    %p164 = scmp.eq.s32.totalorder %s18, 0
    %p165 = por %p163, %p164
    %p166 = scmp.le.s32.totalorder 1, %s12
    %p167 = scmp.lt.s32.totalorder %s12, 5
    %p168 = pnand %p166, %p167
    %p169 = pneg %p168
    // Predicated region
    $region9: #{node_update_forward.7} parent=5 // pred_check
      _
    $region10: #{node_update_forward.7} parent=5 // pred_check_branch
      %171 = sbr.rel (%p168) target = $region12
    $region11: #{node_update_forward.7} parent=5 // pred_region
      %s172 = ssub.s32 %s12, 1
      // Predicated region
      $region13: #{node_update_forward.7} parent=11 // pred_check
        %p173 = pneg %p85
      $region14: #{node_update_forward.7} parent=11 // pred_check_branch
        %175 = sbr.rel (%p173) target = $region16
      $region15: #{node_update_forward.7} parent=11 // pred_region
        _
      $region16: #{node_update_forward.7} parent=11 // pred_fallthru
        _
      // Predicated region
      $region17: #{node_update_forward.7} parent=11 // pred_check
        %p176 = pneg %p106
      $region18: #{node_update_forward.7} parent=11 // pred_check_branch
        %178 = sbr.rel (%p176) target = $region20
      $region19: #{node_update_forward.7} parent=11 // pred_region
        _
      $region20: #{node_update_forward.7} parent=11 // pred_fallthru
        _
    $region12: #{node_update_forward.7} parent=5 // pred_fallthru
      _
    %p179 = scmp.lt.s32.totalorder %s12, 4
    // Predicated region
    $region21: #{node_update_forward.7} parent=5 // pred_check
      %p180 = pneg %p179
    $region22: #{node_update_forward.7} parent=5 // pred_check_branch
      %182 = sbr.rel (%p180) target = $region24
    $region23: #{node_update_forward.7} parent=5 // pred_region
      // Predicated region
      $region25: #{node_update_forward.7} parent=23 // pred_check
        %p183 = pneg %p32
      $region26: #{node_update_forward.7} parent=23 // pred_check_branch
        %185 = sbr.rel (%p183) target = $region28
      $region27: #{node_update_forward.7} parent=23 // pred_region
        %s186 = smul.u32 16, %s12
        %p187 = scmp.lt.s32.totalorder %s186, 63
        %s188 = scalar_select %p187, %s186, 63
        %s189 = smul.addr %s188, 8
        %s190 = scalar_lea.vmem %s0, %s189
        %s191 = smul.u32 16, %s12
      $region28: #{node_update_forward.7} parent=23 // pred_fallthru
        _
      // Predicated region
      $region29: #{node_update_forward.7} parent=23 // pred_check
        %p192 = pneg %p58
      $region30: #{node_update_forward.7} parent=23 // pred_check_branch
        %194 = sbr.rel (%p192) target = $region32
      $region31: #{node_update_forward.7} parent=23 // pred_region
        %s195 = smul.u32 16, %s12
        %p196 = scmp.lt.s32.totalorder %s195, 63
        %s197 = scalar_select %p196, %s195, 63
        %s198 = smul.addr %s197, 8
        %s199 = scalar_lea.vmem %s1, %s198
        %s200 = smul.u32 16, %s12
      $region32: #{node_update_forward.7} parent=23 // pred_fallthru
        _
    $region24: #{node_update_forward.7} parent=5 // pred_fallthru
      _
    %p201 = scmp.le.s32.totalorder 1, %s12
    %p202 = scmp.lt.s32.totalorder %s12, 5
    %p203 = pnand %p201, %p202
    %p204 = pneg %p203
    // Predicated region
    $region33: #{node_update_forward.7} parent=5 // pred_check
      _
    $region34: #{node_update_forward.7} parent=5 // pred_check_branch
      %206 = sbr.rel (%p203) target = $region36
    $region35: #{node_update_forward.7} parent=5 // pred_region
      %s207 = ssub.s32 %s12, 1
      %s208 = smul.u32 16, %s17
      %p209 = scmp.lt.s32.totalorder %s208, 63
      %s210 = scalar_select %p209, %s208, 63
      %s211 = smul.addr %s210, 8
      %s212 = scalar_lea.vmem %s0, %s211
      %p213 = pneg %p38
      %p214 = pneg %p35
      %s215 = smul.u32 16, %s17
      %p216 = scmp.lt.s32.totalorder %s215, 63
      %s217 = scalar_select %p216, %s215, 63
      %s218 = smul.addr %s217, 8
      %s219 = scalar_lea.vmem %s1, %s218
      %p220 = pneg %p64
      %p221 = pneg %p61
      %p222 = pneg %p85
      %p223 = pneg %p82
      %p224 = pneg %p106
      %p225 = pneg %p103
      %p226 = pneg %p132
      %p227 = pneg %p129
      %s228 = smul.u32 16, %s17
      %p229 = scmp.lt.s32.totalorder %s228, 63
      %s230 = scalar_select %p229, %s228, 63
      %s231 = smul.addr %s230, 8
      %s232 = scalar_lea.vmem %s4, %s231
      %p233 = pneg %p158
      %p234 = pneg %p155
      %s235 = smul.u32 16, %s17
      %p236 = scmp.lt.s32.totalorder %s235, 63
      %s237 = scalar_select %p236, %s235, 63
      %s238 = smul.addr %s237, 2
      %s239 = smul.addr %s238, 8
      %s240 = scalar_lea.vmem %s5, %s239
      %s241 = smul.u32 16, %s17
      %p242 = scmp.lt.s32.totalorder %s241, 63
      %s243 = scalar_select %p242, %s241, 63
      %s244 = smul.addr %s243, 8
      %s245 = scalar_lea.vmem %s0, %s244
      %s246 = smul.u32 16, %s17
      %s247 = smul.u32 16, %s17
      %p248 = scmp.lt.s32.totalorder %s247, 63
      %s249 = scalar_select %p248, %s247, 63
      %s250 = smul.addr %s249, 8
      %s251 = scalar_lea.vmem %s1, %s250
      %s252 = smul.u32 16, %s17
      %s253 = smul.u32 16, %s17
      %p254 = scmp.lt.s32.totalorder %s253, 63
      %s255 = scalar_select %p254, %s253, 63
      %s256 = smul.addr %s255, 8
      %s257 = scalar_lea.vmem %s4, %s256
      %s258 = smul.u32 16, %s17
      %s259 = smul.u32 16, %s17
      %p260 = scmp.lt.s32.totalorder %s259, 63
      %s261 = scalar_select %p260, %s259, 63
      %s262 = smul.addr %s261, 2
      %s263 = smul.addr %s262, 8
      %s264 = scalar_lea.vmem %s5, %s263
      %s265 = smul.u32 16, %s17
      %v266 = vld [vmem:[%s245] sm:$0xff]
      %v267 = vld [vmem:[%s245 + $0x8] sm:$0xff]
      %v268 = vld [vmem:[%s245 + $0x10] sm:$0xff]
      %v269 = vld [vmem:[%s245 + $0x18] sm:$0xff]
      %v270 = vld [vmem:[%s245 + $0x20] sm:$0xff]
      %v271 = vld [vmem:[%s245 + $0x28] sm:$0xff]
      %v272 = vld [vmem:[%s245 + $0x30] sm:$0xff]
      %v273 = vld [vmem:[%s245 + $0x38] sm:$0xff]
      %v274 = vld [vmem:[%s245 + $0x40] sm:$0xff]
      %v275 = vld [vmem:[%s245 + $0x48] sm:$0xff]
      %v276 = vld [vmem:[%s245 + $0x50] sm:$0xff]
      %v277 = vld [vmem:[%s245 + $0x58] sm:$0xff]
      %v278 = vld [vmem:[%s245 + $0x60] sm:$0xff]
      %v279 = vld [vmem:[%s245 + $0x68] sm:$0xff]
      %v280 = vld [vmem:[%s245 + $0x70] sm:$0xff]
      %v281 = vld [vmem:[%s245 + $0x78] sm:$0xff]
      %v282 = vld [vmem:[%s2] sm:$0xff]
      %v283 = vld [vmem:[%s2 + $0x8] sm:$0xff]
      %v284 = vld [vmem:[%s2 + $0x10] sm:$0xff]
      %v285 = vld [vmem:[%s2 + $0x18] sm:$0xff]
      %v286 = vld [vmem:[%s2 + $0x20] sm:$0xff]
      %v287 = vld [vmem:[%s2 + $0x28] sm:$0xff]
      %v288 = vld [vmem:[%s2 + $0x30] sm:$0xff]
      %v289 = vld [vmem:[%s2 + $0x38] sm:$0xff]
      %v290 = vld [vmem:[%s2 + $0x40] sm:$0xff]
      %v291 = vld [vmem:[%s2 + $0x48] sm:$0xff]
      %v292 = vld [vmem:[%s2 + $0x50] sm:$0xff]
      %v293 = vld [vmem:[%s2 + $0x58] sm:$0xff]
      %v294 = vld [vmem:[%s2 + $0x60] sm:$0xff]
      %v295 = vld [vmem:[%s2 + $0x68] sm:$0xff]
      %v296 = vld [vmem:[%s2 + $0x70] sm:$0xff]
      %v297 = vld [vmem:[%s2 + $0x78] sm:$0xff]
      %v298 = vld [vmem:[%s3] sm:$0x1]
      %v300 = vlaneseq
      %v301 = vshrl.u32 %v300, 7
      %v302 = vsub.s32 0, %v301
      %v303 = vrot.slane %v298, %v302
      %305 = vmatprep.subr.mxu0 0.0
      %306 = vmatpush1.msra.mxu0 %v297
      %307 = vmatprep.subr.mxu0 0.0
      %308 = vmatpush1.msra.mxu0 %v296
      %309 = vmatprep.subr.mxu0 0.0
      %310 = vmatpush1.msra.mxu0 %v295
      %311 = vmatprep.subr.mxu0 0.0
      %312 = vmatpush1.msra.mxu0 %v294
      %313 = vmatprep.subr.mxu0 0.0
      %314 = vmatpush1.msra.mxu0 %v293
      %315 = vmatprep.subr.mxu0 0.0
      %316 = vmatpush1.msra.mxu0 %v292
      %317 = vmatprep.subr.mxu0 0.0
      %318 = vmatpush1.msra.mxu0 %v291
      %319 = vmatprep.subr.mxu0 0.0
      %320 = vmatpush1.msra.mxu0 %v290
      %321 = vmatprep.subr.mxu0 0.0
      %322 = vmatpush1.msra.mxu0 %v289
      %323 = vmatprep.subr.mxu0 0.0
      %324 = vmatpush1.msra.mxu0 %v288
      %325 = vmatprep.subr.mxu0 0.0
      %326 = vmatpush1.msra.mxu0 %v287
      %327 = vmatprep.subr.mxu0 0.0
      %328 = vmatpush1.msra.mxu0 %v286
      %329 = vmatprep.subr.mxu0 0.0
      %330 = vmatpush1.msra.mxu0 %v285
      %331 = vmatprep.subr.mxu0 0.0
      %332 = vmatpush1.msra.mxu0 %v284
      %333 = vmatprep.subr.mxu0 0.0
      %334 = vmatpush1.msra.mxu0 %v283
      %335 = vmatprep.subr.mxu0 0.0
      %336 = vmatpush1.msra.mxu0 %v282
      %337 = vmatprep.subr.mxu0 0.0
      %338 = vmatpush2.msra.mxu0 0.0
      %339 = vmatprep.subr.mxu0 0.0
      %340 = vmatpush2.msra.mxu0 0.0
      %341 = vmatprep.subr.mxu0 0.0
      %342 = vmatpush2.msra.mxu0 0.0
      %343 = vmatprep.subr.mxu0 0.0
      %344 = vmatpush2.msra.mxu0 0.0
      %345 = vmatprep.subr.mxu0 0.0
      %346 = vmatpush2.msra.mxu0 0.0
      %347 = vmatprep.subr.mxu0 0.0
      %348 = vmatpush2.msra.mxu0 0.0
      %349 = vmatprep.subr.mxu0 0.0
      %350 = vmatpush2.msra.mxu0 0.0
      %351 = vmatprep.subr.mxu0 0.0
      %352 = vmatpush2.msra.mxu0 0.0
      %353 = vmatprep.subr.mxu0 0.0
      %354 = vmatpush2.msra.mxu0 0.0
      %355 = vmatprep.subr.mxu0 0.0
      %356 = vmatpush2.msra.mxu0 0.0
      %357 = vmatprep.subr.mxu0 0.0
      %358 = vmatpush2.msra.mxu0 0.0
      %359 = vmatprep.subr.mxu0 0.0
      %360 = vmatpush2.msra.mxu0 0.0
      %361 = vmatprep.subr.mxu0 0.0
      %362 = vmatpush2.msra.mxu0 0.0
      %363 = vmatprep.subr.mxu0 0.0
      %364 = vmatpush2.msra.mxu0 0.0
      %365 = vmatprep.subr.mxu0 0.0
      %366 = vmatpush2.msra.mxu0 0.0
      %367 = vmatprep.subr.mxu0 0.0
      %368 = vmatpush2.msra.mxu0 0.0
      %369 = vmatprep.mubr.f32.mxu0 0.0
      %370 = vmatmul.mubr.f32.gmra.mxu0 %v266
      %v371 = vpop.f32.mrf.mxu0
      %v372 = vadd.f32 %v303, %v371
      %v373 = vpop.f32.mrf.mxu0
      %374 = vmatprep.mubr.f32.mxu0 0.0
      %375 = vmatmul.mubr.f32.gmra.mxu0 %v267
      %v376 = vpop.f32.mrf.mxu0
      %v377 = vadd.f32 %v303, %v376
      %v378 = vpop.f32.mrf.mxu0
      %379 = vmatprep.mubr.f32.mxu0 0.0
      %380 = vmatmul.mubr.f32.gmra.mxu0 %v268
      %v381 = vpop.f32.mrf.mxu0
      %v382 = vadd.f32 %v303, %v381
      %v383 = vpop.f32.mrf.mxu0
      %384 = vmatprep.mubr.f32.mxu0 0.0
      %385 = vmatmul.mubr.f32.gmra.mxu0 %v269
      %v386 = vpop.f32.mrf.mxu0
      %v387 = vadd.f32 %v303, %v386
      %v388 = vpop.f32.mrf.mxu0
      %389 = vmatprep.mubr.f32.mxu0 0.0
      %390 = vmatmul.mubr.f32.gmra.mxu0 %v270
      %v391 = vpop.f32.mrf.mxu0
      %v392 = vadd.f32 %v303, %v391
      %v393 = vpop.f32.mrf.mxu0
      %394 = vmatprep.mubr.f32.mxu0 0.0
      %395 = vmatmul.mubr.f32.gmra.mxu0 %v271
      %v396 = vpop.f32.mrf.mxu0
      %v397 = vadd.f32 %v303, %v396
      %v398 = vpop.f32.mrf.mxu0
      %399 = vmatprep.mubr.f32.mxu0 0.0
      %400 = vmatmul.mubr.f32.gmra.mxu0 %v272
      %v401 = vpop.f32.mrf.mxu0
      %v402 = vadd.f32 %v303, %v401
      %v403 = vpop.f32.mrf.mxu0
      %404 = vmatprep.mubr.f32.mxu0 0.0
      %405 = vmatmul.mubr.f32.gmra.mxu0 %v273
      %v406 = vpop.f32.mrf.mxu0
      %v407 = vadd.f32 %v303, %v406
      %v408 = vpop.f32.mrf.mxu0
      %409 = vmatprep.mubr.f32.mxu0 0.0
      %410 = vmatmul.mubr.f32.gmra.mxu0 %v274
      %v411 = vpop.f32.mrf.mxu0
      %v412 = vadd.f32 %v303, %v411
      %v413 = vpop.f32.mrf.mxu0
      %414 = vmatprep.mubr.f32.mxu0 0.0
      %415 = vmatmul.mubr.f32.gmra.mxu0 %v275
      %v416 = vpop.f32.mrf.mxu0
      %v417 = vadd.f32 %v303, %v416
      %v418 = vpop.f32.mrf.mxu0
      %419 = vmatprep.mubr.f32.mxu0 0.0
      %420 = vmatmul.mubr.f32.gmra.mxu0 %v276
      %v421 = vpop.f32.mrf.mxu0
      %v422 = vadd.f32 %v303, %v421
      %v423 = vpop.f32.mrf.mxu0
      %424 = vmatprep.mubr.f32.mxu0 0.0
      %425 = vmatmul.mubr.f32.gmra.mxu0 %v277
      %v426 = vpop.f32.mrf.mxu0
      %v427 = vadd.f32 %v303, %v426
      %v428 = vpop.f32.mrf.mxu0
      %429 = vmatprep.mubr.f32.mxu0 0.0
      %430 = vmatmul.mubr.f32.gmra.mxu0 %v278
      %v431 = vpop.f32.mrf.mxu0
      %v432 = vadd.f32 %v303, %v431
      %v433 = vpop.f32.mrf.mxu0
      %434 = vmatprep.mubr.f32.mxu0 0.0
      %435 = vmatmul.mubr.f32.gmra.mxu0 %v279
      %v436 = vpop.f32.mrf.mxu0
      %v437 = vadd.f32 %v303, %v436
      %v438 = vpop.f32.mrf.mxu0
      %439 = vmatprep.mubr.f32.mxu0 0.0
      %440 = vmatmul.mubr.f32.gmra.mxu0 %v280
      %v441 = vpop.f32.mrf.mxu0
      %v442 = vadd.f32 %v303, %v441
      %v443 = vpop.f32.mrf.mxu0
      %444 = vmatprep.mubr.f32.mxu0 0.0
      %445 = vmatmul.mubr.f32.gmra.mxu0 %v281
      %v446 = vpop.f32.mrf.mxu0
      %v447 = vadd.f32 %v303, %v446
      %v448 = vpop.f32.mrf.mxu0
      %449 = vdwg.mxu0
      %v450 = vxor.u32 %v372, 2147483648
      %v451 = vxor.u32 %v377, 2147483648
      %v452 = vxor.u32 %v382, 2147483648
      %v453 = vxor.u32 %v387, 2147483648
      %v454 = vxor.u32 %v392, 2147483648
      %v455 = vxor.u32 %v397, 2147483648
      %v456 = vxor.u32 %v402, 2147483648
      %v457 = vxor.u32 %v407, 2147483648
      %v458 = vxor.u32 %v412, 2147483648
      %v459 = vxor.u32 %v417, 2147483648
      %v460 = vxor.u32 %v422, 2147483648
      %v461 = vxor.u32 %v427, 2147483648
      %v462 = vxor.u32 %v432, 2147483648
      %v463 = vxor.u32 %v437, 2147483648
      %v464 = vxor.u32 %v442, 2147483648
      %v465 = vxor.u32 %v447, 2147483648
      %v466 = vmul.f32 %v450, 1.442695
      %v467 = vpow.pop %v466
      %v468 = vmul.f32 %v451, 1.442695
      %v469 = vpow.pop %v468
      %v470 = vmul.f32 %v452, 1.442695
      %v471 = vpow.pop %v470
      %v472 = vmul.f32 %v453, 1.442695
      %v473 = vpow.pop %v472
      %v474 = vmul.f32 %v454, 1.442695
      %v475 = vpow.pop %v474
      %v476 = vmul.f32 %v455, 1.442695
      %v477 = vpow.pop %v476
      %v478 = vmul.f32 %v456, 1.442695
      %v479 = vpow.pop %v478
      %v480 = vmul.f32 %v457, 1.442695
      %v481 = vpow.pop %v480
      %v482 = vmul.f32 %v458, 1.442695
      %v483 = vpow.pop %v482
      %v484 = vmul.f32 %v459, 1.442695
      %v485 = vpow.pop %v484
      %v486 = vmul.f32 %v460, 1.442695
      %v487 = vpow.pop %v486
      %v488 = vmul.f32 %v461, 1.442695
      %v489 = vpow.pop %v488
      %v490 = vmul.f32 %v462, 1.442695
      %v491 = vpow.pop %v490
      %v492 = vmul.f32 %v463, 1.442695
      %v493 = vpow.pop %v492
      %v494 = vmul.f32 %v464, 1.442695
      %v495 = vpow.pop %v494
      %v496 = vmul.f32 %v465, 1.442695
      %v497 = vpow.pop %v496
      %v498 = vadd.f32 %v467, 1.0
      %v499 = vadd.f32 %v469, 1.0
      %v500 = vadd.f32 %v471, 1.0
      %v501 = vadd.f32 %v473, 1.0
      %v502 = vadd.f32 %v475, 1.0
      %v503 = vadd.f32 %v477, 1.0
      %v504 = vadd.f32 %v479, 1.0
      %v505 = vadd.f32 %v481, 1.0
      %v506 = vadd.f32 %v483, 1.0
      %v507 = vadd.f32 %v485, 1.0
      %v508 = vadd.f32 %v487, 1.0
      %v509 = vadd.f32 %v489, 1.0
      %v510 = vadd.f32 %v491, 1.0
      %v511 = vadd.f32 %v493, 1.0
      %v512 = vadd.f32 %v495, 1.0
      %v513 = vadd.f32 %v497, 1.0
      %v514 = vrcp.pop %v498
      %v515 = vmul.f32 1.0, %v514
      %v516 = vrcp.pop %v499
      %v517 = vmul.f32 1.0, %v516
      %v518 = vrcp.pop %v500
      %v519 = vmul.f32 1.0, %v518
      %v520 = vrcp.pop %v501
      %v521 = vmul.f32 1.0, %v520
      %v522 = vrcp.pop %v502
      %v523 = vmul.f32 1.0, %v522
      %v524 = vrcp.pop %v503
      %v525 = vmul.f32 1.0, %v524
      %v526 = vrcp.pop %v504
      %v527 = vmul.f32 1.0, %v526
      %v528 = vrcp.pop %v505
      %v529 = vmul.f32 1.0, %v528
      %v530 = vrcp.pop %v506
      %v531 = vmul.f32 1.0, %v530
      %v532 = vrcp.pop %v507
      %v533 = vmul.f32 1.0, %v532
      %v534 = vrcp.pop %v508
      %v535 = vmul.f32 1.0, %v534
      %v536 = vrcp.pop %v509
      %v537 = vmul.f32 1.0, %v536
      %v538 = vrcp.pop %v510
      %v539 = vmul.f32 1.0, %v538
      %v540 = vrcp.pop %v511
      %v541 = vmul.f32 1.0, %v540
      %v542 = vrcp.pop %v512
      %v543 = vmul.f32 1.0, %v542
      %v544 = vrcp.pop %v513
      %v545 = vmul.f32 1.0, %v544
      %546 = vst [vmem:[%s257] sm:$0xff] %v372
      %547 = vst [vmem:[%s257 + $0x8] sm:$0xff] %v377
      %548 = vst [vmem:[%s257 + $0x10] sm:$0xff] %v382
      %549 = vst [vmem:[%s257 + $0x18] sm:$0xff] %v387
      %550 = vst [vmem:[%s257 + $0x20] sm:$0xff] %v392
      %551 = vst [vmem:[%s257 + $0x28] sm:$0xff] %v397
      %552 = vst [vmem:[%s257 + $0x30] sm:$0xff] %v402
      %553 = vst [vmem:[%s257 + $0x38] sm:$0xff] %v407
      %554 = vst [vmem:[%s257 + $0x40] sm:$0xff] %v412
      %555 = vst [vmem:[%s257 + $0x48] sm:$0xff] %v417
      %556 = vst [vmem:[%s257 + $0x50] sm:$0xff] %v422
      %557 = vst [vmem:[%s257 + $0x58] sm:$0xff] %v427
      %558 = vst [vmem:[%s257 + $0x60] sm:$0xff] %v432
      %559 = vst [vmem:[%s257 + $0x68] sm:$0xff] %v437
      %560 = vst [vmem:[%s257 + $0x70] sm:$0xff] %v442
      %561 = vst [vmem:[%s257 + $0x78] sm:$0xff] %v447
      %v562 = vld [vmem:[%s251] sm:$0xff]
      %v563 = vld [vmem:[%s251 + $0x8] sm:$0xff]
      %v564 = vld [vmem:[%s251 + $0x10] sm:$0xff]
      %v565 = vld [vmem:[%s251 + $0x18] sm:$0xff]
      %v566 = vld [vmem:[%s251 + $0x20] sm:$0xff]
      %v567 = vld [vmem:[%s251 + $0x28] sm:$0xff]
      %v568 = vld [vmem:[%s251 + $0x30] sm:$0xff]
      %v569 = vld [vmem:[%s251 + $0x38] sm:$0xff]
      %v570 = vld [vmem:[%s251 + $0x40] sm:$0xff]
      %v571 = vld [vmem:[%s251 + $0x48] sm:$0xff]
      %v572 = vld [vmem:[%s251 + $0x50] sm:$0xff]
      %v573 = vld [vmem:[%s251 + $0x58] sm:$0xff]
      %v574 = vld [vmem:[%s251 + $0x60] sm:$0xff]
      %v575 = vld [vmem:[%s251 + $0x68] sm:$0xff]
      %v576 = vld [vmem:[%s251 + $0x70] sm:$0xff]
      %v577 = vld [vmem:[%s251 + $0x78] sm:$0xff]
      %v578 = vmul.f32 %v515, %v562
      %v579 = vmul.f32 %v517, %v563
      %v580 = vmul.f32 %v519, %v564
      %v581 = vmul.f32 %v521, %v565
      %v582 = vmul.f32 %v523, %v566
      %v583 = vmul.f32 %v525, %v567
      %v584 = vmul.f32 %v527, %v568
      %v585 = vmul.f32 %v529, %v569
      %v586 = vmul.f32 %v531, %v570
      %v587 = vmul.f32 %v533, %v571
      %v588 = vmul.f32 %v535, %v572
      %v589 = vmul.f32 %v537, %v573
      %v590 = vmul.f32 %v539, %v574
      %v591 = vmul.f32 %v541, %v575
      %v592 = vmul.f32 %v543, %v576
      %v593 = vmul.f32 %v545, %v577
      %594 = vst [vmem:[%s264] sm:$0xff] %v578
      %595 = vst [vmem:[%s264 + $0x10] sm:$0xff] %v579
      %596 = vst [vmem:[%s264 + $0x20] sm:$0xff] %v580
      %597 = vst [vmem:[%s264 + $0x30] sm:$0xff] %v581
      %598 = vst [vmem:[%s264 + $0x40] sm:$0xff] %v582
      %599 = vst [vmem:[%s264 + $0x50] sm:$0xff] %v583
      %600 = vst [vmem:[%s264 + $0x60] sm:$0xff] %v584
      %601 = vst [vmem:[%s264 + $0x70] sm:$0xff] %v585
      %602 = vst [vmem:[%s264 + $0x80] sm:$0xff] %v586
      %603 = vst [vmem:[%s264 + $0x90] sm:$0xff] %v587
      %604 = vst [vmem:[%s264 + $0xa0] sm:$0xff] %v588
      %605 = vst [vmem:[%s264 + $0xb0] sm:$0xff] %v589
      %606 = vst [vmem:[%s264 + $0xc0] sm:$0xff] %v590
      %607 = vst [vmem:[%s264 + $0xd0] sm:$0xff] %v591
      %608 = vst [vmem:[%s264 + $0xe0] sm:$0xff] %v592
      %609 = vst [vmem:[%s264 + $0xf0] sm:$0xff] %v593
      %610 = vst [vmem:[%s264 + $0x8] sm:$0xff] %v515
      %611 = vst [vmem:[%s264 + $0x18] sm:$0xff] %v517
      %612 = vst [vmem:[%s264 + $0x28] sm:$0xff] %v519
      %613 = vst [vmem:[%s264 + $0x38] sm:$0xff] %v521
      %614 = vst [vmem:[%s264 + $0x48] sm:$0xff] %v523
      %615 = vst [vmem:[%s264 + $0x58] sm:$0xff] %v525
      %616 = vst [vmem:[%s264 + $0x68] sm:$0xff] %v527
      %617 = vst [vmem:[%s264 + $0x78] sm:$0xff] %v529
      %618 = vst [vmem:[%s264 + $0x88] sm:$0xff] %v531
      %619 = vst [vmem:[%s264 + $0x98] sm:$0xff] %v533
      %620 = vst [vmem:[%s264 + $0xa8] sm:$0xff] %v535
      %621 = vst [vmem:[%s264 + $0xb8] sm:$0xff] %v537
      %622 = vst [vmem:[%s264 + $0xc8] sm:$0xff] %v539
      %623 = vst [vmem:[%s264 + $0xd8] sm:$0xff] %v541
      %624 = vst [vmem:[%s264 + $0xe8] sm:$0xff] %v543
      %625 = vst [vmem:[%s264 + $0xf8] sm:$0xff] %v545
      %s626 = smul.u32 16, %s17
      %p627 = scmp.lt.s32.totalorder %s626, 63
      %s628 = scalar_select %p627, %s626, 63
      %s629 = smul.addr %s628, 8
      %s630 = scalar_lea.vmem %s4, %s629
      %s631 = smul.u32 16, %s17
      %p632 = scmp.lt.s32.totalorder %s631, 63
      %s633 = scalar_select %p632, %s631, 63
      %s634 = smul.addr %s633, 2
      %s635 = smul.addr %s634, 8
      %s636 = scalar_lea.vmem %s5, %s635
      // Predicated region
      $region37: #{node_update_forward.7} parent=35 // pred_check
        %p637 = pneg %p129
      $region38: #{node_update_forward.7} parent=35 // pred_check_branch
        %639 = sbr.rel (%p637) target = $region40
      $region39: #{node_update_forward.7} parent=35 // pred_region
        %s640 = smul.u32 16, %s17
      $region40: #{node_update_forward.7} parent=35 // pred_fallthru
        _
      // Predicated region
      $region41: #{node_update_forward.7} parent=35 // pred_check
        %p641 = pneg %p155
      $region42: #{node_update_forward.7} parent=35 // pred_check_branch
        %643 = sbr.rel (%p641) target = $region44
      $region43: #{node_update_forward.7} parent=35 // pred_region
        %s644 = smul.u32 16, %s17
      $region44: #{node_update_forward.7} parent=35 // pred_fallthru
        _
    $region36: #{node_update_forward.7} parent=5 // pred_fallthru
      _
    %p645 = scmp.le.s32.totalorder 2, %s12
    // Predicated region
    $region45: #{node_update_forward.7} parent=5 // pred_check
      %p646 = pneg %p645
    $region46: #{node_update_forward.7} parent=5 // pred_check_branch
      %648 = sbr.rel (%p646) target = $region48
    $region47: #{node_update_forward.7} parent=5 // pred_region
      %s649 = ssub.s32 %s12, 2
      // Predicated region
      $region49: #{node_update_forward.7} parent=47 // pred_check
        %p650 = pneg %p135
      $region50: #{node_update_forward.7} parent=47 // pred_check_branch
        %652 = sbr.rel (%p650) target = $region52
      $region51: #{node_update_forward.7} parent=47 // pred_region
        %s653 = smul.u32 16, %s18
        %p654 = scmp.lt.s32.totalorder %s653, 63
        %s655 = scalar_select %p654, %s653, 63
        %s656 = smul.addr %s655, 8
        %s657 = scalar_lea.vmem %s4, %s656
      $region52: #{node_update_forward.7} parent=47 // pred_fallthru
        _
      // Predicated region
      $region53: #{node_update_forward.7} parent=47 // pred_check
        %p658 = pneg %p161
      $region54: #{node_update_forward.7} parent=47 // pred_check_branch
        %660 = sbr.rel (%p658) target = $region56
      $region55: #{node_update_forward.7} parent=47 // pred_region
        %s661 = smul.u32 16, %s18
        %p662 = scmp.lt.s32.totalorder %s661, 63
        %s663 = scalar_select %p662, %s661, 63
        %s664 = smul.addr %s663, 2
        %s665 = smul.addr %s664, 8
        %s666 = scalar_lea.vmem %s5, %s665
      $region56: #{node_update_forward.7} parent=47 // pred_fallthru
        _
    $region48: #{node_update_forward.7} parent=5 // pred_fallthru
      _
  $region6: #{node_update_forward.7} parent=0 // loop_footer
    %s16 = sadd.s32 1, %s12
  $region7: #{node_update_forward.7} parent=0 // loop_footer_branch
    %11 = sbr.rel target = $region3
  $region8: #{node_update_forward.7} parent=0 // loop_exit
    _

// kernel: node_update_forward.8
$region0: #{node_update_forward.8}
  #allocation0 [shape = 'u32[]', space=smem, size = 0x4, offset = 0x4, fixed_abs, tag = 'smem constant byte address 0x4 - core index']
  #allocation1 [shape = 'u32[144,128]{1,0:T(1,128)}', space=vmem, size = 0x12000, scoped, tag = 'internal scratch']
  %s0 = inlined_call_operand.vmem [shape: f32[256,256], index: 0, kind: input, shape index: {}]
  %s1 = inlined_call_operand.vmem [shape: f32[256,256], index: 1, kind: input, shape index: {}]
  %s2 = inlined_call_operand.vmem [shape: f32[256,128], index: 2, kind: output, shape index: {0}]
  %s3 = inlined_call_operand.vmem [shape: f32[1,128], index: 3, kind: output, shape index: {1}]
  %s4 = inlined_call_operand.vmem [shape: f32[1,128], index: 4, kind: output, shape index: {2}]
  %5 = xla_tuple %s2, %s3, %s4
  %s6 = sld [smem:[#allocation0]]
  $region61: #{node_update_forward.8} parent=0
    _
  %s8 = ssub.s32 1, %s6
  %s9 = scalar_select 0, %s8, %s6
  loop: start=0, step=1, limit=4
  $region2: #{node_update_forward.8} parent=0 // loop_pre_header
    _
  $region3: #{node_update_forward.8} parent=0 // loop_header
    %s11 = sphi 0, %s15
    %p12 = scmp.ge.s32.totalorder %s11, 4
    %s21 = sphi 0, %s23
    %s24 = sphi 0, %s21
    %s25 = sphi 0, %s24
    %s41 = sphi 0, %s25
    %s47 = sphi 0, %s49
    %s50 = sphi 0, %s47
    %s51 = sphi 0, %s50
    %s67 = sphi 0, %s51
    %s73 = sphi 0, %s75
    %s76 = sphi 0, %s73
    %s77 = sphi 0, %s76
    %s93 = sphi 0, %s77
    %s97 = sphi 0, %s97
    %s99 = sphi 0, %s97
    %s100 = sphi 0, %s99
    %s114 = sphi 0, %s100
    %s118 = sphi 0, %s118
    %s120 = sphi 0, %s118
    %s121 = sphi 0, %s120
    %s135 = sphi 0, %s121
  $region4: #{node_update_forward.8} parent=0 // loop_header_branch
    %14 = sbr.rel (%p12) target = $region8
  $region5: #{node_update_forward.8} parent=0 // loop_body
    %s16 = ssub.s32 %s11, 1
    %s17 = ssub.s32 %s11, 2
    %s18 = sadd.s32 %s11, 1
    %s19 = ssub.s32 %s11, %s18
    %p20 = scmp.eq.s32.totalorder %s19, 0
    %s22 = sadd.s32 %s21, 1
    %s23 = scalar_select %p20, %s21, %s22
    %p26 = pneg %p20
    %p27 = scmp.eq.s32.totalorder %s11, 1
    %p28 = por %p26, %p27
    %p29 = scmp.ne.s32.totalorder %s21, %s24
    %p30 = scmp.eq.s32.totalorder %s11, 0
    %p31 = por %p29, %p30
    %p32 = scmp.ne.s32.totalorder %s21, %s24
    %p33 = scmp.eq.s32.totalorder %s16, 1
    %p34 = por %p32, %p33
    %p35 = scmp.ne.s32.totalorder %s24, %s25
    %p36 = scmp.eq.s32.totalorder %s16, 0
    %p37 = por %p35, %p36
    %p38 = scmp.ne.s32.totalorder %s24, %s25
    %p39 = scmp.eq.s32.totalorder %s17, 1
    %p40 = por %p38, %p39
    %p42 = scmp.ne.s32.totalorder %s25, %s41
    %p43 = scmp.eq.s32.totalorder %s17, 0
    %p44 = por %p42, %p43
    %s45 = ssub.s32 %s11, %s18
    %p46 = scmp.eq.s32.totalorder %s45, 0
    %s48 = sadd.s32 %s47, 1
    %s49 = scalar_select %p46, %s47, %s48
    %p52 = pneg %p46
    %p53 = scmp.eq.s32.totalorder %s11, 1
    %p54 = por %p52, %p53
    %p55 = scmp.ne.s32.totalorder %s47, %s50
    %p56 = scmp.eq.s32.totalorder %s11, 0
    %p57 = por %p55, %p56
    %p58 = scmp.ne.s32.totalorder %s47, %s50
    %p59 = scmp.eq.s32.totalorder %s16, 1
    %p60 = por %p58, %p59
    %p61 = scmp.ne.s32.totalorder %s50, %s51
    %p62 = scmp.eq.s32.totalorder %s16, 0
    %p63 = por %p61, %p62
    %p64 = scmp.ne.s32.totalorder %s50, %s51
    %p65 = scmp.eq.s32.totalorder %s17, 1
    %p66 = por %p64, %p65
    %p68 = scmp.ne.s32.totalorder %s51, %s67
    %p69 = scmp.eq.s32.totalorder %s17, 0
    %p70 = por %p68, %p69
    %s71 = ssub.s32 %s11, %s18
    %p72 = scmp.eq.s32.totalorder %s71, 0
    %s74 = sadd.s32 %s73, 1
    %s75 = scalar_select %p72, %s73, %s74
    %p78 = pneg %p72
    %p79 = scmp.eq.s32.totalorder %s11, 1
    %p80 = por %p78, %p79
    %p81 = scmp.ne.s32.totalorder %s73, %s76
    %p82 = scmp.eq.s32.totalorder %s11, 0
    %p83 = por %p81, %p82
    %p84 = scmp.ne.s32.totalorder %s73, %s76
    %p85 = scmp.eq.s32.totalorder %s16, 1
    %p86 = por %p84, %p85
    %p87 = scmp.ne.s32.totalorder %s76, %s77
    %p88 = scmp.eq.s32.totalorder %s16, 0
    %p89 = por %p87, %p88
    %p90 = scmp.ne.s32.totalorder %s76, %s77
    %p91 = scmp.eq.s32.totalorder %s17, 1
    %p92 = por %p90, %p91
    %p94 = scmp.ne.s32.totalorder %s77, %s93
    %p95 = scmp.eq.s32.totalorder %s17, 0
    %p96 = por %p94, %p95
    %s98 = sadd.s32 %s97, 1
    %p101 = scmp.eq.s32.totalorder %s11, 1
    %p102 = scmp.ne.s32.totalorder %s97, %s99
    %p103 = scmp.eq.s32.totalorder %s11, 0
    %p104 = por %p102, %p103
    %p105 = scmp.ne.s32.totalorder %s97, %s99
    %p106 = scmp.eq.s32.totalorder %s16, 1
    %p107 = por %p105, %p106
    %p108 = scmp.ne.s32.totalorder %s99, %s100
    %p109 = scmp.eq.s32.totalorder %s16, 0
    %p110 = por %p108, %p109
    %p111 = scmp.ne.s32.totalorder %s99, %s100
    %p112 = scmp.eq.s32.totalorder %s17, 1
    %p113 = por %p111, %p112
    %p115 = scmp.ne.s32.totalorder %s100, %s114
    %p116 = scmp.eq.s32.totalorder %s17, 0
    %p117 = por %p115, %p116
    %s119 = sadd.s32 %s118, 1
    %p122 = scmp.eq.s32.totalorder %s11, 1
    %p123 = scmp.ne.s32.totalorder %s118, %s120
    %p124 = scmp.eq.s32.totalorder %s11, 0
    %p125 = por %p123, %p124
    %p126 = scmp.ne.s32.totalorder %s118, %s120
    %p127 = scmp.eq.s32.totalorder %s16, 1
    %p128 = por %p126, %p127
    %p129 = scmp.ne.s32.totalorder %s120, %s121
    %p130 = scmp.eq.s32.totalorder %s16, 0
    %p131 = por %p129, %p130
    %p132 = scmp.ne.s32.totalorder %s120, %s121
    %p133 = scmp.eq.s32.totalorder %s17, 1
    %p134 = por %p132, %p133
    %p136 = scmp.ne.s32.totalorder %s121, %s135
    %p137 = scmp.eq.s32.totalorder %s17, 0
    %p138 = por %p136, %p137
    %p139 = scmp.le.s32.totalorder 1, %s11
    %p140 = scmp.lt.s32.totalorder %s11, 3
    %p141 = pnand %p139, %p140
    %p142 = pneg %p141
    // Predicated region
    $region9: #{node_update_forward.8} parent=5 // pred_check
      _
    $region10: #{node_update_forward.8} parent=5 // pred_check_branch
      %144 = sbr.rel (%p141) target = $region12
    $region11: #{node_update_forward.8} parent=5 // pred_region
      %s145 = ssub.s32 %s11, 1
    $region12: #{node_update_forward.8} parent=5 // pred_fallthru
      _
    %p146 = scmp.lt.s32.totalorder %s11, 2
    // Predicated region
    $region13: #{node_update_forward.8} parent=5 // pred_check
      %p147 = pneg %p146
    $region14: #{node_update_forward.8} parent=5 // pred_check_branch
      %149 = sbr.rel (%p147) target = $region16
    $region15: #{node_update_forward.8} parent=5 // pred_region
      // Predicated region
      $region17: #{node_update_forward.8} parent=15 // pred_check
        %p150 = pneg %p31
      $region18: #{node_update_forward.8} parent=15 // pred_check_branch
        %152 = sbr.rel (%p150) target = $region20
      $region19: #{node_update_forward.8} parent=15 // pred_region
        %s153 = smul.u32 16, %s11
        %p154 = scmp.lt.s32.totalorder %s153, 31
        %s155 = scalar_select %p154, %s153, 31
        %s156 = smul.addr %s155, 2
        %s157 = smul.addr %s156, 8
        %s158 = scalar_lea.vmem %s0, %s157
        %s159 = smul.u32 16, %s11
      $region20: #{node_update_forward.8} parent=15 // pred_fallthru
        _
      // Predicated region
      $region21: #{node_update_forward.8} parent=15 // pred_check
        %p160 = pneg %p57
      $region22: #{node_update_forward.8} parent=15 // pred_check_branch
        %162 = sbr.rel (%p160) target = $region24
      $region23: #{node_update_forward.8} parent=15 // pred_region
        %s163 = smul.u32 16, %s11
        %p164 = scmp.lt.s32.totalorder %s163, 31
        %s165 = scalar_select %p164, %s163, 31
        %s166 = smul.addr %s165, 2
        %s167 = smul.addr %s166, 8
        %s168 = scalar_lea.vmem %s1, %s167
        %s169 = smul.u32 16, %s11
      $region24: #{node_update_forward.8} parent=15 // pred_fallthru
        _
    $region16: #{node_update_forward.8} parent=5 // pred_fallthru
      _
    %p170 = scmp.le.s32.totalorder 1, %s11
    %p171 = scmp.lt.s32.totalorder %s11, 3
    %p172 = pnand %p170, %p171
    %p173 = pneg %p172
    // Predicated region
    $region25: #{node_update_forward.8} parent=5 // pred_check
      _
    $region26: #{node_update_forward.8} parent=5 // pred_check_branch
      %175 = sbr.rel (%p172) target = $region28
    $region27: #{node_update_forward.8} parent=5 // pred_region
      %s176 = ssub.s32 %s11, 1
      %s177 = smul.u32 16, %s16
      %p178 = scmp.lt.s32.totalorder %s177, 31
      %s179 = scalar_select %p178, %s177, 31
      %s180 = smul.addr %s179, 2
      %s181 = smul.addr %s180, 8
      %s182 = scalar_lea.vmem %s0, %s181
      %p183 = pneg %p37
      %p184 = pneg %p34
      %s185 = smul.u32 16, %s16
      %p186 = scmp.lt.s32.totalorder %s185, 31
      %s187 = scalar_select %p186, %s185, 31
      %s188 = smul.addr %s187, 2
      %s189 = smul.addr %s188, 8
      %s190 = scalar_lea.vmem %s1, %s189
      %p191 = pneg %p63
      %p192 = pneg %p60
      %p193 = pneg %p89
      %p194 = pneg %p86
      %s195 = smul.u32 16, %s16
      %p196 = scmp.lt.s32.totalorder %s195, 31
      %s197 = scalar_select %p196, %s195, 31
      %s198 = smul.addr %s197, 8
      %s199 = scalar_lea.vmem %s2, %s198
      %p200 = pneg %p110
      %p201 = pneg %p107
      %p202 = pneg %p131
      %p203 = pneg %p128
      %s204 = smul.u32 16, %s16
      %p205 = scmp.lt.s32.totalorder %s204, 31
      %s206 = scalar_select %p205, %s204, 31
      %s207 = smul.addr %s206, 2
      %s208 = smul.addr %s207, 8
      %s209 = scalar_lea.vmem %s0, %s208
      %s210 = smul.u32 16, %s16
      %s211 = smul.u32 16, %s16
      %p212 = scmp.lt.s32.totalorder %s211, 31
      %s213 = scalar_select %p212, %s211, 31
      %s214 = smul.addr %s213, 2
      %s215 = smul.addr %s214, 8
      %s216 = scalar_lea.vmem %s1, %s215
      %s217 = smul.u32 16, %s16
      %s218 = smul.u32 16, %s16
      %p219 = scmp.lt.s32.totalorder %s218, 31
      %s220 = scalar_select %p219, %s218, 31
      %s221 = smul.addr %s220, 8
      %s222 = scalar_lea.vmem %s2, %s221
      %s223 = smul.u32 16, %s16
      %v224 = vld [vmem:[%s209] sm:$0xff]
      %v225 = vld [vmem:[%s209 + $0x10] sm:$0xff]
      %v226 = vld [vmem:[%s209 + $0x20] sm:$0xff]
      %v227 = vld [vmem:[%s209 + $0x30] sm:$0xff]
      %v228 = vld [vmem:[%s209 + $0x40] sm:$0xff]
      %v229 = vld [vmem:[%s209 + $0x50] sm:$0xff]
      %v230 = vld [vmem:[%s209 + $0x60] sm:$0xff]
      %v231 = vld [vmem:[%s209 + $0x70] sm:$0xff]
      %v232 = vld [vmem:[%s209 + $0x80] sm:$0xff]
      %v233 = vld [vmem:[%s209 + $0x90] sm:$0xff]
      %v234 = vld [vmem:[%s209 + $0xa0] sm:$0xff]
      %v235 = vld [vmem:[%s209 + $0xb0] sm:$0xff]
      %v236 = vld [vmem:[%s209 + $0xc0] sm:$0xff]
      %v237 = vld [vmem:[%s209 + $0xd0] sm:$0xff]
      %v238 = vld [vmem:[%s209 + $0xe0] sm:$0xff]
      %v239 = vld [vmem:[%s209 + $0xf0] sm:$0xff]
      %v240 = vld [vmem:[%s216] sm:$0xff]
      %v241 = vld [vmem:[%s216 + $0x10] sm:$0xff]
      %v242 = vld [vmem:[%s216 + $0x20] sm:$0xff]
      %v243 = vld [vmem:[%s216 + $0x30] sm:$0xff]
      %v244 = vld [vmem:[%s216 + $0x40] sm:$0xff]
      %v245 = vld [vmem:[%s216 + $0x50] sm:$0xff]
      %v246 = vld [vmem:[%s216 + $0x60] sm:$0xff]
      %v247 = vld [vmem:[%s216 + $0x70] sm:$0xff]
      %v248 = vld [vmem:[%s216 + $0x80] sm:$0xff]
      %v249 = vld [vmem:[%s216 + $0x90] sm:$0xff]
      %v250 = vld [vmem:[%s216 + $0xa0] sm:$0xff]
      %v251 = vld [vmem:[%s216 + $0xb0] sm:$0xff]
      %v252 = vld [vmem:[%s216 + $0xc0] sm:$0xff]
      %v253 = vld [vmem:[%s216 + $0xd0] sm:$0xff]
      %v254 = vld [vmem:[%s216 + $0xe0] sm:$0xff]
      %v255 = vld [vmem:[%s216 + $0xf0] sm:$0xff]
      %v256 = vld [vmem:[%s216 + $0x8] sm:$0xff]
      %v257 = vld [vmem:[%s216 + $0x18] sm:$0xff]
      %v258 = vld [vmem:[%s216 + $0x28] sm:$0xff]
      %v259 = vld [vmem:[%s216 + $0x38] sm:$0xff]
      %v260 = vld [vmem:[%s216 + $0x48] sm:$0xff]
      %v261 = vld [vmem:[%s216 + $0x58] sm:$0xff]
      %v262 = vld [vmem:[%s216 + $0x68] sm:$0xff]
      %v263 = vld [vmem:[%s216 + $0x78] sm:$0xff]
      %v264 = vld [vmem:[%s216 + $0x88] sm:$0xff]
      %v265 = vld [vmem:[%s216 + $0x98] sm:$0xff]
      %v266 = vld [vmem:[%s216 + $0xa8] sm:$0xff]
      %v267 = vld [vmem:[%s216 + $0xb8] sm:$0xff]
      %v268 = vld [vmem:[%s216 + $0xc8] sm:$0xff]
      %v269 = vld [vmem:[%s216 + $0xd8] sm:$0xff]
      %v270 = vld [vmem:[%s216 + $0xe8] sm:$0xff]
      %v271 = vld [vmem:[%s216 + $0xf8] sm:$0xff]
      %v272 = vadd.f32 %v256, 1e-06
      %v273 = vadd.f32 %v257, 1e-06
      %v274 = vadd.f32 %v258, 1e-06
      %v275 = vadd.f32 %v259, 1e-06
      %v276 = vadd.f32 %v260, 1e-06
      %v277 = vadd.f32 %v261, 1e-06
      %v278 = vadd.f32 %v262, 1e-06
      %v279 = vadd.f32 %v263, 1e-06
      %v280 = vadd.f32 %v264, 1e-06
      %v281 = vadd.f32 %v265, 1e-06
      %v282 = vadd.f32 %v266, 1e-06
      %v283 = vadd.f32 %v267, 1e-06
      %v284 = vadd.f32 %v268, 1e-06
      %v285 = vadd.f32 %v269, 1e-06
      %v286 = vadd.f32 %v270, 1e-06
      %v287 = vadd.f32 %v271, 1e-06
      %v288 = vrcp.pop %v272
      %v289 = vmul.f32 %v240, %v288
      %v290 = vrcp.pop %v273
      %v291 = vmul.f32 %v241, %v290
      %v292 = vrcp.pop %v274
      %v293 = vmul.f32 %v242, %v292
      %v294 = vrcp.pop %v275
      %v295 = vmul.f32 %v243, %v294
      %v296 = vrcp.pop %v276
      %v297 = vmul.f32 %v244, %v296
      %v298 = vrcp.pop %v277
      %v299 = vmul.f32 %v245, %v298
      %v300 = vrcp.pop %v278
      %v301 = vmul.f32 %v246, %v300
      %v302 = vrcp.pop %v279
      %v303 = vmul.f32 %v247, %v302
      %v304 = vrcp.pop %v280
      %v305 = vmul.f32 %v248, %v304
      %v306 = vrcp.pop %v281
      %v307 = vmul.f32 %v249, %v306
      %v308 = vrcp.pop %v282
      %v309 = vmul.f32 %v250, %v308
      %v310 = vrcp.pop %v283
      %v311 = vmul.f32 %v251, %v310
      %v312 = vrcp.pop %v284
      %v313 = vmul.f32 %v252, %v312
      %v314 = vrcp.pop %v285
      %v315 = vmul.f32 %v253, %v314
      %v316 = vrcp.pop %v286
      %v317 = vmul.f32 %v254, %v316
      %v318 = vrcp.pop %v287
      %v319 = vmul.f32 %v255, %v318
      %v320 = vadd.f32 %v224, %v289
      %v321 = vadd.f32 %v225, %v291
      %v322 = vadd.f32 %v226, %v293
      %v323 = vadd.f32 %v227, %v295
      %v324 = vadd.f32 %v228, %v297
      %v325 = vadd.f32 %v229, %v299
      %v326 = vadd.f32 %v230, %v301
      %v327 = vadd.f32 %v231, %v303
      %v328 = vadd.f32 %v232, %v305
      %v329 = vadd.f32 %v233, %v307
      %v330 = vadd.f32 %v234, %v309
      %v331 = vadd.f32 %v235, %v311
      %v332 = vadd.f32 %v236, %v313
      %v333 = vadd.f32 %v237, %v315
      %v334 = vadd.f32 %v238, %v317
      %v335 = vadd.f32 %v239, %v319
      %336 = vst [vmem:[%s222] sm:$0xff] %v320
      %337 = vst [vmem:[%s222 + $0x8] sm:$0xff] %v321
      %338 = vst [vmem:[%s222 + $0x10] sm:$0xff] %v322
      %339 = vst [vmem:[%s222 + $0x18] sm:$0xff] %v323
      %340 = vst [vmem:[%s222 + $0x20] sm:$0xff] %v324
      %341 = vst [vmem:[%s222 + $0x28] sm:$0xff] %v325
      %342 = vst [vmem:[%s222 + $0x30] sm:$0xff] %v326
      %343 = vst [vmem:[%s222 + $0x38] sm:$0xff] %v327
      %344 = vst [vmem:[%s222 + $0x40] sm:$0xff] %v328
      %345 = vst [vmem:[%s222 + $0x48] sm:$0xff] %v329
      %346 = vst [vmem:[%s222 + $0x50] sm:$0xff] %v330
      %347 = vst [vmem:[%s222 + $0x58] sm:$0xff] %v331
      %348 = vst [vmem:[%s222 + $0x60] sm:$0xff] %v332
      %349 = vst [vmem:[%s222 + $0x68] sm:$0xff] %v333
      %350 = vst [vmem:[%s222 + $0x70] sm:$0xff] %v334
      %351 = vst [vmem:[%s222 + $0x78] sm:$0xff] %v335
      %p352 = scmp.eq.s32.totalorder %s16, 0
      // Predicated region
      $region29: #{node_update_forward.8} parent=27 // pred_check
        %p353 = pneg %p352
      $region30: #{node_update_forward.8} parent=27 // pred_check_branch
        %355 = sbr.rel (%p353) target = $region32
      $region31: #{node_update_forward.8} parent=27 // pred_region
        %356 = vst [vmem:[%s3] sm:$0x1] 0.0
        %357 = vst [vmem:[%s4] sm:$0x1] 0.0
      $region32: #{node_update_forward.8} parent=27 // pred_fallthru
        _
      %v358 = vld [vmem:[%s3] sm:$0x1]
      %v359 = vadd.f32 %v320, %v321
      %v360 = vadd.f32 %v359, %v322
      %v361 = vadd.f32 %v360, %v323
      %v362 = vadd.f32 %v361, %v324
      %v363 = vadd.f32 %v362, %v325
      %v364 = vadd.f32 %v363, %v326
      %v365 = vadd.f32 %v364, %v327
      %v366 = vadd.f32 %v365, %v328
      %v367 = vadd.f32 %v366, %v329
      %v368 = vadd.f32 %v367, %v330
      %v369 = vadd.f32 %v368, %v331
      %v370 = vadd.f32 %v369, %v332
      %v371 = vadd.f32 %v370, %v333
      %v372 = vadd.f32 %v371, %v334
      %v373 = vadd.f32 %v372, %v335
      %v374 = vrot.slane %v373, 4
      %v375 = vadd.f32 %v373, %v374
      %v376 = vrot.slane %v375, 2
      %v377 = vadd.f32 %v375, %v376
      %v378 = vrot.slane %v377, 1
      %v379 = vadd.f32 %v377, %v378
      %v380 = vadd.f32 %v358, %v379
      %381 = vst [vmem:[%s3] sm:$0x1] %v380
      %v382 = vld [vmem:[%s4] sm:$0x1]
      %v383 = vmul.f32 %v320, %v320
      %v384 = vmul.f32 %v321, %v321
      %v385 = vmul.f32 %v322, %v322
      %v386 = vmul.f32 %v323, %v323
      %v387 = vmul.f32 %v324, %v324
      %v388 = vmul.f32 %v325, %v325
      %v389 = vmul.f32 %v326, %v326
      %v390 = vmul.f32 %v327, %v327
      %v391 = vmul.f32 %v328, %v328
      %v392 = vmul.f32 %v329, %v329
      %v393 = vmul.f32 %v330, %v330
      %v394 = vmul.f32 %v331, %v331
      %v395 = vmul.f32 %v332, %v332
      %v396 = vmul.f32 %v333, %v333
      %v397 = vmul.f32 %v334, %v334
      %v398 = vmul.f32 %v335, %v335
      %v399 = vadd.f32 %v383, %v384
      %v400 = vadd.f32 %v399, %v385
      %v401 = vadd.f32 %v400, %v386
      %v402 = vadd.f32 %v401, %v387
      %v403 = vadd.f32 %v402, %v388
      %v404 = vadd.f32 %v403, %v389
      %v405 = vadd.f32 %v404, %v390
      %v406 = vadd.f32 %v405, %v391
      %v407 = vadd.f32 %v406, %v392
      %v408 = vadd.f32 %v407, %v393
      %v409 = vadd.f32 %v408, %v394
      %v410 = vadd.f32 %v409, %v395
      %v411 = vadd.f32 %v410, %v396
      %v412 = vadd.f32 %v411, %v397
      %v413 = vadd.f32 %v412, %v398
      %v414 = vrot.slane %v413, 4
      %v415 = vadd.f32 %v413, %v414
      %v416 = vrot.slane %v415, 2
      %v417 = vadd.f32 %v415, %v416
      %v418 = vrot.slane %v417, 1
      %v419 = vadd.f32 %v417, %v418
      %v420 = vadd.f32 %v382, %v419
      %421 = vst [vmem:[%s4] sm:$0x1] %v420
      %s422 = smul.u32 16, %s16
      %p423 = scmp.lt.s32.totalorder %s422, 31
      %s424 = scalar_select %p423, %s422, 31
      %s425 = smul.addr %s424, 8
      %s426 = scalar_lea.vmem %s2, %s425
      // Predicated region
      $region33: #{node_update_forward.8} parent=27 // pred_check
        %p427 = pneg %p86
      $region34: #{node_update_forward.8} parent=27 // pred_check_branch
        %429 = sbr.rel (%p427) target = $region36
      $region35: #{node_update_forward.8} parent=27 // pred_region
        %s430 = smul.u32 16, %s16
      $region36: #{node_update_forward.8} parent=27 // pred_fallthru
        _
      // Predicated region
      $region37: #{node_update_forward.8} parent=27 // pred_check
        %p431 = pneg %p107
      $region38: #{node_update_forward.8} parent=27 // pred_check_branch
        %433 = sbr.rel (%p431) target = $region40
      $region39: #{node_update_forward.8} parent=27 // pred_region
        _
      $region40: #{node_update_forward.8} parent=27 // pred_fallthru
        _
      // Predicated region
      $region41: #{node_update_forward.8} parent=27 // pred_check
        %p434 = pneg %p128
      $region42: #{node_update_forward.8} parent=27 // pred_check_branch
        %436 = sbr.rel (%p434) target = $region44
      $region43: #{node_update_forward.8} parent=27 // pred_region
        _
      $region44: #{node_update_forward.8} parent=27 // pred_fallthru
        _
      // Predicated region
      $region45: #{node_update_forward.8} parent=27 // pred_check
        %p437 = pneg %p107
      $region46: #{node_update_forward.8} parent=27 // pred_check_branch
        %439 = sbr.rel (%p437) target = $region48
      $region47: #{node_update_forward.8} parent=27 // pred_region
        _
      $region48: #{node_update_forward.8} parent=27 // pred_fallthru
        _
      // Predicated region
      $region49: #{node_update_forward.8} parent=27 // pred_check
        %p440 = pneg %p128
      $region50: #{node_update_forward.8} parent=27 // pred_check_branch
        %442 = sbr.rel (%p440) target = $region52
      $region51: #{node_update_forward.8} parent=27 // pred_region
        _
      $region52: #{node_update_forward.8} parent=27 // pred_fallthru
        _
    $region28: #{node_update_forward.8} parent=5 // pred_fallthru
      _
    %p443 = scmp.le.s32.totalorder 2, %s11
    // Predicated region
    $region53: #{node_update_forward.8} parent=5 // pred_check
      %p444 = pneg %p443
    $region54: #{node_update_forward.8} parent=5 // pred_check_branch
      %446 = sbr.rel (%p444) target = $region56
    $region55: #{node_update_forward.8} parent=5 // pred_region
      %s447 = ssub.s32 %s11, 2
      // Predicated region
      $region57: #{node_update_forward.8} parent=55 // pred_check
        %p448 = pneg %p92
      $region58: #{node_update_forward.8} parent=55 // pred_check_branch
        %450 = sbr.rel (%p448) target = $region60
      $region59: #{node_update_forward.8} parent=55 // pred_region
        %s451 = smul.u32 16, %s17
        %p452 = scmp.lt.s32.totalorder %s451, 31
        %s453 = scalar_select %p452, %s451, 31
        %s454 = smul.addr %s453, 8
        %s455 = scalar_lea.vmem %s2, %s454
      $region60: #{node_update_forward.8} parent=55 // pred_fallthru
        _
    $region56: #{node_update_forward.8} parent=5 // pred_fallthru
      _
  $region6: #{node_update_forward.8} parent=0 // loop_footer
    %s15 = sadd.s32 1, %s11
  $region7: #{node_update_forward.8} parent=0 // loop_footer_branch
    %10 = sbr.rel target = $region3
  $region8: #{node_update_forward.8} parent=0 // loop_exit
    _

// kernel: node_update_forward.9
$region0: #{node_update_forward.9}
  #allocation0 [shape = 'u32[]', space=smem, size = 0x4, offset = 0x4, fixed_abs, tag = 'smem constant byte address 0x4 - core index']
  #allocation1 [shape = 'u32[144,128]{1,0:T(1,128)}', space=vmem, size = 0x12000, scoped, tag = 'internal scratch']
  %s0 = inlined_call_operand.vmem [shape: f32[512,128], index: 0, kind: input, shape index: {}]
  %s1 = inlined_call_operand.vmem [shape: f32[512,128], index: 1, kind: input, shape index: {}]
  %s2 = inlined_call_operand.vmem [shape: f32[512,128], index: 2, kind: input, shape index: {}]
  %s3 = inlined_call_operand.vmem [shape: f32[128,256], index: 3, kind: input, shape index: {}]
  %s4 = inlined_call_operand.vmem [shape: f32[128,256], index: 4, kind: input, shape index: {}]
  %s5 = inlined_call_operand.vmem [shape: f32[1,256], index: 5, kind: input, shape index: {}]
  %s6 = inlined_call_operand.vmem [shape: f32[512,128], index: 6, kind: output, shape index: {0}]
  %s7 = inlined_call_operand.vmem [shape: f32[1,128], index: 7, kind: output, shape index: {1}]
  %s8 = inlined_call_operand.vmem [shape: f32[1,128], index: 8, kind: output, shape index: {2}]
  %9 = xla_tuple %s6, %s7, %s8
  %s10 = sld [smem:[#allocation0]]
  $region77: #{node_update_forward.9} parent=0
    _
  %s12 = ssub.s32 1, %s10
  %s13 = scalar_select 0, %s12, %s10
  loop: start=0, step=1, limit=6
  $region2: #{node_update_forward.9} parent=0 // loop_pre_header
    _
  $region3: #{node_update_forward.9} parent=0 // loop_header
    %s15 = sphi 0, %s19
    %p16 = scmp.ge.s32.totalorder %s15, 6
    %s25 = sphi 0, %s27
    %s28 = sphi 0, %s25
    %s29 = sphi 0, %s28
    %s45 = sphi 0, %s29
    %s51 = sphi 0, %s53
    %s54 = sphi 0, %s51
    %s55 = sphi 0, %s54
    %s71 = sphi 0, %s55
    %s77 = sphi 0, %s79
    %s80 = sphi 0, %s77
    %s81 = sphi 0, %s80
    %s97 = sphi 0, %s81
    %s101 = sphi 0, %s101
    %s103 = sphi 0, %s101
    %s104 = sphi 0, %s103
    %s118 = sphi 0, %s104
    %s122 = sphi 0, %s122
    %s124 = sphi 0, %s122
    %s125 = sphi 0, %s124
    %s139 = sphi 0, %s125
    %s143 = sphi 0, %s143
    %s145 = sphi 0, %s143
    %s146 = sphi 0, %s145
    %s160 = sphi 0, %s146
    %s166 = sphi 0, %s168
    %s169 = sphi 0, %s166
    %s170 = sphi 0, %s169
    %s186 = sphi 0, %s170
    %s190 = sphi 0, %s190
    %s192 = sphi 0, %s190
    %s193 = sphi 0, %s192
    %s207 = sphi 0, %s193
    %s211 = sphi 0, %s211
    %s213 = sphi 0, %s211
    %s214 = sphi 0, %s213
    %s228 = sphi 0, %s214
  $region4: #{node_update_forward.9} parent=0 // loop_header_branch
    %18 = sbr.rel (%p16) target = $region8
  $region5: #{node_update_forward.9} parent=0 // loop_body
    %s20 = ssub.s32 %s15, 1
    %s21 = ssub.s32 %s15, 2
    %s22 = sadd.s32 %s15, 1
    %s23 = ssub.s32 %s15, %s22
    %p24 = scmp.eq.s32.totalorder %s23, 0
    %s26 = sadd.s32 %s25, 1
    %s27 = scalar_select %p24, %s25, %s26
    %p30 = pneg %p24
    %p31 = scmp.eq.s32.totalorder %s15, 3
    %p32 = por %p30, %p31
    %p33 = scmp.ne.s32.totalorder %s25, %s28
    %p34 = scmp.eq.s32.totalorder %s15, 0
    %p35 = por %p33, %p34
    %p36 = scmp.ne.s32.totalorder %s25, %s28
    %p37 = scmp.eq.s32.totalorder %s20, 3
    %p38 = por %p36, %p37
    %p39 = scmp.ne.s32.totalorder %s28, %s29
    %p40 = scmp.eq.s32.totalorder %s20, 0
    %p41 = por %p39, %p40
    %p42 = scmp.ne.s32.totalorder %s28, %s29
    %p43 = scmp.eq.s32.totalorder %s21, 3
    %p44 = por %p42, %p43
    %p46 = scmp.ne.s32.totalorder %s29, %s45
    %p47 = scmp.eq.s32.totalorder %s21, 0
    %p48 = por %p46, %p47
    %s49 = ssub.s32 %s15, %s22
    %p50 = scmp.eq.s32.totalorder %s49, 0
    %s52 = sadd.s32 %s51, 1
    %s53 = scalar_select %p50, %s51, %s52
    %p56 = pneg %p50
    %p57 = scmp.eq.s32.totalorder %s15, 3
    %p58 = por %p56, %p57
    %p59 = scmp.ne.s32.totalorder %s51, %s54
    %p60 = scmp.eq.s32.totalorder %s15, 0
    %p61 = por %p59, %p60
    %p62 = scmp.ne.s32.totalorder %s51, %s54
    %p63 = scmp.eq.s32.totalorder %s20, 3
    %p64 = por %p62, %p63
    %p65 = scmp.ne.s32.totalorder %s54, %s55
    %p66 = scmp.eq.s32.totalorder %s20, 0
    %p67 = por %p65, %p66
    %p68 = scmp.ne.s32.totalorder %s54, %s55
    %p69 = scmp.eq.s32.totalorder %s21, 3
    %p70 = por %p68, %p69
    %p72 = scmp.ne.s32.totalorder %s55, %s71
    %p73 = scmp.eq.s32.totalorder %s21, 0
    %p74 = por %p72, %p73
    %s75 = ssub.s32 %s15, %s22
    %p76 = scmp.eq.s32.totalorder %s75, 0
    %s78 = sadd.s32 %s77, 1
    %s79 = scalar_select %p76, %s77, %s78
    %p82 = pneg %p76
    %p83 = scmp.eq.s32.totalorder %s15, 3
    %p84 = por %p82, %p83
    %p85 = scmp.ne.s32.totalorder %s77, %s80
    %p86 = scmp.eq.s32.totalorder %s15, 0
    %p87 = por %p85, %p86
    %p88 = scmp.ne.s32.totalorder %s77, %s80
    %p89 = scmp.eq.s32.totalorder %s20, 3
    %p90 = por %p88, %p89
    %p91 = scmp.ne.s32.totalorder %s80, %s81
    %p92 = scmp.eq.s32.totalorder %s20, 0
    %p93 = por %p91, %p92
    %p94 = scmp.ne.s32.totalorder %s80, %s81
    %p95 = scmp.eq.s32.totalorder %s21, 3
    %p96 = por %p94, %p95
    %p98 = scmp.ne.s32.totalorder %s81, %s97
    %p99 = scmp.eq.s32.totalorder %s21, 0
    %p100 = por %p98, %p99
    %s102 = sadd.s32 %s101, 1
    %p105 = scmp.eq.s32.totalorder %s15, 3
    %p106 = scmp.ne.s32.totalorder %s101, %s103
    %p107 = scmp.eq.s32.totalorder %s15, 0
    %p108 = por %p106, %p107
    %p109 = scmp.ne.s32.totalorder %s101, %s103
    %p110 = scmp.eq.s32.totalorder %s20, 3
    %p111 = por %p109, %p110
    %p112 = scmp.ne.s32.totalorder %s103, %s104
    %p113 = scmp.eq.s32.totalorder %s20, 0
    %p114 = por %p112, %p113
    %p115 = scmp.ne.s32.totalorder %s103, %s104
    %p116 = scmp.eq.s32.totalorder %s21, 3
    %p117 = por %p115, %p116
    %p119 = scmp.ne.s32.totalorder %s104, %s118
    %p120 = scmp.eq.s32.totalorder %s21, 0
    %p121 = por %p119, %p120
    %s123 = sadd.s32 %s122, 1
    %p126 = scmp.eq.s32.totalorder %s15, 3
    %p127 = scmp.ne.s32.totalorder %s122, %s124
    %p128 = scmp.eq.s32.totalorder %s15, 0
    %p129 = por %p127, %p128
    %p130 = scmp.ne.s32.totalorder %s122, %s124
    %p131 = scmp.eq.s32.totalorder %s20, 3
    %p132 = por %p130, %p131
    %p133 = scmp.ne.s32.totalorder %s124, %s125
    %p134 = scmp.eq.s32.totalorder %s20, 0
    %p135 = por %p133, %p134
    %p136 = scmp.ne.s32.totalorder %s124, %s125
    %p137 = scmp.eq.s32.totalorder %s21, 3
    %p138 = por %p136, %p137
    %p140 = scmp.ne.s32.totalorder %s125, %s139
    %p141 = scmp.eq.s32.totalorder %s21, 0
    %p142 = por %p140, %p141
    %s144 = sadd.s32 %s143, 1
    %p147 = scmp.eq.s32.totalorder %s15, 3
    %p148 = scmp.ne.s32.totalorder %s143, %s145
    %p149 = scmp.eq.s32.totalorder %s15, 0
    %p150 = por %p148, %p149
    %p151 = scmp.ne.s32.totalorder %s143, %s145
    %p152 = scmp.eq.s32.totalorder %s20, 3
    %p153 = por %p151, %p152
    %p154 = scmp.ne.s32.totalorder %s145, %s146
    %p155 = scmp.eq.s32.totalorder %s20, 0
    %p156 = por %p154, %p155
    %p157 = scmp.ne.s32.totalorder %s145, %s146
    %p158 = scmp.eq.s32.totalorder %s21, 3
    %p159 = por %p157, %p158
    %p161 = scmp.ne.s32.totalorder %s146, %s160
    %p162 = scmp.eq.s32.totalorder %s21, 0
    %p163 = por %p161, %p162
    %s164 = ssub.s32 %s15, %s22
    %p165 = scmp.eq.s32.totalorder %s164, 0
    %s167 = sadd.s32 %s166, 1
    %s168 = scalar_select %p165, %s166, %s167
    %p171 = pneg %p165
    %p172 = scmp.eq.s32.totalorder %s15, 3
    %p173 = por %p171, %p172
    %p174 = scmp.ne.s32.totalorder %s166, %s169
    %p175 = scmp.eq.s32.totalorder %s15, 0
    %p176 = por %p174, %p175
    %p177 = scmp.ne.s32.totalorder %s166, %s169
    %p178 = scmp.eq.s32.totalorder %s20, 3
    %p179 = por %p177, %p178
    %p180 = scmp.ne.s32.totalorder %s169, %s170
    %p181 = scmp.eq.s32.totalorder %s20, 0
    %p182 = por %p180, %p181
    %p183 = scmp.ne.s32.totalorder %s169, %s170
    %p184 = scmp.eq.s32.totalorder %s21, 3
    %p185 = por %p183, %p184
    %p187 = scmp.ne.s32.totalorder %s170, %s186
    %p188 = scmp.eq.s32.totalorder %s21, 0
    %p189 = por %p187, %p188
    %s191 = sadd.s32 %s190, 1
    %p194 = scmp.eq.s32.totalorder %s15, 3
    %p195 = scmp.ne.s32.totalorder %s190, %s192
    %p196 = scmp.eq.s32.totalorder %s15, 0
    %p197 = por %p195, %p196
    %p198 = scmp.ne.s32.totalorder %s190, %s192
    %p199 = scmp.eq.s32.totalorder %s20, 3
    %p200 = por %p198, %p199
    %p201 = scmp.ne.s32.totalorder %s192, %s193
    %p202 = scmp.eq.s32.totalorder %s20, 0
    %p203 = por %p201, %p202
    %p204 = scmp.ne.s32.totalorder %s192, %s193
    %p205 = scmp.eq.s32.totalorder %s21, 3
    %p206 = por %p204, %p205
    %p208 = scmp.ne.s32.totalorder %s193, %s207
    %p209 = scmp.eq.s32.totalorder %s21, 0
    %p210 = por %p208, %p209
    %s212 = sadd.s32 %s211, 1
    %p215 = scmp.eq.s32.totalorder %s15, 3
    %p216 = scmp.ne.s32.totalorder %s211, %s213
    %p217 = scmp.eq.s32.totalorder %s15, 0
    %p218 = por %p216, %p217
    %p219 = scmp.ne.s32.totalorder %s211, %s213
    %p220 = scmp.eq.s32.totalorder %s20, 3
    %p221 = por %p219, %p220
    %p222 = scmp.ne.s32.totalorder %s213, %s214
    %p223 = scmp.eq.s32.totalorder %s20, 0
    %p224 = por %p222, %p223
    %p225 = scmp.ne.s32.totalorder %s213, %s214
    %p226 = scmp.eq.s32.totalorder %s21, 3
    %p227 = por %p225, %p226
    %p229 = scmp.ne.s32.totalorder %s214, %s228
    %p230 = scmp.eq.s32.totalorder %s21, 0
    %p231 = por %p229, %p230
    %p232 = scmp.le.s32.totalorder 1, %s15
    %p233 = scmp.lt.s32.totalorder %s15, 5
    %p234 = pnand %p232, %p233
    %p235 = pneg %p234
    // Predicated region
    $region9: #{node_update_forward.9} parent=5 // pred_check
      _
    $region10: #{node_update_forward.9} parent=5 // pred_check_branch
      %237 = sbr.rel (%p234) target = $region12
    $region11: #{node_update_forward.9} parent=5 // pred_region
      %s238 = ssub.s32 %s15, 1
      // Predicated region
      $region13: #{node_update_forward.9} parent=11 // pred_check
        %p239 = pneg %p114
      $region14: #{node_update_forward.9} parent=11 // pred_check_branch
        %241 = sbr.rel (%p239) target = $region16
      $region15: #{node_update_forward.9} parent=11 // pred_region
        _
      $region16: #{node_update_forward.9} parent=11 // pred_fallthru
        _
      // Predicated region
      $region17: #{node_update_forward.9} parent=11 // pred_check
        %p242 = pneg %p135
      $region18: #{node_update_forward.9} parent=11 // pred_check_branch
        %244 = sbr.rel (%p242) target = $region20
      $region19: #{node_update_forward.9} parent=11 // pred_region
        _
      $region20: #{node_update_forward.9} parent=11 // pred_fallthru
        _
      // Predicated region
      $region21: #{node_update_forward.9} parent=11 // pred_check
        %p245 = pneg %p156
      $region22: #{node_update_forward.9} parent=11 // pred_check_branch
        %247 = sbr.rel (%p245) target = $region24
      $region23: #{node_update_forward.9} parent=11 // pred_region
        _
      $region24: #{node_update_forward.9} parent=11 // pred_fallthru
        _
    $region12: #{node_update_forward.9} parent=5 // pred_fallthru
      _
    %p248 = scmp.lt.s32.totalorder %s15, 4
    // Predicated region
    $region25: #{node_update_forward.9} parent=5 // pred_check
      %p249 = pneg %p248
    $region26: #{node_update_forward.9} parent=5 // pred_check_branch
      %251 = sbr.rel (%p249) target = $region28
    $region27: #{node_update_forward.9} parent=5 // pred_region
      // Predicated region
      $region29: #{node_update_forward.9} parent=27 // pred_check
        %p252 = pneg %p35
      $region30: #{node_update_forward.9} parent=27 // pred_check_branch
        %254 = sbr.rel (%p252) target = $region32
      $region31: #{node_update_forward.9} parent=27 // pred_region
        %s255 = smul.u32 16, %s15
        %p256 = scmp.lt.s32.totalorder %s255, 63
        %s257 = scalar_select %p256, %s255, 63
        %s258 = smul.addr %s257, 8
        %s259 = scalar_lea.vmem %s0, %s258
        %s260 = smul.u32 16, %s15
      $region32: #{node_update_forward.9} parent=27 // pred_fallthru
        _
      // Predicated region
      $region33: #{node_update_forward.9} parent=27 // pred_check
        %p261 = pneg %p61
      $region34: #{node_update_forward.9} parent=27 // pred_check_branch
        %263 = sbr.rel (%p261) target = $region36
      $region35: #{node_update_forward.9} parent=27 // pred_region
        %s264 = smul.u32 16, %s15
        %p265 = scmp.lt.s32.totalorder %s264, 63
        %s266 = scalar_select %p265, %s264, 63
        %s267 = smul.addr %s266, 8
        %s268 = scalar_lea.vmem %s1, %s267
        %s269 = smul.u32 16, %s15
      $region36: #{node_update_forward.9} parent=27 // pred_fallthru
        _
      // Predicated region
      $region37: #{node_update_forward.9} parent=27 // pred_check
        %p270 = pneg %p87
      $region38: #{node_update_forward.9} parent=27 // pred_check_branch
        %272 = sbr.rel (%p270) target = $region40
      $region39: #{node_update_forward.9} parent=27 // pred_region
        %s273 = smul.u32 16, %s15
        %p274 = scmp.lt.s32.totalorder %s273, 63
        %s275 = scalar_select %p274, %s273, 63
        %s276 = smul.addr %s275, 8
        %s277 = scalar_lea.vmem %s2, %s276
        %s278 = smul.u32 16, %s15
      $region40: #{node_update_forward.9} parent=27 // pred_fallthru
        _
    $region28: #{node_update_forward.9} parent=5 // pred_fallthru
      _
    %p279 = scmp.le.s32.totalorder 1, %s15
    %p280 = scmp.lt.s32.totalorder %s15, 5
    %p281 = pnand %p279, %p280
    %p282 = pneg %p281
    // Predicated region
    $region41: #{node_update_forward.9} parent=5 // pred_check
      _
    $region42: #{node_update_forward.9} parent=5 // pred_check_branch
      %284 = sbr.rel (%p281) target = $region44
    $region43: #{node_update_forward.9} parent=5 // pred_region
      %s285 = ssub.s32 %s15, 1
      %s286 = smul.u32 16, %s20
      %p287 = scmp.lt.s32.totalorder %s286, 63
      %s288 = scalar_select %p287, %s286, 63
      %s289 = smul.addr %s288, 8
      %s290 = scalar_lea.vmem %s0, %s289
      %p291 = pneg %p41
      %p292 = pneg %p38
      %s293 = smul.u32 16, %s20
      %p294 = scmp.lt.s32.totalorder %s293, 63
      %s295 = scalar_select %p294, %s293, 63
      %s296 = smul.addr %s295, 8
      %s297 = scalar_lea.vmem %s1, %s296
      %p298 = pneg %p67
      %p299 = pneg %p64
      %s300 = smul.u32 16, %s20
      %p301 = scmp.lt.s32.totalorder %s300, 63
      %s302 = scalar_select %p301, %s300, 63
      %s303 = smul.addr %s302, 8
      %s304 = scalar_lea.vmem %s2, %s303
      %p305 = pneg %p93
      %p306 = pneg %p90
      %p307 = pneg %p114
      %p308 = pneg %p111
      %p309 = pneg %p135
      %p310 = pneg %p132
      %p311 = pneg %p156
      %p312 = pneg %p153
      %p313 = pneg %p182
      %p314 = pneg %p179
      %s315 = smul.u32 16, %s20
      %p316 = scmp.lt.s32.totalorder %s315, 63
      %s317 = scalar_select %p316, %s315, 63
      %s318 = smul.addr %s317, 8
      %s319 = scalar_lea.vmem %s6, %s318
      %p320 = pneg %p203
      %p321 = pneg %p200
      %p322 = pneg %p224
      %p323 = pneg %p221
      %s324 = smul.u32 16, %s20
      %p325 = scmp.lt.s32.totalorder %s324, 63
      %s326 = scalar_select %p325, %s324, 63
      %s327 = smul.addr %s326, 8
      %s328 = scalar_lea.vmem %s0, %s327
      %s329 = smul.u32 16, %s20
      %s330 = smul.u32 16, %s20
      %p331 = scmp.lt.s32.totalorder %s330, 63
      %s332 = scalar_select %p331, %s330, 63
      %s333 = smul.addr %s332, 8
      %s334 = scalar_lea.vmem %s1, %s333
      %s335 = smul.u32 16, %s20
      %s336 = smul.u32 16, %s20
      %p337 = scmp.lt.s32.totalorder %s336, 63
      %s338 = scalar_select %p337, %s336, 63
      %s339 = smul.addr %s338, 8
      %s340 = scalar_lea.vmem %s2, %s339
      %s341 = smul.u32 16, %s20
      %s342 = smul.u32 16, %s20
      %p343 = scmp.lt.s32.totalorder %s342, 63
      %s344 = scalar_select %p343, %s342, 63
      %s345 = smul.addr %s344, 8
      %s346 = scalar_lea.vmem %s6, %s345
      %s347 = smul.u32 16, %s20
      %v348 = vld [vmem:[%s328] sm:$0xff]
      %v349 = vld [vmem:[%s328 + $0x8] sm:$0xff]
      %v350 = vld [vmem:[%s328 + $0x10] sm:$0xff]
      %v351 = vld [vmem:[%s328 + $0x18] sm:$0xff]
      %v352 = vld [vmem:[%s328 + $0x20] sm:$0xff]
      %v353 = vld [vmem:[%s328 + $0x28] sm:$0xff]
      %v354 = vld [vmem:[%s328 + $0x30] sm:$0xff]
      %v355 = vld [vmem:[%s328 + $0x38] sm:$0xff]
      %v356 = vld [vmem:[%s328 + $0x40] sm:$0xff]
      %v357 = vld [vmem:[%s328 + $0x48] sm:$0xff]
      %v358 = vld [vmem:[%s328 + $0x50] sm:$0xff]
      %v359 = vld [vmem:[%s328 + $0x58] sm:$0xff]
      %v360 = vld [vmem:[%s328 + $0x60] sm:$0xff]
      %v361 = vld [vmem:[%s328 + $0x68] sm:$0xff]
      %v362 = vld [vmem:[%s328 + $0x70] sm:$0xff]
      %v363 = vld [vmem:[%s328 + $0x78] sm:$0xff]
      %v364 = vld [vmem:[%s334] sm:$0xff]
      %v365 = vld [vmem:[%s334 + $0x8] sm:$0xff]
      %v366 = vld [vmem:[%s334 + $0x10] sm:$0xff]
      %v367 = vld [vmem:[%s334 + $0x18] sm:$0xff]
      %v368 = vld [vmem:[%s334 + $0x20] sm:$0xff]
      %v369 = vld [vmem:[%s334 + $0x28] sm:$0xff]
      %v370 = vld [vmem:[%s334 + $0x30] sm:$0xff]
      %v371 = vld [vmem:[%s334 + $0x38] sm:$0xff]
      %v372 = vld [vmem:[%s334 + $0x40] sm:$0xff]
      %v373 = vld [vmem:[%s334 + $0x48] sm:$0xff]
      %v374 = vld [vmem:[%s334 + $0x50] sm:$0xff]
      %v375 = vld [vmem:[%s334 + $0x58] sm:$0xff]
      %v376 = vld [vmem:[%s334 + $0x60] sm:$0xff]
      %v377 = vld [vmem:[%s334 + $0x68] sm:$0xff]
      %v378 = vld [vmem:[%s334 + $0x70] sm:$0xff]
      %v379 = vld [vmem:[%s334 + $0x78] sm:$0xff]
      %v380 = vld [vmem:[%s340] sm:$0xff]
      %v381 = vld [vmem:[%s340 + $0x8] sm:$0xff]
      %v382 = vld [vmem:[%s340 + $0x10] sm:$0xff]
      %v383 = vld [vmem:[%s340 + $0x18] sm:$0xff]
      %v384 = vld [vmem:[%s340 + $0x20] sm:$0xff]
      %v385 = vld [vmem:[%s340 + $0x28] sm:$0xff]
      %v386 = vld [vmem:[%s340 + $0x30] sm:$0xff]
      %v387 = vld [vmem:[%s340 + $0x38] sm:$0xff]
      %v388 = vld [vmem:[%s340 + $0x40] sm:$0xff]
      %v389 = vld [vmem:[%s340 + $0x48] sm:$0xff]
      %v390 = vld [vmem:[%s340 + $0x50] sm:$0xff]
      %v391 = vld [vmem:[%s340 + $0x58] sm:$0xff]
      %v392 = vld [vmem:[%s340 + $0x60] sm:$0xff]
      %v393 = vld [vmem:[%s340 + $0x68] sm:$0xff]
      %v394 = vld [vmem:[%s340 + $0x70] sm:$0xff]
      %v395 = vld [vmem:[%s340 + $0x78] sm:$0xff]
      %v396 = vsub.f32 %v364, %v380
      %v397 = vsub.f32 %v365, %v381
      %v398 = vsub.f32 %v366, %v382
      %v399 = vsub.f32 %v367, %v383
      %v400 = vsub.f32 %v368, %v384
      %v401 = vsub.f32 %v369, %v385
      %v402 = vsub.f32 %v370, %v386
      %v403 = vsub.f32 %v371, %v387
      %v404 = vsub.f32 %v372, %v388
      %v405 = vsub.f32 %v373, %v389
      %v406 = vsub.f32 %v374, %v390
      %v407 = vsub.f32 %v375, %v391
      %v408 = vsub.f32 %v376, %v392
      %v409 = vsub.f32 %v377, %v393
      %v410 = vsub.f32 %v378, %v394
      %v411 = vsub.f32 %v379, %v395
      %v412 = vand.u32 2147483647, %v396
      %v413 = vand.u32 2147483647, %v397
      %v414 = vand.u32 2147483647, %v398
      %v415 = vand.u32 2147483647, %v399
      %v416 = vand.u32 2147483647, %v400
      %v417 = vand.u32 2147483647, %v401
      %v418 = vand.u32 2147483647, %v402
      %v419 = vand.u32 2147483647, %v403
      %v420 = vand.u32 2147483647, %v404
      %v421 = vand.u32 2147483647, %v405
      %v422 = vand.u32 2147483647, %v406
      %v423 = vand.u32 2147483647, %v407
      %v424 = vand.u32 2147483647, %v408
      %v425 = vand.u32 2147483647, %v409
      %v426 = vand.u32 2147483647, %v410
      %v427 = vand.u32 2147483647, %v411
      %v428 = vld [vmem:[%s3] sm:$0xff]
      %v429 = vld [vmem:[%s3 + $0x8] sm:$0xff]
      %v430 = vld [vmem:[%s3 + $0x10] sm:$0xff]
      %v431 = vld [vmem:[%s3 + $0x18] sm:$0xff]
      %v432 = vld [vmem:[%s3 + $0x20] sm:$0xff]
      %v433 = vld [vmem:[%s3 + $0x28] sm:$0xff]
      %v434 = vld [vmem:[%s3 + $0x30] sm:$0xff]
      %v435 = vld [vmem:[%s3 + $0x38] sm:$0xff]
      %v436 = vld [vmem:[%s3 + $0x40] sm:$0xff]
      %v437 = vld [vmem:[%s3 + $0x48] sm:$0xff]
      %v438 = vld [vmem:[%s3 + $0x50] sm:$0xff]
      %v439 = vld [vmem:[%s3 + $0x58] sm:$0xff]
      %v440 = vld [vmem:[%s3 + $0x60] sm:$0xff]
      %v441 = vld [vmem:[%s3 + $0x68] sm:$0xff]
      %v442 = vld [vmem:[%s3 + $0x70] sm:$0xff]
      %v443 = vld [vmem:[%s3 + $0x78] sm:$0xff]
      %v444 = vld [vmem:[%s3 + $0x80] sm:$0xff]
      %v445 = vld [vmem:[%s3 + $0x88] sm:$0xff]
      %v446 = vld [vmem:[%s3 + $0x90] sm:$0xff]
      %v447 = vld [vmem:[%s3 + $0x98] sm:$0xff]
      %v448 = vld [vmem:[%s3 + $0xa0] sm:$0xff]
      %v449 = vld [vmem:[%s3 + $0xa8] sm:$0xff]
      %v450 = vld [vmem:[%s3 + $0xb0] sm:$0xff]
      %v451 = vld [vmem:[%s3 + $0xb8] sm:$0xff]
      %v452 = vld [vmem:[%s3 + $0xc0] sm:$0xff]
      %v453 = vld [vmem:[%s3 + $0xc8] sm:$0xff]
      %v454 = vld [vmem:[%s3 + $0xd0] sm:$0xff]
      %v455 = vld [vmem:[%s3 + $0xd8] sm:$0xff]
      %v456 = vld [vmem:[%s3 + $0xe0] sm:$0xff]
      %v457 = vld [vmem:[%s3 + $0xe8] sm:$0xff]
      %v458 = vld [vmem:[%s3 + $0xf0] sm:$0xff]
      %v459 = vld [vmem:[%s3 + $0xf8] sm:$0xff]
      %v460 = vld [vmem:[%s4] sm:$0xff]
      %v461 = vld [vmem:[%s4 + $0x8] sm:$0xff]
      %v462 = vld [vmem:[%s4 + $0x10] sm:$0xff]
      %v463 = vld [vmem:[%s4 + $0x18] sm:$0xff]
      %v464 = vld [vmem:[%s4 + $0x20] sm:$0xff]
      %v465 = vld [vmem:[%s4 + $0x28] sm:$0xff]
      %v466 = vld [vmem:[%s4 + $0x30] sm:$0xff]
      %v467 = vld [vmem:[%s4 + $0x38] sm:$0xff]
      %v468 = vld [vmem:[%s4 + $0x40] sm:$0xff]
      %v469 = vld [vmem:[%s4 + $0x48] sm:$0xff]
      %v470 = vld [vmem:[%s4 + $0x50] sm:$0xff]
      %v471 = vld [vmem:[%s4 + $0x58] sm:$0xff]
      %v472 = vld [vmem:[%s4 + $0x60] sm:$0xff]
      %v473 = vld [vmem:[%s4 + $0x68] sm:$0xff]
      %v474 = vld [vmem:[%s4 + $0x70] sm:$0xff]
      %v475 = vld [vmem:[%s4 + $0x78] sm:$0xff]
      %v476 = vld [vmem:[%s4 + $0x80] sm:$0xff]
      %v477 = vld [vmem:[%s4 + $0x88] sm:$0xff]
      %v478 = vld [vmem:[%s4 + $0x90] sm:$0xff]
      %v479 = vld [vmem:[%s4 + $0x98] sm:$0xff]
      %v480 = vld [vmem:[%s4 + $0xa0] sm:$0xff]
      %v481 = vld [vmem:[%s4 + $0xa8] sm:$0xff]
      %v482 = vld [vmem:[%s4 + $0xb0] sm:$0xff]
      %v483 = vld [vmem:[%s4 + $0xb8] sm:$0xff]
      %v484 = vld [vmem:[%s4 + $0xc0] sm:$0xff]
      %v485 = vld [vmem:[%s4 + $0xc8] sm:$0xff]
      %v486 = vld [vmem:[%s4 + $0xd0] sm:$0xff]
      %v487 = vld [vmem:[%s4 + $0xd8] sm:$0xff]
      %v488 = vld [vmem:[%s4 + $0xe0] sm:$0xff]
      %v489 = vld [vmem:[%s4 + $0xe8] sm:$0xff]
      %v490 = vld [vmem:[%s4 + $0xf0] sm:$0xff]
      %v491 = vld [vmem:[%s4 + $0xf8] sm:$0xff]
      %492 = vmatprep.subr.mxu0 %v491
      %493 = vmatpush1.msra.mxu0 %v490
      %494 = vmatprep.subr.mxu0 %v489
      %495 = vmatpush1.msra.mxu0 %v488
      %496 = vmatprep.subr.mxu0 %v487
      %497 = vmatpush1.msra.mxu0 %v486
      %498 = vmatprep.subr.mxu0 %v485
      %499 = vmatpush1.msra.mxu0 %v484
      %500 = vmatprep.subr.mxu0 %v483
      %501 = vmatpush1.msra.mxu0 %v482
      %502 = vmatprep.subr.mxu0 %v481
      %503 = vmatpush1.msra.mxu0 %v480
      %504 = vmatprep.subr.mxu0 %v479
      %505 = vmatpush1.msra.mxu0 %v478
      %506 = vmatprep.subr.mxu0 %v477
      %507 = vmatpush1.msra.mxu0 %v476
      %508 = vmatprep.subr.mxu0 %v475
      %509 = vmatpush1.msra.mxu0 %v474
      %510 = vmatprep.subr.mxu0 %v473
      %511 = vmatpush1.msra.mxu0 %v472
      %512 = vmatprep.subr.mxu0 %v471
      %513 = vmatpush1.msra.mxu0 %v470
      %514 = vmatprep.subr.mxu0 %v469
      %515 = vmatpush1.msra.mxu0 %v468
      %516 = vmatprep.subr.mxu0 %v467
      %517 = vmatpush1.msra.mxu0 %v466
      %518 = vmatprep.subr.mxu0 %v465
      %519 = vmatpush1.msra.mxu0 %v464
      %520 = vmatprep.subr.mxu0 %v463
      %521 = vmatpush1.msra.mxu0 %v462
      %522 = vmatprep.subr.mxu0 %v461
      %523 = vmatpush1.msra.mxu0 %v460
      %524 = vmatprep.subr.mxu0 0.0
      %525 = vmatpush2.msra.mxu0 0.0
      %526 = vmatprep.subr.mxu0 0.0
      %527 = vmatpush2.msra.mxu0 0.0
      %528 = vmatprep.subr.mxu0 0.0
      %529 = vmatpush2.msra.mxu0 0.0
      %530 = vmatprep.subr.mxu0 0.0
      %531 = vmatpush2.msra.mxu0 0.0
      %532 = vmatprep.subr.mxu0 0.0
      %533 = vmatpush2.msra.mxu0 0.0
      %534 = vmatprep.subr.mxu0 0.0
      %535 = vmatpush2.msra.mxu0 0.0
      %536 = vmatprep.subr.mxu0 0.0
      %537 = vmatpush2.msra.mxu0 0.0
      %538 = vmatprep.subr.mxu0 0.0
      %539 = vmatpush2.msra.mxu0 0.0
      %540 = vmatprep.subr.mxu0 0.0
      %541 = vmatpush2.msra.mxu0 0.0
      %542 = vmatprep.subr.mxu0 0.0
      %543 = vmatpush2.msra.mxu0 0.0
      %544 = vmatprep.subr.mxu0 0.0
      %545 = vmatpush2.msra.mxu0 0.0
      %546 = vmatprep.subr.mxu0 0.0
      %547 = vmatpush2.msra.mxu0 0.0
      %548 = vmatprep.subr.mxu0 0.0
      %549 = vmatpush2.msra.mxu0 0.0
      %550 = vmatprep.subr.mxu0 0.0
      %551 = vmatpush2.msra.mxu0 0.0
      %552 = vmatprep.subr.mxu0 0.0
      %553 = vmatpush2.msra.mxu0 0.0
      %554 = vmatprep.subr.mxu0 0.0
      %555 = vmatpush2.msra.mxu0 0.0
      %556 = vmatprep.mubr.f32.mxu0 0.0
      %557 = vmatmul.mubr.f32.gmra.mxu0 %v412
      %v558 = vpop.f32.mrf.mxu0
      %v559 = vadd.f32 0.0, %v558
      %v560 = vpop.f32.mrf.mxu0
      %v561 = vadd.f32 0.0, %v560
      %562 = vmatprep.mubr.f32.mxu0 0.0
      %563 = vmatmul.mubr.f32.gmra.mxu0 %v413
      %v564 = vpop.f32.mrf.mxu0
      %v565 = vadd.f32 0.0, %v564
      %v566 = vpop.f32.mrf.mxu0
      %v567 = vadd.f32 0.0, %v566
      %568 = vmatprep.mubr.f32.mxu0 0.0
      %569 = vmatmul.mubr.f32.gmra.mxu0 %v414
      %v570 = vpop.f32.mrf.mxu0
      %v571 = vadd.f32 0.0, %v570
      %v572 = vpop.f32.mrf.mxu0
      %v573 = vadd.f32 0.0, %v572
      %574 = vmatprep.mubr.f32.mxu0 0.0
      %575 = vmatmul.mubr.f32.gmra.mxu0 %v415
      %v576 = vpop.f32.mrf.mxu0
      %v577 = vadd.f32 0.0, %v576
      %v578 = vpop.f32.mrf.mxu0
      %v579 = vadd.f32 0.0, %v578
      %580 = vmatprep.mubr.f32.mxu0 0.0
      %581 = vmatmul.mubr.f32.gmra.mxu0 %v416
      %v582 = vpop.f32.mrf.mxu0
      %v583 = vadd.f32 0.0, %v582
      %v584 = vpop.f32.mrf.mxu0
      %v585 = vadd.f32 0.0, %v584
      %586 = vmatprep.mubr.f32.mxu0 0.0
      %587 = vmatmul.mubr.f32.gmra.mxu0 %v417
      %v588 = vpop.f32.mrf.mxu0
      %v589 = vadd.f32 0.0, %v588
      %v590 = vpop.f32.mrf.mxu0
      %v591 = vadd.f32 0.0, %v590
      %592 = vmatprep.mubr.f32.mxu0 0.0
      %593 = vmatmul.mubr.f32.gmra.mxu0 %v418
      %v594 = vpop.f32.mrf.mxu0
      %v595 = vadd.f32 0.0, %v594
      %v596 = vpop.f32.mrf.mxu0
      %v597 = vadd.f32 0.0, %v596
      %598 = vmatprep.mubr.f32.mxu0 0.0
      %599 = vmatmul.mubr.f32.gmra.mxu0 %v419
      %v600 = vpop.f32.mrf.mxu0
      %v601 = vadd.f32 0.0, %v600
      %v602 = vpop.f32.mrf.mxu0
      %v603 = vadd.f32 0.0, %v602
      %604 = vmatprep.mubr.f32.mxu0 0.0
      %605 = vmatmul.mubr.f32.gmra.mxu0 %v420
      %v606 = vpop.f32.mrf.mxu0
      %v607 = vadd.f32 0.0, %v606
      %v608 = vpop.f32.mrf.mxu0
      %v609 = vadd.f32 0.0, %v608
      %610 = vmatprep.mubr.f32.mxu0 0.0
      %611 = vmatmul.mubr.f32.gmra.mxu0 %v421
      %v612 = vpop.f32.mrf.mxu0
      %v613 = vadd.f32 0.0, %v612
      %v614 = vpop.f32.mrf.mxu0
      %v615 = vadd.f32 0.0, %v614
      %616 = vmatprep.mubr.f32.mxu0 0.0
      %617 = vmatmul.mubr.f32.gmra.mxu0 %v422
      %v618 = vpop.f32.mrf.mxu0
      %v619 = vadd.f32 0.0, %v618
      %v620 = vpop.f32.mrf.mxu0
      %v621 = vadd.f32 0.0, %v620
      %622 = vmatprep.mubr.f32.mxu0 0.0
      %623 = vmatmul.mubr.f32.gmra.mxu0 %v423
      %v624 = vpop.f32.mrf.mxu0
      %v625 = vadd.f32 0.0, %v624
      %v626 = vpop.f32.mrf.mxu0
      %v627 = vadd.f32 0.0, %v626
      %628 = vmatprep.mubr.f32.mxu0 0.0
      %629 = vmatmul.mubr.f32.gmra.mxu0 %v424
      %v630 = vpop.f32.mrf.mxu0
      %v631 = vadd.f32 0.0, %v630
      %v632 = vpop.f32.mrf.mxu0
      %v633 = vadd.f32 0.0, %v632
      %634 = vmatprep.mubr.f32.mxu0 0.0
      %635 = vmatmul.mubr.f32.gmra.mxu0 %v425
      %v636 = vpop.f32.mrf.mxu0
      %v637 = vadd.f32 0.0, %v636
      %v638 = vpop.f32.mrf.mxu0
      %v639 = vadd.f32 0.0, %v638
      %640 = vmatprep.mubr.f32.mxu0 0.0
      %641 = vmatmul.mubr.f32.gmra.mxu0 %v426
      %v642 = vpop.f32.mrf.mxu0
      %v643 = vadd.f32 0.0, %v642
      %v644 = vpop.f32.mrf.mxu0
      %v645 = vadd.f32 0.0, %v644
      %646 = vmatprep.mubr.f32.mxu0 0.0
      %647 = vmatmul.mubr.f32.gmra.mxu0 %v427
      %v648 = vpop.f32.mrf.mxu0
      %v649 = vadd.f32 0.0, %v648
      %v650 = vpop.f32.mrf.mxu0
      %v651 = vadd.f32 0.0, %v650
      %652 = vdwg.mxu0
      %653 = vmatprep.subr.mxu0 %v459
      %654 = vmatpush1.msra.mxu0 %v458
      %655 = vmatprep.subr.mxu0 %v457
      %656 = vmatpush1.msra.mxu0 %v456
      %657 = vmatprep.subr.mxu0 %v455
      %658 = vmatpush1.msra.mxu0 %v454
      %659 = vmatprep.subr.mxu0 %v453
      %660 = vmatpush1.msra.mxu0 %v452
      %661 = vmatprep.subr.mxu0 %v451
      %662 = vmatpush1.msra.mxu0 %v450
      %663 = vmatprep.subr.mxu0 %v449
      %664 = vmatpush1.msra.mxu0 %v448
      %665 = vmatprep.subr.mxu0 %v447
      %666 = vmatpush1.msra.mxu0 %v446
      %667 = vmatprep.subr.mxu0 %v445
      %668 = vmatpush1.msra.mxu0 %v444
      %669 = vmatprep.subr.mxu0 %v443
      %670 = vmatpush1.msra.mxu0 %v442
      %671 = vmatprep.subr.mxu0 %v441
      %672 = vmatpush1.msra.mxu0 %v440
      %673 = vmatprep.subr.mxu0 %v439
      %674 = vmatpush1.msra.mxu0 %v438
      %675 = vmatprep.subr.mxu0 %v437
      %676 = vmatpush1.msra.mxu0 %v436
      %677 = vmatprep.subr.mxu0 %v435
      %678 = vmatpush1.msra.mxu0 %v434
      %679 = vmatprep.subr.mxu0 %v433
      %680 = vmatpush1.msra.mxu0 %v432
      %681 = vmatprep.subr.mxu0 %v431
      %682 = vmatpush1.msra.mxu0 %v430
      %683 = vmatprep.subr.mxu0 %v429
      %684 = vmatpush1.msra.mxu0 %v428
      %685 = vmatprep.subr.mxu0 0.0
      %686 = vmatpush2.msra.mxu0 0.0
      %687 = vmatprep.subr.mxu0 0.0
      %688 = vmatpush2.msra.mxu0 0.0
      %689 = vmatprep.subr.mxu0 0.0
      %690 = vmatpush2.msra.mxu0 0.0
      %691 = vmatprep.subr.mxu0 0.0
      %692 = vmatpush2.msra.mxu0 0.0
      %693 = vmatprep.subr.mxu0 0.0
      %694 = vmatpush2.msra.mxu0 0.0
      %695 = vmatprep.subr.mxu0 0.0
      %696 = vmatpush2.msra.mxu0 0.0
      %697 = vmatprep.subr.mxu0 0.0
      %698 = vmatpush2.msra.mxu0 0.0
      %699 = vmatprep.subr.mxu0 0.0
      %700 = vmatpush2.msra.mxu0 0.0
      %701 = vmatprep.subr.mxu0 0.0
      %702 = vmatpush2.msra.mxu0 0.0
      %703 = vmatprep.subr.mxu0 0.0
      %704 = vmatpush2.msra.mxu0 0.0
      %705 = vmatprep.subr.mxu0 0.0
      %706 = vmatpush2.msra.mxu0 0.0
      %707 = vmatprep.subr.mxu0 0.0
      %708 = vmatpush2.msra.mxu0 0.0
      %709 = vmatprep.subr.mxu0 0.0
      %710 = vmatpush2.msra.mxu0 0.0
      %711 = vmatprep.subr.mxu0 0.0
      %712 = vmatpush2.msra.mxu0 0.0
      %713 = vmatprep.subr.mxu0 0.0
      %714 = vmatpush2.msra.mxu0 0.0
      %715 = vmatprep.subr.mxu0 0.0
      %716 = vmatpush2.msra.mxu0 0.0
      %717 = vmatprep.mubr.f32.mxu0 0.0
      %718 = vmatmul.mubr.f32.gmra.mxu0 %v348
      %v719 = vpop.f32.mrf.mxu0
      %v720 = vadd.f32 %v559, %v719
      %v721 = vpop.f32.mrf.mxu0
      %v722 = vadd.f32 %v561, %v721
      %723 = vmatprep.mubr.f32.mxu0 0.0
      %724 = vmatmul.mubr.f32.gmra.mxu0 %v349
      %v725 = vpop.f32.mrf.mxu0
      %v726 = vadd.f32 %v565, %v725
      %v727 = vpop.f32.mrf.mxu0
      %v728 = vadd.f32 %v567, %v727
      %729 = vmatprep.mubr.f32.mxu0 0.0
      %730 = vmatmul.mubr.f32.gmra.mxu0 %v350
      %v731 = vpop.f32.mrf.mxu0
      %v732 = vadd.f32 %v571, %v731
      %v733 = vpop.f32.mrf.mxu0
      %v734 = vadd.f32 %v573, %v733
      %735 = vmatprep.mubr.f32.mxu0 0.0
      %736 = vmatmul.mubr.f32.gmra.mxu0 %v351
      %v737 = vpop.f32.mrf.mxu0
      %v738 = vadd.f32 %v577, %v737
      %v739 = vpop.f32.mrf.mxu0
      %v740 = vadd.f32 %v579, %v739
      %741 = vmatprep.mubr.f32.mxu0 0.0
      %742 = vmatmul.mubr.f32.gmra.mxu0 %v352
      %v743 = vpop.f32.mrf.mxu0
      %v744 = vadd.f32 %v583, %v743
      %v745 = vpop.f32.mrf.mxu0
      %v746 = vadd.f32 %v585, %v745
      %747 = vmatprep.mubr.f32.mxu0 0.0
      %748 = vmatmul.mubr.f32.gmra.mxu0 %v353
      %v749 = vpop.f32.mrf.mxu0
      %v750 = vadd.f32 %v589, %v749
      %v751 = vpop.f32.mrf.mxu0
      %v752 = vadd.f32 %v591, %v751
      %753 = vmatprep.mubr.f32.mxu0 0.0
      %754 = vmatmul.mubr.f32.gmra.mxu0 %v354
      %v755 = vpop.f32.mrf.mxu0
      %v756 = vadd.f32 %v595, %v755
      %v757 = vpop.f32.mrf.mxu0
      %v758 = vadd.f32 %v597, %v757
      %759 = vmatprep.mubr.f32.mxu0 0.0
      %760 = vmatmul.mubr.f32.gmra.mxu0 %v355
      %v761 = vpop.f32.mrf.mxu0
      %v762 = vadd.f32 %v601, %v761
      %v763 = vpop.f32.mrf.mxu0
      %v764 = vadd.f32 %v603, %v763
      %765 = vmatprep.mubr.f32.mxu0 0.0
      %766 = vmatmul.mubr.f32.gmra.mxu0 %v356
      %v767 = vpop.f32.mrf.mxu0
      %v768 = vadd.f32 %v607, %v767
      %v769 = vpop.f32.mrf.mxu0
      %v770 = vadd.f32 %v609, %v769
      %771 = vmatprep.mubr.f32.mxu0 0.0
      %772 = vmatmul.mubr.f32.gmra.mxu0 %v357
      %v773 = vpop.f32.mrf.mxu0
      %v774 = vadd.f32 %v613, %v773
      %v775 = vpop.f32.mrf.mxu0
      %v776 = vadd.f32 %v615, %v775
      %777 = vmatprep.mubr.f32.mxu0 0.0
      %778 = vmatmul.mubr.f32.gmra.mxu0 %v358
      %v779 = vpop.f32.mrf.mxu0
      %v780 = vadd.f32 %v619, %v779
      %v781 = vpop.f32.mrf.mxu0
      %v782 = vadd.f32 %v621, %v781
      %783 = vmatprep.mubr.f32.mxu0 0.0
      %784 = vmatmul.mubr.f32.gmra.mxu0 %v359
      %v785 = vpop.f32.mrf.mxu0
      %v786 = vadd.f32 %v625, %v785
      %v787 = vpop.f32.mrf.mxu0
      %v788 = vadd.f32 %v627, %v787
      %789 = vmatprep.mubr.f32.mxu0 0.0
      %790 = vmatmul.mubr.f32.gmra.mxu0 %v360
      %v791 = vpop.f32.mrf.mxu0
      %v792 = vadd.f32 %v631, %v791
      %v793 = vpop.f32.mrf.mxu0
      %v794 = vadd.f32 %v633, %v793
      %795 = vmatprep.mubr.f32.mxu0 0.0
      %796 = vmatmul.mubr.f32.gmra.mxu0 %v361
      %v797 = vpop.f32.mrf.mxu0
      %v798 = vadd.f32 %v637, %v797
      %v799 = vpop.f32.mrf.mxu0
      %v800 = vadd.f32 %v639, %v799
      %801 = vmatprep.mubr.f32.mxu0 0.0
      %802 = vmatmul.mubr.f32.gmra.mxu0 %v362
      %v803 = vpop.f32.mrf.mxu0
      %v804 = vadd.f32 %v643, %v803
      %v805 = vpop.f32.mrf.mxu0
      %v806 = vadd.f32 %v645, %v805
      %807 = vmatprep.mubr.f32.mxu0 0.0
      %808 = vmatmul.mubr.f32.gmra.mxu0 %v363
      %v809 = vpop.f32.mrf.mxu0
      %v810 = vadd.f32 %v649, %v809
      %v811 = vpop.f32.mrf.mxu0
      %v812 = vadd.f32 %v651, %v811
      %813 = vdwg.mxu0
      %v814 = vld [vmem:[%s5] sm:$0x3]
      %v816 = vlaneseq
      %v817 = vshrl.u32 %v816, 7
      %v818 = vsub.s32 0, %v817
      %v819 = vrot.slane %v814, %v818
      %v820 = vlaneseq
      %v821 = vshrl.u32 %v820, 7
      %v822 = vsub.s32 1, %v821
      %v823 = vrot.slane %v814, %v822
      %v826 = vadd.f32 %v720, %v819
      %v827 = vadd.f32 %v722, %v823
      %v828 = vadd.f32 %v726, %v819
      %v829 = vadd.f32 %v728, %v823
      %v830 = vadd.f32 %v732, %v819
      %v831 = vadd.f32 %v734, %v823
      %v832 = vadd.f32 %v738, %v819
      %v833 = vadd.f32 %v740, %v823
      %v834 = vadd.f32 %v744, %v819
      %v835 = vadd.f32 %v746, %v823
      %v836 = vadd.f32 %v750, %v819
      %v837 = vadd.f32 %v752, %v823
      %v838 = vadd.f32 %v756, %v819
      %v839 = vadd.f32 %v758, %v823
      %v840 = vadd.f32 %v762, %v819
      %v841 = vadd.f32 %v764, %v823
      %v842 = vadd.f32 %v768, %v819
      %v843 = vadd.f32 %v770, %v823
      %v844 = vadd.f32 %v774, %v819
      %v845 = vadd.f32 %v776, %v823
      %v846 = vadd.f32 %v780, %v819
      %v847 = vadd.f32 %v782, %v823
      %v848 = vadd.f32 %v786, %v819
      %v849 = vadd.f32 %v788, %v823
      %v850 = vadd.f32 %v792, %v819
      %v851 = vadd.f32 %v794, %v823
      %v852 = vadd.f32 %v798, %v819
      %v853 = vadd.f32 %v800, %v823
      %v854 = vadd.f32 %v804, %v819
      %v855 = vadd.f32 %v806, %v823
      %v856 = vadd.f32 %v810, %v819
      %v857 = vadd.f32 %v812, %v823
      %v858 = vxor.u32 %v826, 2147483648
      %v859 = vxor.u32 %v828, 2147483648
      %v860 = vxor.u32 %v830, 2147483648
      %v861 = vxor.u32 %v832, 2147483648
      %v862 = vxor.u32 %v834, 2147483648
      %v863 = vxor.u32 %v836, 2147483648
      %v864 = vxor.u32 %v838, 2147483648
      %v865 = vxor.u32 %v840, 2147483648
      %v866 = vxor.u32 %v842, 2147483648
      %v867 = vxor.u32 %v844, 2147483648
      %v868 = vxor.u32 %v846, 2147483648
      %v869 = vxor.u32 %v848, 2147483648
      %v870 = vxor.u32 %v850, 2147483648
      %v871 = vxor.u32 %v852, 2147483648
      %v872 = vxor.u32 %v854, 2147483648
      %v873 = vxor.u32 %v856, 2147483648
      %v874 = vmul.f32 %v858, 1.442695
      %v875 = vpow.pop %v874
      %v876 = vmul.f32 %v859, 1.442695
      %v877 = vpow.pop %v876
      %v878 = vmul.f32 %v860, 1.442695
      %v879 = vpow.pop %v878
      %v880 = vmul.f32 %v861, 1.442695
      %v881 = vpow.pop %v880
      %v882 = vmul.f32 %v862, 1.442695
      %v883 = vpow.pop %v882
      %v884 = vmul.f32 %v863, 1.442695
      %v885 = vpow.pop %v884
      %v886 = vmul.f32 %v864, 1.442695
      %v887 = vpow.pop %v886
      %v888 = vmul.f32 %v865, 1.442695
      %v889 = vpow.pop %v888
      %v890 = vmul.f32 %v866, 1.442695
      %v891 = vpow.pop %v890
      %v892 = vmul.f32 %v867, 1.442695
      %v893 = vpow.pop %v892
      %v894 = vmul.f32 %v868, 1.442695
      %v895 = vpow.pop %v894
      %v896 = vmul.f32 %v869, 1.442695
      %v897 = vpow.pop %v896
      %v898 = vmul.f32 %v870, 1.442695
      %v899 = vpow.pop %v898
      %v900 = vmul.f32 %v871, 1.442695
      %v901 = vpow.pop %v900
      %v902 = vmul.f32 %v872, 1.442695
      %v903 = vpow.pop %v902
      %v904 = vmul.f32 %v873, 1.442695
      %v905 = vpow.pop %v904
      %v906 = vadd.f32 %v875, 1.0
      %v907 = vadd.f32 %v877, 1.0
      %v908 = vadd.f32 %v879, 1.0
      %v909 = vadd.f32 %v881, 1.0
      %v910 = vadd.f32 %v883, 1.0
      %v911 = vadd.f32 %v885, 1.0
      %v912 = vadd.f32 %v887, 1.0
      %v913 = vadd.f32 %v889, 1.0
      %v914 = vadd.f32 %v891, 1.0
      %v915 = vadd.f32 %v893, 1.0
      %v916 = vadd.f32 %v895, 1.0
      %v917 = vadd.f32 %v897, 1.0
      %v918 = vadd.f32 %v899, 1.0
      %v919 = vadd.f32 %v901, 1.0
      %v920 = vadd.f32 %v903, 1.0
      %v921 = vadd.f32 %v905, 1.0
      %v922 = vrcp.pop %v906
      %v923 = vmul.f32 1.0, %v922
      %v924 = vrcp.pop %v907
      %v925 = vmul.f32 1.0, %v924
      %v926 = vrcp.pop %v908
      %v927 = vmul.f32 1.0, %v926
      %v928 = vrcp.pop %v909
      %v929 = vmul.f32 1.0, %v928
      %v930 = vrcp.pop %v910
      %v931 = vmul.f32 1.0, %v930
      %v932 = vrcp.pop %v911
      %v933 = vmul.f32 1.0, %v932
      %v934 = vrcp.pop %v912
      %v935 = vmul.f32 1.0, %v934
      %v936 = vrcp.pop %v913
      %v937 = vmul.f32 1.0, %v936
      %v938 = vrcp.pop %v914
      %v939 = vmul.f32 1.0, %v938
      %v940 = vrcp.pop %v915
      %v941 = vmul.f32 1.0, %v940
      %v942 = vrcp.pop %v916
      %v943 = vmul.f32 1.0, %v942
      %v944 = vrcp.pop %v917
      %v945 = vmul.f32 1.0, %v944
      %v946 = vrcp.pop %v918
      %v947 = vmul.f32 1.0, %v946
      %v948 = vrcp.pop %v919
      %v949 = vmul.f32 1.0, %v948
      %v950 = vrcp.pop %v920
      %v951 = vmul.f32 1.0, %v950
      %v952 = vrcp.pop %v921
      %v953 = vmul.f32 1.0, %v952
      %v954 = vtanh.pop %v827
      %v955 = vtanh.pop %v829
      %v956 = vtanh.pop %v831
      %v957 = vtanh.pop %v833
      %v958 = vtanh.pop %v835
      %v959 = vtanh.pop %v837
      %v960 = vtanh.pop %v839
      %v961 = vtanh.pop %v841
      %v962 = vtanh.pop %v843
      %v963 = vtanh.pop %v845
      %v964 = vtanh.pop %v847
      %v965 = vtanh.pop %v849
      %v966 = vtanh.pop %v851
      %v967 = vtanh.pop %v853
      %v968 = vtanh.pop %v855
      %v969 = vtanh.pop %v857
      %v970 = vmul.f32 %v348, %v923
      %v971 = vmul.f32 %v349, %v925
      %v972 = vmul.f32 %v350, %v927
      %v973 = vmul.f32 %v351, %v929
      %v974 = vmul.f32 %v352, %v931
      %v975 = vmul.f32 %v353, %v933
      %v976 = vmul.f32 %v354, %v935
      %v977 = vmul.f32 %v355, %v937
      %v978 = vmul.f32 %v356, %v939
      %v979 = vmul.f32 %v357, %v941
      %v980 = vmul.f32 %v358, %v943
      %v981 = vmul.f32 %v359, %v945
      %v982 = vmul.f32 %v360, %v947
      %v983 = vmul.f32 %v361, %v949
      %v984 = vmul.f32 %v362, %v951
      %v985 = vmul.f32 %v363, %v953
      %v986 = vsub.f32 1.0, %v923
      %v987 = vsub.f32 1.0, %v925
      %v988 = vsub.f32 1.0, %v927
      %v989 = vsub.f32 1.0, %v929
      %v990 = vsub.f32 1.0, %v931
      %v991 = vsub.f32 1.0, %v933
      %v992 = vsub.f32 1.0, %v935
      %v993 = vsub.f32 1.0, %v937
      %v994 = vsub.f32 1.0, %v939
      %v995 = vsub.f32 1.0, %v941
      %v996 = vsub.f32 1.0, %v943
      %v997 = vsub.f32 1.0, %v945
      %v998 = vsub.f32 1.0, %v947
      %v999 = vsub.f32 1.0, %v949
      %v1000 = vsub.f32 1.0, %v951
      %v1001 = vsub.f32 1.0, %v953
      %v1002 = vmul.f32 %v954, %v986
      %v1003 = vmul.f32 %v955, %v987
      %v1004 = vmul.f32 %v956, %v988
      %v1005 = vmul.f32 %v957, %v989
      %v1006 = vmul.f32 %v958, %v990
      %v1007 = vmul.f32 %v959, %v991
      %v1008 = vmul.f32 %v960, %v992
      %v1009 = vmul.f32 %v961, %v993
      %v1010 = vmul.f32 %v962, %v994
      %v1011 = vmul.f32 %v963, %v995
      %v1012 = vmul.f32 %v964, %v996
      %v1013 = vmul.f32 %v965, %v997
      %v1014 = vmul.f32 %v966, %v998
      %v1015 = vmul.f32 %v967, %v999
      %v1016 = vmul.f32 %v968, %v1000
      %v1017 = vmul.f32 %v969, %v1001
      %v1018 = vadd.f32 %v970, %v1002
      %v1019 = vadd.f32 %v971, %v1003
      %v1020 = vadd.f32 %v972, %v1004
      %v1021 = vadd.f32 %v973, %v1005
      %v1022 = vadd.f32 %v974, %v1006
      %v1023 = vadd.f32 %v975, %v1007
      %v1024 = vadd.f32 %v976, %v1008
      %v1025 = vadd.f32 %v977, %v1009
      %v1026 = vadd.f32 %v978, %v1010
      %v1027 = vadd.f32 %v979, %v1011
      %v1028 = vadd.f32 %v980, %v1012
      %v1029 = vadd.f32 %v981, %v1013
      %v1030 = vadd.f32 %v982, %v1014
      %v1031 = vadd.f32 %v983, %v1015
      %v1032 = vadd.f32 %v984, %v1016
      %v1033 = vadd.f32 %v985, %v1017
      %1034 = vst [vmem:[%s346] sm:$0xff] %v1018
      %1035 = vst [vmem:[%s346 + $0x8] sm:$0xff] %v1019
      %1036 = vst [vmem:[%s346 + $0x10] sm:$0xff] %v1020
      %1037 = vst [vmem:[%s346 + $0x18] sm:$0xff] %v1021
      %1038 = vst [vmem:[%s346 + $0x20] sm:$0xff] %v1022
      %1039 = vst [vmem:[%s346 + $0x28] sm:$0xff] %v1023
      %1040 = vst [vmem:[%s346 + $0x30] sm:$0xff] %v1024
      %1041 = vst [vmem:[%s346 + $0x38] sm:$0xff] %v1025
      %1042 = vst [vmem:[%s346 + $0x40] sm:$0xff] %v1026
      %1043 = vst [vmem:[%s346 + $0x48] sm:$0xff] %v1027
      %1044 = vst [vmem:[%s346 + $0x50] sm:$0xff] %v1028
      %1045 = vst [vmem:[%s346 + $0x58] sm:$0xff] %v1029
      %1046 = vst [vmem:[%s346 + $0x60] sm:$0xff] %v1030
      %1047 = vst [vmem:[%s346 + $0x68] sm:$0xff] %v1031
      %1048 = vst [vmem:[%s346 + $0x70] sm:$0xff] %v1032
      %1049 = vst [vmem:[%s346 + $0x78] sm:$0xff] %v1033
      %p1050 = scmp.eq.s32.totalorder %s20, 0
      // Predicated region
      $region45: #{node_update_forward.9} parent=43 // pred_check
        %p1051 = pneg %p1050
      $region46: #{node_update_forward.9} parent=43 // pred_check_branch
        %1053 = sbr.rel (%p1051) target = $region48
      $region47: #{node_update_forward.9} parent=43 // pred_region
        %1054 = vst [vmem:[%s7] sm:$0x1] 0.0
        %1055 = vst [vmem:[%s8] sm:$0x1] 0.0
      $region48: #{node_update_forward.9} parent=43 // pred_fallthru
        _
      %v1056 = vld [vmem:[%s7] sm:$0x1]
      %v1057 = vadd.f32 %v1018, %v1019
      %v1058 = vadd.f32 %v1057, %v1020
      %v1059 = vadd.f32 %v1058, %v1021
      %v1060 = vadd.f32 %v1059, %v1022
      %v1061 = vadd.f32 %v1060, %v1023
      %v1062 = vadd.f32 %v1061, %v1024
      %v1063 = vadd.f32 %v1062, %v1025
      %v1064 = vadd.f32 %v1063, %v1026
      %v1065 = vadd.f32 %v1064, %v1027
      %v1066 = vadd.f32 %v1065, %v1028
      %v1067 = vadd.f32 %v1066, %v1029
      %v1068 = vadd.f32 %v1067, %v1030
      %v1069 = vadd.f32 %v1068, %v1031
      %v1070 = vadd.f32 %v1069, %v1032
      %v1071 = vadd.f32 %v1070, %v1033
      %v1072 = vrot.slane %v1071, 4
      %v1073 = vadd.f32 %v1071, %v1072
      %v1074 = vrot.slane %v1073, 2
      %v1075 = vadd.f32 %v1073, %v1074
      %v1076 = vrot.slane %v1075, 1
      %v1077 = vadd.f32 %v1075, %v1076
      %v1078 = vadd.f32 %v1056, %v1077
      %1079 = vst [vmem:[%s7] sm:$0x1] %v1078
      %v1080 = vld [vmem:[%s8] sm:$0x1]
      %v1081 = vmul.f32 %v1018, %v1018
      %v1082 = vmul.f32 %v1019, %v1019
      %v1083 = vmul.f32 %v1020, %v1020
      %v1084 = vmul.f32 %v1021, %v1021
      %v1085 = vmul.f32 %v1022, %v1022
      %v1086 = vmul.f32 %v1023, %v1023
      %v1087 = vmul.f32 %v1024, %v1024
      %v1088 = vmul.f32 %v1025, %v1025
      %v1089 = vmul.f32 %v1026, %v1026
      %v1090 = vmul.f32 %v1027, %v1027
      %v1091 = vmul.f32 %v1028, %v1028
      %v1092 = vmul.f32 %v1029, %v1029
      %v1093 = vmul.f32 %v1030, %v1030
      %v1094 = vmul.f32 %v1031, %v1031
      %v1095 = vmul.f32 %v1032, %v1032
      %v1096 = vmul.f32 %v1033, %v1033
      %v1097 = vadd.f32 %v1081, %v1082
      %v1098 = vadd.f32 %v1097, %v1083
      %v1099 = vadd.f32 %v1098, %v1084
      %v1100 = vadd.f32 %v1099, %v1085
      %v1101 = vadd.f32 %v1100, %v1086
      %v1102 = vadd.f32 %v1101, %v1087
      %v1103 = vadd.f32 %v1102, %v1088
      %v1104 = vadd.f32 %v1103, %v1089
      %v1105 = vadd.f32 %v1104, %v1090
      %v1106 = vadd.f32 %v1105, %v1091
      %v1107 = vadd.f32 %v1106, %v1092
      %v1108 = vadd.f32 %v1107, %v1093
      %v1109 = vadd.f32 %v1108, %v1094
      %v1110 = vadd.f32 %v1109, %v1095
      %v1111 = vadd.f32 %v1110, %v1096
      %v1112 = vrot.slane %v1111, 4
      %v1113 = vadd.f32 %v1111, %v1112
      %v1114 = vrot.slane %v1113, 2
      %v1115 = vadd.f32 %v1113, %v1114
      %v1116 = vrot.slane %v1115, 1
      %v1117 = vadd.f32 %v1115, %v1116
      %v1118 = vadd.f32 %v1080, %v1117
      %1119 = vst [vmem:[%s8] sm:$0x1] %v1118
      %s1120 = smul.u32 16, %s20
      %p1121 = scmp.lt.s32.totalorder %s1120, 63
      %s1122 = scalar_select %p1121, %s1120, 63
      %s1123 = smul.addr %s1122, 8
      %s1124 = scalar_lea.vmem %s6, %s1123
      // Predicated region
      $region49: #{node_update_forward.9} parent=43 // pred_check
        %p1125 = pneg %p179
      $region50: #{node_update_forward.9} parent=43 // pred_check_branch
        %1127 = sbr.rel (%p1125) target = $region52
      $region51: #{node_update_forward.9} parent=43 // pred_region
        %s1128 = smul.u32 16, %s20
      $region52: #{node_update_forward.9} parent=43 // pred_fallthru
        _
      // Predicated region
      $region53: #{node_update_forward.9} parent=43 // pred_check
        %p1129 = pneg %p200
      $region54: #{node_update_forward.9} parent=43 // pred_check_branch
        %1131 = sbr.rel (%p1129) target = $region56
      $region55: #{node_update_forward.9} parent=43 // pred_region
        _
      $region56: #{node_update_forward.9} parent=43 // pred_fallthru
        _
      // Predicated region
      $region57: #{node_update_forward.9} parent=43 // pred_check
        %p1132 = pneg %p221
      $region58: #{node_update_forward.9} parent=43 // pred_check_branch
        %1134 = sbr.rel (%p1132) target = $region60
      $region59: #{node_update_forward.9} parent=43 // pred_region
        _
      $region60: #{node_update_forward.9} parent=43 // pred_fallthru
        _
      // Predicated region
      $region61: #{node_update_forward.9} parent=43 // pred_check
        %p1135 = pneg %p200
      $region62: #{node_update_forward.9} parent=43 // pred_check_branch
        %1137 = sbr.rel (%p1135) target = $region64
      $region63: #{node_update_forward.9} parent=43 // pred_region
        _
      $region64: #{node_update_forward.9} parent=43 // pred_fallthru
        _
      // Predicated region
      $region65: #{node_update_forward.9} parent=43 // pred_check
        %p1138 = pneg %p221
      $region66: #{node_update_forward.9} parent=43 // pred_check_branch
        %1140 = sbr.rel (%p1138) target = $region68
      $region67: #{node_update_forward.9} parent=43 // pred_region
        _
      $region68: #{node_update_forward.9} parent=43 // pred_fallthru
        _
    $region44: #{node_update_forward.9} parent=5 // pred_fallthru
      _
    %p1141 = scmp.le.s32.totalorder 2, %s15
    // Predicated region
    $region69: #{node_update_forward.9} parent=5 // pred_check
      %p1142 = pneg %p1141
    $region70: #{node_update_forward.9} parent=5 // pred_check_branch
      %1144 = sbr.rel (%p1142) target = $region72
    $region71: #{node_update_forward.9} parent=5 // pred_region
      %s1145 = ssub.s32 %s15, 2
      // Predicated region
      $region73: #{node_update_forward.9} parent=71 // pred_check
        %p1146 = pneg %p185
      $region74: #{node_update_forward.9} parent=71 // pred_check_branch
        %1148 = sbr.rel (%p1146) target = $region76
      $region75: #{node_update_forward.9} parent=71 // pred_region
        %s1149 = smul.u32 16, %s21
        %p1150 = scmp.lt.s32.totalorder %s1149, 63
        %s1151 = scalar_select %p1150, %s1149, 63
        %s1152 = smul.addr %s1151, 8
        %s1153 = scalar_lea.vmem %s6, %s1152
      $region76: #{node_update_forward.9} parent=71 // pred_fallthru
        _
    $region72: #{node_update_forward.9} parent=5 // pred_fallthru
      _
  $region6: #{node_update_forward.9} parent=0 // loop_footer
    %s19 = sadd.s32 1, %s15
  $region7: #{node_update_forward.9} parent=0 // loop_footer_branch
    %14 = sbr.rel target = $region3
  $region8: #{node_update_forward.9} parent=0 // loop_exit
    _

// kernel: node_update_forward.11
$region0: #{node_update_forward.11}
  #allocation0 [shape = 'u32[]', space=smem, size = 0x4, offset = 0x4, fixed_abs, tag = 'smem constant byte address 0x4 - core index']
  #allocation1 [shape = 'u32[144,128]{1,0:T(1,128)}', space=vmem, size = 0x12000, scoped, tag = 'internal scratch']
  %s0 = inlined_call_operand.vmem [shape: f32[512,128], index: 0, kind: input, shape index: {}]
  %s1 = inlined_call_operand.vmem [shape: f32[512,128], index: 1, kind: input, shape index: {}]
  %s2 = inlined_call_operand.vmem [shape: f32[1,128], index: 2, kind: input, shape index: {}]
  %s3 = inlined_call_operand.vmem [shape: f32[1,128], index: 3, kind: input, shape index: {}]
  %s4 = inlined_call_operand.vmem [shape: f32[512,128], index: 4, kind: output, shape index: {}]
  %s5 = sld [smem:[#allocation0]]
  $region49: #{node_update_forward.11} parent=0
    _
  %s7 = ssub.s32 1, %s5
  %s8 = scalar_select 0, %s7, %s5
  loop: start=0, step=1, limit=6
  $region2: #{node_update_forward.11} parent=0 // loop_pre_header
    _
  $region3: #{node_update_forward.11} parent=0 // loop_header
    %s10 = sphi 0, %s14
    %p11 = scmp.ge.s32.totalorder %s10, 6
    %s20 = sphi 0, %s22
    %s23 = sphi 0, %s20
    %s24 = sphi 0, %s23
    %s40 = sphi 0, %s24
    %s46 = sphi 0, %s48
    %s49 = sphi 0, %s46
    %s50 = sphi 0, %s49
    %s66 = sphi 0, %s50
    %s70 = sphi 0, %s70
    %s72 = sphi 0, %s70
    %s73 = sphi 0, %s72
    %s87 = sphi 0, %s73
    %s91 = sphi 0, %s91
    %s93 = sphi 0, %s91
    %s94 = sphi 0, %s93
    %s108 = sphi 0, %s94
    %s114 = sphi 0, %s116
    %s117 = sphi 0, %s114
    %s118 = sphi 0, %s117
    %s134 = sphi 0, %s118
  $region4: #{node_update_forward.11} parent=0 // loop_header_branch
    %13 = sbr.rel (%p11) target = $region8
  $region5: #{node_update_forward.11} parent=0 // loop_body
    %s15 = ssub.s32 %s10, 1
    %s16 = ssub.s32 %s10, 2
    %s17 = sadd.s32 %s10, 1
    %s18 = ssub.s32 %s10, %s17
    %p19 = scmp.eq.s32.totalorder %s18, 0
    %s21 = sadd.s32 %s20, 1
    %s22 = scalar_select %p19, %s20, %s21
    %p25 = pneg %p19
    %p26 = scmp.eq.s32.totalorder %s10, 3
    %p27 = por %p25, %p26
    %p28 = scmp.ne.s32.totalorder %s20, %s23
    %p29 = scmp.eq.s32.totalorder %s10, 0
    %p30 = por %p28, %p29
    %p31 = scmp.ne.s32.totalorder %s20, %s23
    %p32 = scmp.eq.s32.totalorder %s15, 3
    %p33 = por %p31, %p32
    %p34 = scmp.ne.s32.totalorder %s23, %s24
    %p35 = scmp.eq.s32.totalorder %s15, 0
    %p36 = por %p34, %p35
    %p37 = scmp.ne.s32.totalorder %s23, %s24
    %p38 = scmp.eq.s32.totalorder %s16, 3
    %p39 = por %p37, %p38
    %p41 = scmp.ne.s32.totalorder %s24, %s40
    %p42 = scmp.eq.s32.totalorder %s16, 0
    %p43 = por %p41, %p42
    %s44 = ssub.s32 %s10, %s17
    %p45 = scmp.eq.s32.totalorder %s44, 0
    %s47 = sadd.s32 %s46, 1
    %s48 = scalar_select %p45, %s46, %s47
    %p51 = pneg %p45
    %p52 = scmp.eq.s32.totalorder %s10, 3
    %p53 = por %p51, %p52
    %p54 = scmp.ne.s32.totalorder %s46, %s49
    %p55 = scmp.eq.s32.totalorder %s10, 0
    %p56 = por %p54, %p55
    %p57 = scmp.ne.s32.totalorder %s46, %s49
    %p58 = scmp.eq.s32.totalorder %s15, 3
    %p59 = por %p57, %p58
    %p60 = scmp.ne.s32.totalorder %s49, %s50
    %p61 = scmp.eq.s32.totalorder %s15, 0
    %p62 = por %p60, %p61
    %p63 = scmp.ne.s32.totalorder %s49, %s50
    %p64 = scmp.eq.s32.totalorder %s16, 3
    %p65 = por %p63, %p64
    %p67 = scmp.ne.s32.totalorder %s50, %s66
    %p68 = scmp.eq.s32.totalorder %s16, 0
    %p69 = por %p67, %p68
    %s71 = sadd.s32 %s70, 1
    %p74 = scmp.eq.s32.totalorder %s10, 3
    %p75 = scmp.ne.s32.totalorder %s70, %s72
    %p76 = scmp.eq.s32.totalorder %s10, 0
    %p77 = por %p75, %p76
    %p78 = scmp.ne.s32.totalorder %s70, %s72
    %p79 = scmp.eq.s32.totalorder %s15, 3
    %p80 = por %p78, %p79
    %p81 = scmp.ne.s32.totalorder %s72, %s73
    %p82 = scmp.eq.s32.totalorder %s15, 0
    %p83 = por %p81, %p82
    %p84 = scmp.ne.s32.totalorder %s72, %s73
    %p85 = scmp.eq.s32.totalorder %s16, 3
    %p86 = por %p84, %p85
    %p88 = scmp.ne.s32.totalorder %s73, %s87
    %p89 = scmp.eq.s32.totalorder %s16, 0
    %p90 = por %p88, %p89
    %s92 = sadd.s32 %s91, 1
    %p95 = scmp.eq.s32.totalorder %s10, 3
    %p96 = scmp.ne.s32.totalorder %s91, %s93
    %p97 = scmp.eq.s32.totalorder %s10, 0
    %p98 = por %p96, %p97
    %p99 = scmp.ne.s32.totalorder %s91, %s93
    %p100 = scmp.eq.s32.totalorder %s15, 3
    %p101 = por %p99, %p100
    %p102 = scmp.ne.s32.totalorder %s93, %s94
    %p103 = scmp.eq.s32.totalorder %s15, 0
    %p104 = por %p102, %p103
    %p105 = scmp.ne.s32.totalorder %s93, %s94
    %p106 = scmp.eq.s32.totalorder %s16, 3
    %p107 = por %p105, %p106
    %p109 = scmp.ne.s32.totalorder %s94, %s108
    %p110 = scmp.eq.s32.totalorder %s16, 0
    %p111 = por %p109, %p110
    %s112 = ssub.s32 %s10, %s17
    %p113 = scmp.eq.s32.totalorder %s112, 0
    %s115 = sadd.s32 %s114, 1
    %s116 = scalar_select %p113, %s114, %s115
    %p119 = pneg %p113
    %p120 = scmp.eq.s32.totalorder %s10, 3
    %p121 = por %p119, %p120
    %p122 = scmp.ne.s32.totalorder %s114, %s117
    %p123 = scmp.eq.s32.totalorder %s10, 0
    %p124 = por %p122, %p123
    %p125 = scmp.ne.s32.totalorder %s114, %s117
    %p126 = scmp.eq.s32.totalorder %s15, 3
    %p127 = por %p125, %p126
    %p128 = scmp.ne.s32.totalorder %s117, %s118
    %p129 = scmp.eq.s32.totalorder %s15, 0
    %p130 = por %p128, %p129
    %p131 = scmp.ne.s32.totalorder %s117, %s118
    %p132 = scmp.eq.s32.totalorder %s16, 3
    %p133 = por %p131, %p132
    %p135 = scmp.ne.s32.totalorder %s118, %s134
    %p136 = scmp.eq.s32.totalorder %s16, 0
    %p137 = por %p135, %p136
    %p138 = scmp.le.s32.totalorder 1, %s10
    %p139 = scmp.lt.s32.totalorder %s10, 5
    %p140 = pnand %p138, %p139
    %p141 = pneg %p140
    // Predicated region
    $region9: #{node_update_forward.11} parent=5 // pred_check
      _
    $region10: #{node_update_forward.11} parent=5 // pred_check_branch
      %143 = sbr.rel (%p140) target = $region12
    $region11: #{node_update_forward.11} parent=5 // pred_region
      %s144 = ssub.s32 %s10, 1
      // Predicated region
      $region13: #{node_update_forward.11} parent=11 // pred_check
        %p145 = pneg %p83
      $region14: #{node_update_forward.11} parent=11 // pred_check_branch
        %147 = sbr.rel (%p145) target = $region16
      $region15: #{node_update_forward.11} parent=11 // pred_region
        _
      $region16: #{node_update_forward.11} parent=11 // pred_fallthru
        _
      // Predicated region
      $region17: #{node_update_forward.11} parent=11 // pred_check
        %p148 = pneg %p104
      $region18: #{node_update_forward.11} parent=11 // pred_check_branch
        %150 = sbr.rel (%p148) target = $region20
      $region19: #{node_update_forward.11} parent=11 // pred_region
        _
      $region20: #{node_update_forward.11} parent=11 // pred_fallthru
        _
    $region12: #{node_update_forward.11} parent=5 // pred_fallthru
      _
    %p151 = scmp.lt.s32.totalorder %s10, 4
    // Predicated region
    $region21: #{node_update_forward.11} parent=5 // pred_check
      %p152 = pneg %p151
    $region22: #{node_update_forward.11} parent=5 // pred_check_branch
      %154 = sbr.rel (%p152) target = $region24
    $region23: #{node_update_forward.11} parent=5 // pred_region
      // Predicated region
      $region25: #{node_update_forward.11} parent=23 // pred_check
        %p155 = pneg %p30
      $region26: #{node_update_forward.11} parent=23 // pred_check_branch
        %157 = sbr.rel (%p155) target = $region28
      $region27: #{node_update_forward.11} parent=23 // pred_region
        %s158 = smul.u32 16, %s10
        %p159 = scmp.lt.s32.totalorder %s158, 63
        %s160 = scalar_select %p159, %s158, 63
        %s161 = smul.addr %s160, 8
        %s162 = scalar_lea.vmem %s0, %s161
        %s163 = smul.u32 16, %s10
      $region28: #{node_update_forward.11} parent=23 // pred_fallthru
        _
      // Predicated region
      $region29: #{node_update_forward.11} parent=23 // pred_check
        %p164 = pneg %p56
      $region30: #{node_update_forward.11} parent=23 // pred_check_branch
        %166 = sbr.rel (%p164) target = $region32
      $region31: #{node_update_forward.11} parent=23 // pred_region
        %s167 = smul.u32 16, %s10
        %p168 = scmp.lt.s32.totalorder %s167, 63
        %s169 = scalar_select %p168, %s167, 63
        %s170 = smul.addr %s169, 8
        %s171 = scalar_lea.vmem %s1, %s170
        %s172 = smul.u32 16, %s10
      $region32: #{node_update_forward.11} parent=23 // pred_fallthru
        _
    $region24: #{node_update_forward.11} parent=5 // pred_fallthru
      _
    %p173 = scmp.le.s32.totalorder 1, %s10
    %p174 = scmp.lt.s32.totalorder %s10, 5
    %p175 = pnand %p173, %p174
    %p176 = pneg %p175
    // Predicated region
    $region33: #{node_update_forward.11} parent=5 // pred_check
      _
    $region34: #{node_update_forward.11} parent=5 // pred_check_branch
      %178 = sbr.rel (%p175) target = $region36
    $region35: #{node_update_forward.11} parent=5 // pred_region
      %s179 = ssub.s32 %s10, 1
      %s180 = smul.u32 16, %s15
      %p181 = scmp.lt.s32.totalorder %s180, 63
      %s182 = scalar_select %p181, %s180, 63
      %s183 = smul.addr %s182, 8
      %s184 = scalar_lea.vmem %s0, %s183
      %p185 = pneg %p36
      %p186 = pneg %p33
      %s187 = smul.u32 16, %s15
      %p188 = scmp.lt.s32.totalorder %s187, 63
      %s189 = scalar_select %p188, %s187, 63
      %s190 = smul.addr %s189, 8
      %s191 = scalar_lea.vmem %s1, %s190
      %p192 = pneg %p62
      %p193 = pneg %p59
      %p194 = pneg %p83
      %p195 = pneg %p80
      %p196 = pneg %p104
      %p197 = pneg %p101
      %p198 = pneg %p130
      %p199 = pneg %p127
      %s200 = smul.u32 16, %s15
      %p201 = scmp.lt.s32.totalorder %s200, 63
      %s202 = scalar_select %p201, %s200, 63
      %s203 = smul.addr %s202, 8
      %s204 = scalar_lea.vmem %s4, %s203
      %s205 = smul.u32 16, %s15
      %p206 = scmp.lt.s32.totalorder %s205, 63
      %s207 = scalar_select %p206, %s205, 63
      %s208 = smul.addr %s207, 8
      %s209 = scalar_lea.vmem %s0, %s208
      %s210 = smul.u32 16, %s15
      %s211 = smul.u32 16, %s15
      %p212 = scmp.lt.s32.totalorder %s211, 63
      %s213 = scalar_select %p212, %s211, 63
      %s214 = smul.addr %s213, 8
      %s215 = scalar_lea.vmem %s1, %s214
      %s216 = smul.u32 16, %s15
      %s217 = smul.u32 16, %s15
      %p218 = scmp.lt.s32.totalorder %s217, 63
      %s219 = scalar_select %p218, %s217, 63
      %s220 = smul.addr %s219, 8
      %s221 = scalar_lea.vmem %s4, %s220
      %s222 = smul.u32 16, %s15
      %v223 = vld [vmem:[%s215] sm:$0xff]
      %v224 = vld [vmem:[%s215 + $0x8] sm:$0xff]
      %v225 = vld [vmem:[%s215 + $0x10] sm:$0xff]
      %v226 = vld [vmem:[%s215 + $0x18] sm:$0xff]
      %v227 = vld [vmem:[%s215 + $0x20] sm:$0xff]
      %v228 = vld [vmem:[%s215 + $0x28] sm:$0xff]
      %v229 = vld [vmem:[%s215 + $0x30] sm:$0xff]
      %v230 = vld [vmem:[%s215 + $0x38] sm:$0xff]
      %v231 = vld [vmem:[%s215 + $0x40] sm:$0xff]
      %v232 = vld [vmem:[%s215 + $0x48] sm:$0xff]
      %v233 = vld [vmem:[%s215 + $0x50] sm:$0xff]
      %v234 = vld [vmem:[%s215 + $0x58] sm:$0xff]
      %v235 = vld [vmem:[%s215 + $0x60] sm:$0xff]
      %v236 = vld [vmem:[%s215 + $0x68] sm:$0xff]
      %v237 = vld [vmem:[%s215 + $0x70] sm:$0xff]
      %v238 = vld [vmem:[%s215 + $0x78] sm:$0xff]
      %v239 = vld [vmem:[%s209] sm:$0xff]
      %v240 = vld [vmem:[%s209 + $0x8] sm:$0xff]
      %v241 = vld [vmem:[%s209 + $0x10] sm:$0xff]
      %v242 = vld [vmem:[%s209 + $0x18] sm:$0xff]
      %v243 = vld [vmem:[%s209 + $0x20] sm:$0xff]
      %v244 = vld [vmem:[%s209 + $0x28] sm:$0xff]
      %v245 = vld [vmem:[%s209 + $0x30] sm:$0xff]
      %v246 = vld [vmem:[%s209 + $0x38] sm:$0xff]
      %v247 = vld [vmem:[%s209 + $0x40] sm:$0xff]
      %v248 = vld [vmem:[%s209 + $0x48] sm:$0xff]
      %v249 = vld [vmem:[%s209 + $0x50] sm:$0xff]
      %v250 = vld [vmem:[%s209 + $0x58] sm:$0xff]
      %v251 = vld [vmem:[%s209 + $0x60] sm:$0xff]
      %v252 = vld [vmem:[%s209 + $0x68] sm:$0xff]
      %v253 = vld [vmem:[%s209 + $0x70] sm:$0xff]
      %v254 = vld [vmem:[%s209 + $0x78] sm:$0xff]
      %v255 = vld [vmem:[%s2] sm:$0x1]
      %v257 = vlaneseq
      %v258 = vshrl.u32 %v257, 7
      %v259 = vsub.s32 0, %v258
      %v260 = vrot.slane %v255, %v259
      %v262 = vmul.f32 %v239, %v260
      %v263 = vmul.f32 %v240, %v260
      %v264 = vmul.f32 %v241, %v260
      %v265 = vmul.f32 %v242, %v260
      %v266 = vmul.f32 %v243, %v260
      %v267 = vmul.f32 %v244, %v260
      %v268 = vmul.f32 %v245, %v260
      %v269 = vmul.f32 %v246, %v260
      %v270 = vmul.f32 %v247, %v260
      %v271 = vmul.f32 %v248, %v260
      %v272 = vmul.f32 %v249, %v260
      %v273 = vmul.f32 %v250, %v260
      %v274 = vmul.f32 %v251, %v260
      %v275 = vmul.f32 %v252, %v260
      %v276 = vmul.f32 %v253, %v260
      %v277 = vmul.f32 %v254, %v260
      %v278 = vld [vmem:[%s3] sm:$0x1]
      %v280 = vlaneseq
      %v281 = vshrl.u32 %v280, 7
      %v282 = vsub.s32 0, %v281
      %v283 = vrot.slane %v278, %v282
      %v285 = vadd.f32 %v262, %v283
      %v286 = vadd.f32 %v263, %v283
      %v287 = vadd.f32 %v264, %v283
      %v288 = vadd.f32 %v265, %v283
      %v289 = vadd.f32 %v266, %v283
      %v290 = vadd.f32 %v267, %v283
      %v291 = vadd.f32 %v268, %v283
      %v292 = vadd.f32 %v269, %v283
      %v293 = vadd.f32 %v270, %v283
      %v294 = vadd.f32 %v271, %v283
      %v295 = vadd.f32 %v272, %v283
      %v296 = vadd.f32 %v273, %v283
      %v297 = vadd.f32 %v274, %v283
      %v298 = vadd.f32 %v275, %v283
      %v299 = vadd.f32 %v276, %v283
      %v300 = vadd.f32 %v277, %v283
      %v301 = vmax.f32 %v285, 0.0
      %v302 = vmax.f32 %v286, 0.0
      %v303 = vmax.f32 %v287, 0.0
      %v304 = vmax.f32 %v288, 0.0
      %v305 = vmax.f32 %v289, 0.0
      %v306 = vmax.f32 %v290, 0.0
      %v307 = vmax.f32 %v291, 0.0
      %v308 = vmax.f32 %v292, 0.0
      %v309 = vmax.f32 %v293, 0.0
      %v310 = vmax.f32 %v294, 0.0
      %v311 = vmax.f32 %v295, 0.0
      %v312 = vmax.f32 %v296, 0.0
      %v313 = vmax.f32 %v297, 0.0
      %v314 = vmax.f32 %v298, 0.0
      %v315 = vmax.f32 %v299, 0.0
      %v316 = vmax.f32 %v300, 0.0
      %v317 = vadd.f32 %v223, %v301
      %v318 = vadd.f32 %v224, %v302
      %v319 = vadd.f32 %v225, %v303
      %v320 = vadd.f32 %v226, %v304
      %v321 = vadd.f32 %v227, %v305
      %v322 = vadd.f32 %v228, %v306
      %v323 = vadd.f32 %v229, %v307
      %v324 = vadd.f32 %v230, %v308
      %v325 = vadd.f32 %v231, %v309
      %v326 = vadd.f32 %v232, %v310
      %v327 = vadd.f32 %v233, %v311
      %v328 = vadd.f32 %v234, %v312
      %v329 = vadd.f32 %v235, %v313
      %v330 = vadd.f32 %v236, %v314
      %v331 = vadd.f32 %v237, %v315
      %v332 = vadd.f32 %v238, %v316
      %333 = vst [vmem:[%s221] sm:$0xff] %v317
      %334 = vst [vmem:[%s221 + $0x8] sm:$0xff] %v318
      %335 = vst [vmem:[%s221 + $0x10] sm:$0xff] %v319
      %336 = vst [vmem:[%s221 + $0x18] sm:$0xff] %v320
      %337 = vst [vmem:[%s221 + $0x20] sm:$0xff] %v321
      %338 = vst [vmem:[%s221 + $0x28] sm:$0xff] %v322
      %339 = vst [vmem:[%s221 + $0x30] sm:$0xff] %v323
      %340 = vst [vmem:[%s221 + $0x38] sm:$0xff] %v324
      %341 = vst [vmem:[%s221 + $0x40] sm:$0xff] %v325
      %342 = vst [vmem:[%s221 + $0x48] sm:$0xff] %v326
      %343 = vst [vmem:[%s221 + $0x50] sm:$0xff] %v327
      %344 = vst [vmem:[%s221 + $0x58] sm:$0xff] %v328
      %345 = vst [vmem:[%s221 + $0x60] sm:$0xff] %v329
      %346 = vst [vmem:[%s221 + $0x68] sm:$0xff] %v330
      %347 = vst [vmem:[%s221 + $0x70] sm:$0xff] %v331
      %348 = vst [vmem:[%s221 + $0x78] sm:$0xff] %v332
      %s349 = smul.u32 16, %s15
      %p350 = scmp.lt.s32.totalorder %s349, 63
      %s351 = scalar_select %p350, %s349, 63
      %s352 = smul.addr %s351, 8
      %s353 = scalar_lea.vmem %s4, %s352
      // Predicated region
      $region37: #{node_update_forward.11} parent=35 // pred_check
        %p354 = pneg %p127
      $region38: #{node_update_forward.11} parent=35 // pred_check_branch
        %356 = sbr.rel (%p354) target = $region40
      $region39: #{node_update_forward.11} parent=35 // pred_region
        %s357 = smul.u32 16, %s15
      $region40: #{node_update_forward.11} parent=35 // pred_fallthru
        _
    $region36: #{node_update_forward.11} parent=5 // pred_fallthru
      _
    %p358 = scmp.le.s32.totalorder 2, %s10
    // Predicated region
    $region41: #{node_update_forward.11} parent=5 // pred_check
      %p359 = pneg %p358
    $region42: #{node_update_forward.11} parent=5 // pred_check_branch
      %361 = sbr.rel (%p359) target = $region44
    $region43: #{node_update_forward.11} parent=5 // pred_region
      %s362 = ssub.s32 %s10, 2
      // Predicated region
      $region45: #{node_update_forward.11} parent=43 // pred_check
        %p363 = pneg %p133
      $region46: #{node_update_forward.11} parent=43 // pred_check_branch
        %365 = sbr.rel (%p363) target = $region48
      $region47: #{node_update_forward.11} parent=43 // pred_region
        %s366 = smul.u32 16, %s16
        %p367 = scmp.lt.s32.totalorder %s366, 63
        %s368 = scalar_select %p367, %s366, 63
        %s369 = smul.addr %s368, 8
        %s370 = scalar_lea.vmem %s4, %s369
      $region48: #{node_update_forward.11} parent=43 // pred_fallthru
        _
    $region44: #{node_update_forward.11} parent=5 // pred_fallthru
      _
  $region6: #{node_update_forward.11} parent=0 // loop_footer
    %s14 = sadd.s32 1, %s10
  $region7: #{node_update_forward.11} parent=0 // loop_footer_branch
    %9 = sbr.rel target = $region3
  $region8: #{node_update_forward.11} parent=0 // loop_exit
    _

// kernel: node_update_forward.10
$region0: #{node_update_forward.10}
  #allocation0 [shape = 'u32[]', space=smem, size = 0x4, offset = 0x4, fixed_abs, tag = 'smem constant byte address 0x4 - core index']
  #allocation1 [shape = 'u32[144,128]{1,0:T(1,128)}', space=vmem, size = 0x12000, scoped, tag = 'internal scratch']
  %s0 = inlined_call_operand.vmem [shape: f32[256,128], index: 0, kind: input, shape index: {}]
  %s1 = inlined_call_operand.vmem [shape: f32[256,128], index: 1, kind: input, shape index: {}]
  %s2 = inlined_call_operand.vmem [shape: f32[1,128], index: 2, kind: input, shape index: {}]
  %s3 = inlined_call_operand.vmem [shape: f32[1,128], index: 3, kind: input, shape index: {}]
  %s4 = inlined_call_operand.vmem [shape: f32[256,128], index: 4, kind: output, shape index: {}]
  %s5 = sld [smem:[#allocation0]]
  $region49: #{node_update_forward.10} parent=0
    _
  %s7 = ssub.s32 1, %s5
  %s8 = scalar_select 0, %s7, %s5
  loop: start=0, step=1, limit=4
  $region2: #{node_update_forward.10} parent=0 // loop_pre_header
    _
  $region3: #{node_update_forward.10} parent=0 // loop_header
    %s10 = sphi 0, %s14
    %p11 = scmp.ge.s32.totalorder %s10, 4
    %s20 = sphi 0, %s22
    %s23 = sphi 0, %s20
    %s24 = sphi 0, %s23
    %s40 = sphi 0, %s24
    %s46 = sphi 0, %s48
    %s49 = sphi 0, %s46
    %s50 = sphi 0, %s49
    %s66 = sphi 0, %s50
    %s70 = sphi 0, %s70
    %s72 = sphi 0, %s70
    %s73 = sphi 0, %s72
    %s87 = sphi 0, %s73
    %s91 = sphi 0, %s91
    %s93 = sphi 0, %s91
    %s94 = sphi 0, %s93
    %s108 = sphi 0, %s94
    %s114 = sphi 0, %s116
    %s117 = sphi 0, %s114
    %s118 = sphi 0, %s117
    %s134 = sphi 0, %s118
  $region4: #{node_update_forward.10} parent=0 // loop_header_branch
    %13 = sbr.rel (%p11) target = $region8
  $region5: #{node_update_forward.10} parent=0 // loop_body
    %s15 = ssub.s32 %s10, 1
    %s16 = ssub.s32 %s10, 2
    %s17 = sadd.s32 %s10, 1
    %s18 = ssub.s32 %s10, %s17
    %p19 = scmp.eq.s32.totalorder %s18, 0
    %s21 = sadd.s32 %s20, 1
    %s22 = scalar_select %p19, %s20, %s21
    %p25 = pneg %p19
    %p26 = scmp.eq.s32.totalorder %s10, 1
    %p27 = por %p25, %p26
    %p28 = scmp.ne.s32.totalorder %s20, %s23
    %p29 = scmp.eq.s32.totalorder %s10, 0
    %p30 = por %p28, %p29
    %p31 = scmp.ne.s32.totalorder %s20, %s23
    %p32 = scmp.eq.s32.totalorder %s15, 1
    %p33 = por %p31, %p32
    %p34 = scmp.ne.s32.totalorder %s23, %s24
    %p35 = scmp.eq.s32.totalorder %s15, 0
    %p36 = por %p34, %p35
    %p37 = scmp.ne.s32.totalorder %s23, %s24
    %p38 = scmp.eq.s32.totalorder %s16, 1
    %p39 = por %p37, %p38
    %p41 = scmp.ne.s32.totalorder %s24, %s40
    %p42 = scmp.eq.s32.totalorder %s16, 0
    %p43 = por %p41, %p42
    %s44 = ssub.s32 %s10, %s17
    %p45 = scmp.eq.s32.totalorder %s44, 0
    %s47 = sadd.s32 %s46, 1
    %s48 = scalar_select %p45, %s46, %s47
    %p51 = pneg %p45
    %p52 = scmp.eq.s32.totalorder %s10, 1
    %p53 = por %p51, %p52
    %p54 = scmp.ne.s32.totalorder %s46, %s49
    %p55 = scmp.eq.s32.totalorder %s10, 0
    %p56 = por %p54, %p55
    %p57 = scmp.ne.s32.totalorder %s46, %s49
    %p58 = scmp.eq.s32.totalorder %s15, 1
    %p59 = por %p57, %p58
    %p60 = scmp.ne.s32.totalorder %s49, %s50
    %p61 = scmp.eq.s32.totalorder %s15, 0
    %p62 = por %p60, %p61
    %p63 = scmp.ne.s32.totalorder %s49, %s50
    %p64 = scmp.eq.s32.totalorder %s16, 1
    %p65 = por %p63, %p64
    %p67 = scmp.ne.s32.totalorder %s50, %s66
    %p68 = scmp.eq.s32.totalorder %s16, 0
    %p69 = por %p67, %p68
    %s71 = sadd.s32 %s70, 1
    %p74 = scmp.eq.s32.totalorder %s10, 1
    %p75 = scmp.ne.s32.totalorder %s70, %s72
    %p76 = scmp.eq.s32.totalorder %s10, 0
    %p77 = por %p75, %p76
    %p78 = scmp.ne.s32.totalorder %s70, %s72
    %p79 = scmp.eq.s32.totalorder %s15, 1
    %p80 = por %p78, %p79
    %p81 = scmp.ne.s32.totalorder %s72, %s73
    %p82 = scmp.eq.s32.totalorder %s15, 0
    %p83 = por %p81, %p82
    %p84 = scmp.ne.s32.totalorder %s72, %s73
    %p85 = scmp.eq.s32.totalorder %s16, 1
    %p86 = por %p84, %p85
    %p88 = scmp.ne.s32.totalorder %s73, %s87
    %p89 = scmp.eq.s32.totalorder %s16, 0
    %p90 = por %p88, %p89
    %s92 = sadd.s32 %s91, 1
    %p95 = scmp.eq.s32.totalorder %s10, 1
    %p96 = scmp.ne.s32.totalorder %s91, %s93
    %p97 = scmp.eq.s32.totalorder %s10, 0
    %p98 = por %p96, %p97
    %p99 = scmp.ne.s32.totalorder %s91, %s93
    %p100 = scmp.eq.s32.totalorder %s15, 1
    %p101 = por %p99, %p100
    %p102 = scmp.ne.s32.totalorder %s93, %s94
    %p103 = scmp.eq.s32.totalorder %s15, 0
    %p104 = por %p102, %p103
    %p105 = scmp.ne.s32.totalorder %s93, %s94
    %p106 = scmp.eq.s32.totalorder %s16, 1
    %p107 = por %p105, %p106
    %p109 = scmp.ne.s32.totalorder %s94, %s108
    %p110 = scmp.eq.s32.totalorder %s16, 0
    %p111 = por %p109, %p110
    %s112 = ssub.s32 %s10, %s17
    %p113 = scmp.eq.s32.totalorder %s112, 0
    %s115 = sadd.s32 %s114, 1
    %s116 = scalar_select %p113, %s114, %s115
    %p119 = pneg %p113
    %p120 = scmp.eq.s32.totalorder %s10, 1
    %p121 = por %p119, %p120
    %p122 = scmp.ne.s32.totalorder %s114, %s117
    %p123 = scmp.eq.s32.totalorder %s10, 0
    %p124 = por %p122, %p123
    %p125 = scmp.ne.s32.totalorder %s114, %s117
    %p126 = scmp.eq.s32.totalorder %s15, 1
    %p127 = por %p125, %p126
    %p128 = scmp.ne.s32.totalorder %s117, %s118
    %p129 = scmp.eq.s32.totalorder %s15, 0
    %p130 = por %p128, %p129
    %p131 = scmp.ne.s32.totalorder %s117, %s118
    %p132 = scmp.eq.s32.totalorder %s16, 1
    %p133 = por %p131, %p132
    %p135 = scmp.ne.s32.totalorder %s118, %s134
    %p136 = scmp.eq.s32.totalorder %s16, 0
    %p137 = por %p135, %p136
    %p138 = scmp.le.s32.totalorder 1, %s10
    %p139 = scmp.lt.s32.totalorder %s10, 3
    %p140 = pnand %p138, %p139
    %p141 = pneg %p140
    // Predicated region
    $region9: #{node_update_forward.10} parent=5 // pred_check
      _
    $region10: #{node_update_forward.10} parent=5 // pred_check_branch
      %143 = sbr.rel (%p140) target = $region12
    $region11: #{node_update_forward.10} parent=5 // pred_region
      %s144 = ssub.s32 %s10, 1
      // Predicated region
      $region13: #{node_update_forward.10} parent=11 // pred_check
        %p145 = pneg %p83
      $region14: #{node_update_forward.10} parent=11 // pred_check_branch
        %147 = sbr.rel (%p145) target = $region16
      $region15: #{node_update_forward.10} parent=11 // pred_region
        _
      $region16: #{node_update_forward.10} parent=11 // pred_fallthru
        _
      // Predicated region
      $region17: #{node_update_forward.10} parent=11 // pred_check
        %p148 = pneg %p104
      $region18: #{node_update_forward.10} parent=11 // pred_check_branch
        %150 = sbr.rel (%p148) target = $region20
      $region19: #{node_update_forward.10} parent=11 // pred_region
        _
      $region20: #{node_update_forward.10} parent=11 // pred_fallthru
        _
    $region12: #{node_update_forward.10} parent=5 // pred_fallthru
      _
    %p151 = scmp.lt.s32.totalorder %s10, 2
    // Predicated region
    $region21: #{node_update_forward.10} parent=5 // pred_check
      %p152 = pneg %p151
    $region22: #{node_update_forward.10} parent=5 // pred_check_branch
      %154 = sbr.rel (%p152) target = $region24
    $region23: #{node_update_forward.10} parent=5 // pred_region
      // Predicated region
      $region25: #{node_update_forward.10} parent=23 // pred_check
        %p155 = pneg %p30
      $region26: #{node_update_forward.10} parent=23 // pred_check_branch
        %157 = sbr.rel (%p155) target = $region28
      $region27: #{node_update_forward.10} parent=23 // pred_region
        %s158 = smul.u32 16, %s10
        %p159 = scmp.lt.s32.totalorder %s158, 31
        %s160 = scalar_select %p159, %s158, 31
        %s161 = smul.addr %s160, 8
        %s162 = scalar_lea.vmem %s0, %s161
        %s163 = smul.u32 16, %s10
      $region28: #{node_update_forward.10} parent=23 // pred_fallthru
        _
      // Predicated region
      $region29: #{node_update_forward.10} parent=23 // pred_check
        %p164 = pneg %p56
      $region30: #{node_update_forward.10} parent=23 // pred_check_branch
        %166 = sbr.rel (%p164) target = $region32
      $region31: #{node_update_forward.10} parent=23 // pred_region
        %s167 = smul.u32 16, %s10
        %p168 = scmp.lt.s32.totalorder %s167, 31
        %s169 = scalar_select %p168, %s167, 31
        %s170 = smul.addr %s169, 8
        %s171 = scalar_lea.vmem %s1, %s170
        %s172 = smul.u32 16, %s10
      $region32: #{node_update_forward.10} parent=23 // pred_fallthru
        _
    $region24: #{node_update_forward.10} parent=5 // pred_fallthru
      _
    %p173 = scmp.le.s32.totalorder 1, %s10
    %p174 = scmp.lt.s32.totalorder %s10, 3
    %p175 = pnand %p173, %p174
    %p176 = pneg %p175
    // Predicated region
    $region33: #{node_update_forward.10} parent=5 // pred_check
      _
    $region34: #{node_update_forward.10} parent=5 // pred_check_branch
      %178 = sbr.rel (%p175) target = $region36
    $region35: #{node_update_forward.10} parent=5 // pred_region
      %s179 = ssub.s32 %s10, 1
      %s180 = smul.u32 16, %s15
      %p181 = scmp.lt.s32.totalorder %s180, 31
      %s182 = scalar_select %p181, %s180, 31
      %s183 = smul.addr %s182, 8
      %s184 = scalar_lea.vmem %s0, %s183
      %p185 = pneg %p36
      %p186 = pneg %p33
      %s187 = smul.u32 16, %s15
      %p188 = scmp.lt.s32.totalorder %s187, 31
      %s189 = scalar_select %p188, %s187, 31
      %s190 = smul.addr %s189, 8
      %s191 = scalar_lea.vmem %s1, %s190
      %p192 = pneg %p62
      %p193 = pneg %p59
      %p194 = pneg %p83
      %p195 = pneg %p80
      %p196 = pneg %p104
      %p197 = pneg %p101
      %p198 = pneg %p130
      %p199 = pneg %p127
      %s200 = smul.u32 16, %s15
      %p201 = scmp.lt.s32.totalorder %s200, 31
      %s202 = scalar_select %p201, %s200, 31
      %s203 = smul.addr %s202, 8
      %s204 = scalar_lea.vmem %s4, %s203
      %s205 = smul.u32 16, %s15
      %p206 = scmp.lt.s32.totalorder %s205, 31
      %s207 = scalar_select %p206, %s205, 31
      %s208 = smul.addr %s207, 8
      %s209 = scalar_lea.vmem %s0, %s208
      %s210 = smul.u32 16, %s15
      %s211 = smul.u32 16, %s15
      %p212 = scmp.lt.s32.totalorder %s211, 31
      %s213 = scalar_select %p212, %s211, 31
      %s214 = smul.addr %s213, 8
      %s215 = scalar_lea.vmem %s1, %s214
      %s216 = smul.u32 16, %s15
      %s217 = smul.u32 16, %s15
      %p218 = scmp.lt.s32.totalorder %s217, 31
      %s219 = scalar_select %p218, %s217, 31
      %s220 = smul.addr %s219, 8
      %s221 = scalar_lea.vmem %s4, %s220
      %s222 = smul.u32 16, %s15
      %v223 = vld [vmem:[%s215] sm:$0xff]
      %v224 = vld [vmem:[%s215 + $0x8] sm:$0xff]
      %v225 = vld [vmem:[%s215 + $0x10] sm:$0xff]
      %v226 = vld [vmem:[%s215 + $0x18] sm:$0xff]
      %v227 = vld [vmem:[%s215 + $0x20] sm:$0xff]
      %v228 = vld [vmem:[%s215 + $0x28] sm:$0xff]
      %v229 = vld [vmem:[%s215 + $0x30] sm:$0xff]
      %v230 = vld [vmem:[%s215 + $0x38] sm:$0xff]
      %v231 = vld [vmem:[%s215 + $0x40] sm:$0xff]
      %v232 = vld [vmem:[%s215 + $0x48] sm:$0xff]
      %v233 = vld [vmem:[%s215 + $0x50] sm:$0xff]
      %v234 = vld [vmem:[%s215 + $0x58] sm:$0xff]
      %v235 = vld [vmem:[%s215 + $0x60] sm:$0xff]
      %v236 = vld [vmem:[%s215 + $0x68] sm:$0xff]
      %v237 = vld [vmem:[%s215 + $0x70] sm:$0xff]
      %v238 = vld [vmem:[%s215 + $0x78] sm:$0xff]
      %v239 = vld [vmem:[%s209] sm:$0xff]
      %v240 = vld [vmem:[%s209 + $0x8] sm:$0xff]
      %v241 = vld [vmem:[%s209 + $0x10] sm:$0xff]
      %v242 = vld [vmem:[%s209 + $0x18] sm:$0xff]
      %v243 = vld [vmem:[%s209 + $0x20] sm:$0xff]
      %v244 = vld [vmem:[%s209 + $0x28] sm:$0xff]
      %v245 = vld [vmem:[%s209 + $0x30] sm:$0xff]
      %v246 = vld [vmem:[%s209 + $0x38] sm:$0xff]
      %v247 = vld [vmem:[%s209 + $0x40] sm:$0xff]
      %v248 = vld [vmem:[%s209 + $0x48] sm:$0xff]
      %v249 = vld [vmem:[%s209 + $0x50] sm:$0xff]
      %v250 = vld [vmem:[%s209 + $0x58] sm:$0xff]
      %v251 = vld [vmem:[%s209 + $0x60] sm:$0xff]
      %v252 = vld [vmem:[%s209 + $0x68] sm:$0xff]
      %v253 = vld [vmem:[%s209 + $0x70] sm:$0xff]
      %v254 = vld [vmem:[%s209 + $0x78] sm:$0xff]
      %v255 = vld [vmem:[%s2] sm:$0x1]
      %v257 = vlaneseq
      %v258 = vshrl.u32 %v257, 7
      %v259 = vsub.s32 0, %v258
      %v260 = vrot.slane %v255, %v259
      %v262 = vmul.f32 %v239, %v260
      %v263 = vmul.f32 %v240, %v260
      %v264 = vmul.f32 %v241, %v260
      %v265 = vmul.f32 %v242, %v260
      %v266 = vmul.f32 %v243, %v260
      %v267 = vmul.f32 %v244, %v260
      %v268 = vmul.f32 %v245, %v260
      %v269 = vmul.f32 %v246, %v260
      %v270 = vmul.f32 %v247, %v260
      %v271 = vmul.f32 %v248, %v260
      %v272 = vmul.f32 %v249, %v260
      %v273 = vmul.f32 %v250, %v260
      %v274 = vmul.f32 %v251, %v260
      %v275 = vmul.f32 %v252, %v260
      %v276 = vmul.f32 %v253, %v260
      %v277 = vmul.f32 %v254, %v260
      %v278 = vld [vmem:[%s3] sm:$0x1]
      %v280 = vlaneseq
      %v281 = vshrl.u32 %v280, 7
      %v282 = vsub.s32 0, %v281
      %v283 = vrot.slane %v278, %v282
      %v285 = vadd.f32 %v262, %v283
      %v286 = vadd.f32 %v263, %v283
      %v287 = vadd.f32 %v264, %v283
      %v288 = vadd.f32 %v265, %v283
      %v289 = vadd.f32 %v266, %v283
      %v290 = vadd.f32 %v267, %v283
      %v291 = vadd.f32 %v268, %v283
      %v292 = vadd.f32 %v269, %v283
      %v293 = vadd.f32 %v270, %v283
      %v294 = vadd.f32 %v271, %v283
      %v295 = vadd.f32 %v272, %v283
      %v296 = vadd.f32 %v273, %v283
      %v297 = vadd.f32 %v274, %v283
      %v298 = vadd.f32 %v275, %v283
      %v299 = vadd.f32 %v276, %v283
      %v300 = vadd.f32 %v277, %v283
      %v301 = vmax.f32 %v285, 0.0
      %v302 = vmax.f32 %v286, 0.0
      %v303 = vmax.f32 %v287, 0.0
      %v304 = vmax.f32 %v288, 0.0
      %v305 = vmax.f32 %v289, 0.0
      %v306 = vmax.f32 %v290, 0.0
      %v307 = vmax.f32 %v291, 0.0
      %v308 = vmax.f32 %v292, 0.0
      %v309 = vmax.f32 %v293, 0.0
      %v310 = vmax.f32 %v294, 0.0
      %v311 = vmax.f32 %v295, 0.0
      %v312 = vmax.f32 %v296, 0.0
      %v313 = vmax.f32 %v297, 0.0
      %v314 = vmax.f32 %v298, 0.0
      %v315 = vmax.f32 %v299, 0.0
      %v316 = vmax.f32 %v300, 0.0
      %v317 = vadd.f32 %v223, %v301
      %v318 = vadd.f32 %v224, %v302
      %v319 = vadd.f32 %v225, %v303
      %v320 = vadd.f32 %v226, %v304
      %v321 = vadd.f32 %v227, %v305
      %v322 = vadd.f32 %v228, %v306
      %v323 = vadd.f32 %v229, %v307
      %v324 = vadd.f32 %v230, %v308
      %v325 = vadd.f32 %v231, %v309
      %v326 = vadd.f32 %v232, %v310
      %v327 = vadd.f32 %v233, %v311
      %v328 = vadd.f32 %v234, %v312
      %v329 = vadd.f32 %v235, %v313
      %v330 = vadd.f32 %v236, %v314
      %v331 = vadd.f32 %v237, %v315
      %v332 = vadd.f32 %v238, %v316
      %333 = vst [vmem:[%s221] sm:$0xff] %v317
      %334 = vst [vmem:[%s221 + $0x8] sm:$0xff] %v318
      %335 = vst [vmem:[%s221 + $0x10] sm:$0xff] %v319
      %336 = vst [vmem:[%s221 + $0x18] sm:$0xff] %v320
      %337 = vst [vmem:[%s221 + $0x20] sm:$0xff] %v321
      %338 = vst [vmem:[%s221 + $0x28] sm:$0xff] %v322
      %339 = vst [vmem:[%s221 + $0x30] sm:$0xff] %v323
      %340 = vst [vmem:[%s221 + $0x38] sm:$0xff] %v324
      %341 = vst [vmem:[%s221 + $0x40] sm:$0xff] %v325
      %342 = vst [vmem:[%s221 + $0x48] sm:$0xff] %v326
      %343 = vst [vmem:[%s221 + $0x50] sm:$0xff] %v327
      %344 = vst [vmem:[%s221 + $0x58] sm:$0xff] %v328
      %345 = vst [vmem:[%s221 + $0x60] sm:$0xff] %v329
      %346 = vst [vmem:[%s221 + $0x68] sm:$0xff] %v330
      %347 = vst [vmem:[%s221 + $0x70] sm:$0xff] %v331
      %348 = vst [vmem:[%s221 + $0x78] sm:$0xff] %v332
      %s349 = smul.u32 16, %s15
      %p350 = scmp.lt.s32.totalorder %s349, 31
      %s351 = scalar_select %p350, %s349, 31
      %s352 = smul.addr %s351, 8
      %s353 = scalar_lea.vmem %s4, %s352
      // Predicated region
      $region37: #{node_update_forward.10} parent=35 // pred_check
        %p354 = pneg %p127
      $region38: #{node_update_forward.10} parent=35 // pred_check_branch
        %356 = sbr.rel (%p354) target = $region40
      $region39: #{node_update_forward.10} parent=35 // pred_region
        %s357 = smul.u32 16, %s15
      $region40: #{node_update_forward.10} parent=35 // pred_fallthru
        _
    $region36: #{node_update_forward.10} parent=5 // pred_fallthru
      _
    %p358 = scmp.le.s32.totalorder 2, %s10
    // Predicated region
    $region41: #{node_update_forward.10} parent=5 // pred_check
      %p359 = pneg %p358
    $region42: #{node_update_forward.10} parent=5 // pred_check_branch
      %361 = sbr.rel (%p359) target = $region44
    $region43: #{node_update_forward.10} parent=5 // pred_region
      %s362 = ssub.s32 %s10, 2
      // Predicated region
      $region45: #{node_update_forward.10} parent=43 // pred_check
        %p363 = pneg %p133
      $region46: #{node_update_forward.10} parent=43 // pred_check_branch
        %365 = sbr.rel (%p363) target = $region48
      $region47: #{node_update_forward.10} parent=43 // pred_region
        %s366 = smul.u32 16, %s16
        %p367 = scmp.lt.s32.totalorder %s366, 31
        %s368 = scalar_select %p367, %s366, 31
        %s369 = smul.addr %s368, 8
        %s370 = scalar_lea.vmem %s4, %s369
      $region48: #{node_update_forward.10} parent=43 // pred_fallthru
        _
    $region44: #{node_update_forward.10} parent=5 // pred_fallthru
      _
  $region6: #{node_update_forward.10} parent=0 // loop_footer
    %s14 = sadd.s32 1, %s10
  $region7: #{node_update_forward.10} parent=0 // loop_footer_branch
    %9 = sbr.rel target = $region3
  $region8: #{node_update_forward.10} parent=0 // loop_exit
    _

</llo_original>
